<compile_context>
chip_gen: v7x
topology: tpu7x:2x2x1
jax: 0.10.0
libtpu: 0.0.40
codegen_flags: <defaults>
</compile_context>

<pallas_src>
import functools

import jax
import jax.numpy as jnp
from jax.experimental import pallas as pl
from jax.experimental.pallas import tpu as pltpu

# ---------------------------------------------------------------------------
# Module-consistent configuration (small demo sizes)
# ---------------------------------------------------------------------------
B, C, H, W = 2, 4, 8, 8          # features: (B, feature_dim=C, H, W)
S = H * W                        # context sequence length
D = 64                           # decoder_dim
NHEAD = D // 64                  # nhead = decoder_dim // 64
assert NHEAD == 1, "kernel written for the single-head (decoder_dim=64) config"
HD = D // NHEAD                  # head dim
L = 2                            # decoder_depth (small for the demo)
FF = 4 * D                       # dim_feedforward = decoder_dim * 4
J = 21                           # number of joint queries ('per_joint')
JP = 24                          # J padded to a sublane multiple of 8
OUTP = 128                       # lane-dense padded output width (true width 3)
EPS = 1e-5                       # LayerNorm eps (PyTorch default)
SCALE = 1.0 / float(HD) ** 0.5   # attention scaling

PARAM_ORDER = (
    "fm_w", "fm_b", "emb",
    "attn_in_w", "attn_in_b", "attn_out_w", "attn_out_b",
    "ln_w", "ln_b",
    "ff1_w", "ff1_b", "ff2_w", "ff2_b",
    "head_w", "head_b",
)


# ---------------------------------------------------------------------------
# Shared math helpers (pure jnp; used inside the kernel and in the reference)
# ---------------------------------------------------------------------------
def _layernorm(x, w, b):
    mu = jnp.mean(x, axis=-1, keepdims=True)
    var = jnp.mean((x - mu) ** 2, axis=-1, keepdims=True)
    return (x - mu) * jax.lax.rsqrt(var + EPS) * w + b


# ---------------------------------------------------------------------------
# Pallas kernel: one batch element per grid step
# ---------------------------------------------------------------------------
def hand_transformer_kernel(ctx_ref,
                            fm_w_ref, fm_b_ref, emb_ref,
                            attn_in_w_ref, attn_in_b_ref,
                            attn_out_w_ref, attn_out_b_ref,
                            ln_w_ref, ln_b_ref,
                            ff1_w_ref, ff1_b_ref, ff2_w_ref, ff2_b_ref,
                            head_w_ref, head_b_ref,
                            out_ref):
    f32 = jnp.float32
    bf16 = jnp.bfloat16

    # --- feature_mapping: Linear(C -> D) as C VPU broadcast-FMAs (K=4 would
    #     waste an entire MXU pass).
    ctx = ctx_ref[0]                                            # (S, C) f32
    fm_w = fm_w_ref[...]                                        # (C, D) f32
    mem = fm_b_ref[...]                                         # (1, D) f32
    for c in range(C):
        mem = mem + ctx[:, c:c + 1] * fm_w[c:c + 1, :]          # (S, D)
    mem_bf = mem.astype(bf16)
    # feature_pos_enc is None (num_feature_pos_enc=None) -> nothing to add.

    # Mask so the 3 zero-padded query rows never act as self-attention keys.
    key_idx = jax.lax.broadcasted_iota(jnp.int32, (JP, JP), 1)
    self_mask = jnp.where(key_idx >= J, -1e30, 0.0).astype(f32)

    def sdpa(q, k, v, mask):
        # scores = q @ k.T  (contracted via dot_general, no transpose op)
        s = jax.lax.dot_general(q.astype(bf16), k.astype(bf16),
                                (((1,), (1,)), ((), ())),
                                preferred_element_type=f32) * SCALE
        if mask is not None:
            s = s + mask
        s = s - jnp.max(s, axis=-1, keepdims=True)
        p = jnp.exp(s)
        p = p * pl.reciprocal(jnp.sum(p, axis=-1, keepdims=True), approx=True)
        return jnp.dot(p.astype(bf16), v.astype(bf16), preferred_element_type=f32)

    x = emb_ref[...]                                            # (JP, D) f32

    for l in range(L):  # norm_first TransformerDecoderLayer, dropout = identity
        # --- self-attention block
        xn = _layernorm(x, ln_w_ref[l, 0], ln_b_ref[l, 0]).astype(bf16)
        q = jnp.dot(xn, attn_in_w_ref[l, 0, 0], preferred_element_type=f32) + attn_in_b_ref[l, 0, 0]
        k = jnp.dot(xn, attn_in_w_ref[l, 0, 1], preferred_element_type=f32) + attn_in_b_ref[l, 0, 1]
        v = jnp.dot(xn, attn_in_w_ref[l, 0, 2], preferred_element_type=f32) + attn_in_b_ref[l, 0, 2]
        o = sdpa(q, k, v, self_mask)
        x = x + jnp.dot(o.astype(bf16), attn_out_w_ref[l, 0],
                        preferred_element_type=f32) + attn_out_b_ref[l, 0]

        # --- cross-attention block (memory = mapped features)
        xn = _layernorm(x, ln_w_ref[l, 1], ln_b_ref[l, 1]).astype(bf16)
        q = jnp.dot(xn, attn_in_w_ref[l, 1, 0], preferred_element_type=f32) + attn_in_b_ref[l, 1, 0]
        k = jnp.dot(mem_bf, attn_in_w_ref[l, 1, 1], preferred_element_type=f32) + attn_in_b_ref[l, 1, 1]
        v = jnp.dot(mem_bf, attn_in_w_ref[l, 1, 2], preferred_element_type=f32) + attn_in_b_ref[l, 1, 2]
        o = sdpa(q, k, v, None)
        x = x + jnp.dot(o.astype(bf16), attn_out_w_ref[l, 1],
                        preferred_element_type=f32) + attn_out_b_ref[l, 1]

        # --- feed-forward block (ReLU)
        xn = _layernorm(x, ln_w_ref[l, 2], ln_b_ref[l, 2]).astype(bf16)
        hid = jnp.maximum(
            jnp.dot(xn, ff1_w_ref[l], preferred_element_type=f32) + ff1_b_ref[l], 0.0)
        x = x + jnp.dot(hid.astype(bf16), ff2_w_ref[l],
                        preferred_element_type=f32) + ff2_b_ref[l]

    # pose_r_head: Linear(D -> 3), zero-padded to 128 lanes for a dense store.
    out = jnp.dot(x.astype(bf16), head_w_ref[...],
                  preferred_element_type=f32) + head_b_ref[...]   # (JP, OUTP)
    out_ref[0] = out


def _zero_map(nd, b):
    return (0,) * nd


def hand_transformer_forward(features, params):
    """features: (B, C, H, W) NCHW, like the PyTorch module."""
    b_, c_, h_, w_ = features.shape
    s_ = h_ * w_
    # glue: reshape(B, C, -1).transpose(1, 2)  ->  (B, S, C)
    ctx_in = jnp.transpose(features.reshape(b_, c_, s_), (0, 2, 1)).astype(jnp.float32)

    arrs = [ctx_in]
    in_specs = [pl.BlockSpec((1, s_, c_), lambda b: (b, 0, 0))]
    for name in PARAM_ORDER:
        p = params[name]
        arrs.append(p)
        in_specs.append(pl.BlockSpec(p.shape, functools.partial(_zero_map, p.ndim)))

    out = pl.pallas_call(
        hand_transformer_kernel,
        out_shape=jax.ShapeDtypeStruct((b_, JP, OUTP), jnp.float32),
        grid=(b_,),
        in_specs=in_specs,
        out_specs=pl.BlockSpec((1, JP, OUTP), lambda b: (b, 0, 0)),
        compiler_params=pltpu.CompilerParams(dimension_semantics=("parallel",)),
    )(*arrs)
    # drop the 3 padded query rows and the 125 zero-weight output lanes
    return out[:, :J, :3]


# ---------------------------------------------------------------------------
# Pure-JAX f32 reference (module semantics) for a correctness cross-check
# ---------------------------------------------------------------------------
def reference_forward(features, p):
    b_, c_, h_, w_ = features.shape
    ctx_all = jnp.transpose(features.reshape(b_, c_, h_ * w_), (0, 2, 1)).astype(jnp.float32)
    in_w = p["attn_in_w"].astype(jnp.float32)
    out_w = p["attn_out_w"].astype(jnp.float32)
    ff1_w = p["ff1_w"].astype(jnp.float32)
    ff2_w = p["ff2_w"].astype(jnp.float32)
    head_w = p["head_w"].astype(jnp.float32)

    def sdpa(q, k, v):
        s = (q @ k.T) * SCALE
        s = s - jnp.max(s, axis=-1, keepdims=True)
        pr = jnp.exp(s)
        return (pr / jnp.sum(pr, axis=-1, keepdims=True)) @ v

    def one(ctx):
        mem = ctx @ p["fm_w"] + p["fm_b"]
        x = p["emb"][:J]                      # true 21 joint queries
        for l in range(L):
            xn = _layernorm(x, p["ln_w"][l, 0], p["ln_b"][l, 0])
            q = xn @ in_w[l, 0, 0] + p["attn_in_b"][l, 0, 0]
            k = xn @ in_w[l, 0, 1] + p["attn_in_b"][l, 0, 1]
            v = xn @ in_w[l, 0, 2] + p["attn_in_b"][l, 0, 2]
            x = x + sdpa(q, k, v) @ out_w[l, 0] + p["attn_out_b"][l, 0]

            xn = _layernorm(x, p["ln_w"][l, 1], p["ln_b"][l, 1])
            q = xn @ in_w[l, 1, 0] + p["attn_in_b"][l, 1, 0]
            k = mem @ in_w[l, 1, 1] + p["attn_in_b"][l, 1, 1]
            v = mem @ in_w[l, 1, 2] + p["attn_in_b"][l, 1, 2]
            x = x + sdpa(q, k, v) @ out_w[l, 1] + p["attn_out_b"][l, 1]

            xn = _layernorm(x, p["ln_w"][l, 2], p["ln_b"][l, 2])
            hid = jnp.maximum(xn @ ff1_w[l] + p["ff1_b"][l], 0.0)
            x = x + hid @ ff2_w[l] + p["ff2_b"][l]
        return (x @ head_w + p["head_b"])[:, :3]

    return jax.vmap(one)(ctx_all)


# ---------------------------------------------------------------------------
# Deterministic parameter init (shapes follow HandTransformer.__init__),
# pre-packed / pre-transposed / padded in the layout the kernel expects.
# ---------------------------------------------------------------------------
def init_params(key):
    keys = iter(jax.random.split(key, 24))
    f32, bf16 = jnp.float32, jnp.bfloat16

    def nrm(shape, scale=0.05):
        return (scale * jax.random.normal(next(keys), shape)).astype(f32)

    emb = jnp.zeros((JP, D), f32).at[:J].set(nrm((J, D), 1.0))        # padded rows = 0
    head_w = jnp.zeros((D, OUTP), f32).at[:, :3].set(nrm((D, 3)))     # padded cols = 0
    head_b = jnp.zeros((1, OUTP), f32).at[:, :3].set(nrm((1, 3)))

    return dict(
        fm_w=nrm((C, D)),                      # feature_mapping weight (in, out)
        fm_b=nrm((1, D)),
        emb=emb,                               # nn.Parameter(torch.randn(21, D)), padded to 24
        attn_in_w=nrm((L, 2, 3, D, D)).astype(bf16),  # [layer, self/cross, q/k/v, in, out]
        attn_in_b=nrm((L, 2, 3, D)),
        attn_out_w=nrm((L, 2, D, D)).astype(bf16),
        attn_out_b=nrm((L, 2, D)),
        ln_w=jnp.ones((L, 3, D), f32),         # [layer, norm1/norm2/norm3, D]
        ln_b=jnp.zeros((L, 3, D), f32),
        ff1_w=nrm((L, D, FF)).astype(bf16),    # linear1 (D -> 4D), (in, out)
        ff1_b=nrm((L, FF)),
        ff2_w=nrm((L, FF, D)).astype(bf16),    # linear2 (4D -> D), (in, out)
        ff2_b=nrm((L, D)),
        head_w=head_w.astype(bf16),            # pose_r_head, lane-padded to 128
        head_b=head_b,
    )


if __name__ == "__main__":
    root = jax.random.PRNGKey(0)
    k_feat, k_par = jax.random.split(root)

    features = jax.random.normal(k_feat, (B, C, H, W), dtype=jnp.float32)
    params = init_params(k_par)

    out = jax.block_until_ready(hand_transformer_forward(features, params))
    assert out.shape == (B, J, 3), out.shape

    ref = jax.block_until_ready(reference_forward(features, params))
    max_err = float(jnp.max(jnp.abs(out - ref)))
    # kernel uses bf16 MXU operands + approx reciprocal; reference is f32
    assert max_err < 5e-2, f"mismatch vs reference: {max_err}"

    print("KERNEL_OK")
</pallas_src>

<mosaic_0001>
module attributes {stable_mosaic.version = 11 : i64} {
  func.func @hand_transformer_kernel(%arg0: i32, %arg1: memref<1x64x4xf32, #tpu.memory_space<vmem>>, %arg2: memref<4x64xf32, #tpu.memory_space<vmem>>, %arg3: memref<1x64xf32, #tpu.memory_space<vmem>>, %arg4: memref<24x64xf32, #tpu.memory_space<vmem>>, %arg5: memref<2x2x3x64x64xbf16, #tpu.memory_space<vmem>>, %arg6: memref<2x2x3x64xf32, #tpu.memory_space<vmem>>, %arg7: memref<2x2x64x64xbf16, #tpu.memory_space<vmem>>, %arg8: memref<2x2x64xf32, #tpu.memory_space<vmem>>, %arg9: memref<2x3x64xf32, #tpu.memory_space<vmem>>, %arg10: memref<2x3x64xf32, #tpu.memory_space<vmem>>, %arg11: memref<2x64x256xbf16, #tpu.memory_space<vmem>>, %arg12: memref<2x256xf32, #tpu.memory_space<vmem>>, %arg13: memref<2x256x64xbf16, #tpu.memory_space<vmem>>, %arg14: memref<2x64xf32, #tpu.memory_space<vmem>>, %arg15: memref<64x128xbf16, #tpu.memory_space<vmem>>, %arg16: memref<1x128xf32, #tpu.memory_space<vmem>>, %arg17: memref<1x24x128xf32, #tpu.memory_space<vmem>>) attributes {dimension_semantics = [#tpu.dimension_semantics<parallel>], iteration_bounds = array<i64: 2>, scalar_prefetch = 0 : i64, scratch_operands = 0 : i64, tpu.core_type = #tpu.core_type<tc>, window_params = [{transform_indices = @transform_0, window_bounds = array<i64: 1, 64, 4>}, {pipeline_mode = #tpu.pipeline_mode<synchronous>, transform_indices = @transform_1, window_bounds = array<i64: 4, 64>}, {pipeline_mode = #tpu.pipeline_mode<synchronous>, transform_indices = @transform_2, window_bounds = array<i64: 1, 64>}, {pipeline_mode = #tpu.pipeline_mode<synchronous>, transform_indices = @transform_3, window_bounds = array<i64: 24, 64>}, {pipeline_mode = #tpu.pipeline_mode<synchronous>, transform_indices = @transform_4, window_bounds = array<i64: 2, 2, 3, 64, 64>}, {pipeline_mode = #tpu.pipeline_mode<synchronous>, transform_indices = @transform_5, window_bounds = array<i64: 2, 2, 3, 64>}, {pipeline_mode = #tpu.pipeline_mode<synchronous>, transform_indices = @transform_6, window_bounds = array<i64: 2, 2, 64, 64>}, {pipeline_mode = #tpu.pipeline_mode<synchronous>, transform_indices = @transform_7, window_bounds = array<i64: 2, 2, 64>}, {pipeline_mode = #tpu.pipeline_mode<synchronous>, transform_indices = @transform_8, window_bounds = array<i64: 2, 3, 64>}, {pipeline_mode = #tpu.pipeline_mode<synchronous>, transform_indices = @transform_9, window_bounds = array<i64: 2, 3, 64>}, {pipeline_mode = #tpu.pipeline_mode<synchronous>, transform_indices = @transform_10, window_bounds = array<i64: 2, 64, 256>}, {pipeline_mode = #tpu.pipeline_mode<synchronous>, transform_indices = @transform_11, window_bounds = array<i64: 2, 256>}, {pipeline_mode = #tpu.pipeline_mode<synchronous>, transform_indices = @transform_12, window_bounds = array<i64: 2, 256, 64>}, {pipeline_mode = #tpu.pipeline_mode<synchronous>, transform_indices = @transform_13, window_bounds = array<i64: 2, 64>}, {pipeline_mode = #tpu.pipeline_mode<synchronous>, transform_indices = @transform_14, window_bounds = array<i64: 64, 128>}, {pipeline_mode = #tpu.pipeline_mode<synchronous>, transform_indices = @transform_15, window_bounds = array<i64: 1, 128>}, {transform_indices = @transform_16, window_bounds = array<i64: 1, 24, 128>}]} {
    %c0 = arith.constant 0 : index
    %c0_0 = arith.constant 0 : index
    %c0_1 = arith.constant 0 : index
    %0 = vector.load %arg1[%c0, %c0_0, %c0_1] : memref<1x64x4xf32, #tpu.memory_space<vmem>>, vector<1x64x4xf32>
    %1 = vector.shape_cast %0 : vector<1x64x4xf32> to vector<64x4xf32>
    %c0_2 = arith.constant 0 : index
    %c0_3 = arith.constant 0 : index
    %2 = vector.load %arg2[%c0_2, %c0_3] : memref<4x64xf32, #tpu.memory_space<vmem>>, vector<4x64xf32>
    %c0_4 = arith.constant 0 : index
    %c0_5 = arith.constant 0 : index
    %3 = vector.load %arg3[%c0_4, %c0_5] : memref<1x64xf32, #tpu.memory_space<vmem>>, vector<1x64xf32>
    %4 = vector.extract_strided_slice %1 {offsets = [0, 0], sizes = [64, 1], strides = [1, 1]} : vector<64x4xf32> to vector<64x1xf32>
    %5 = vector.extract_strided_slice %2 {offsets = [0, 0], sizes = [1, 64], strides = [1, 1]} : vector<4x64xf32> to vector<1x64xf32>
    %6 = vector.broadcast %4 : vector<64x1xf32> to vector<64x64xf32>
    %7 = vector.broadcast %5 : vector<1x64xf32> to vector<64x64xf32>
    %8 = arith.mulf %6, %7 : vector<64x64xf32>
    %9 = vector.broadcast %3 : vector<1x64xf32> to vector<64x64xf32>
    %10 = arith.addf %9, %8 : vector<64x64xf32>
    %11 = vector.extract_strided_slice %1 {offsets = [0, 1], sizes = [64, 1], strides = [1, 1]} : vector<64x4xf32> to vector<64x1xf32>
    %12 = vector.extract_strided_slice %2 {offsets = [1, 0], sizes = [1, 64], strides = [1, 1]} : vector<4x64xf32> to vector<1x64xf32>
    %13 = vector.broadcast %11 : vector<64x1xf32> to vector<64x64xf32>
    %14 = vector.broadcast %12 : vector<1x64xf32> to vector<64x64xf32>
    %15 = arith.mulf %13, %14 : vector<64x64xf32>
    %16 = arith.addf %10, %15 : vector<64x64xf32>
    %17 = vector.extract_strided_slice %1 {offsets = [0, 2], sizes = [64, 1], strides = [1, 1]} : vector<64x4xf32> to vector<64x1xf32>
    %18 = vector.extract_strided_slice %2 {offsets = [2, 0], sizes = [1, 64], strides = [1, 1]} : vector<4x64xf32> to vector<1x64xf32>
    %19 = vector.broadcast %17 : vector<64x1xf32> to vector<64x64xf32>
    %20 = vector.broadcast %18 : vector<1x64xf32> to vector<64x64xf32>
    %21 = arith.mulf %19, %20 : vector<64x64xf32>
    %22 = arith.addf %16, %21 : vector<64x64xf32>
    %23 = vector.extract_strided_slice %1 {offsets = [0, 3], sizes = [64, 1], strides = [1, 1]} : vector<64x4xf32> to vector<64x1xf32>
    %24 = vector.extract_strided_slice %2 {offsets = [3, 0], sizes = [1, 64], strides = [1, 1]} : vector<4x64xf32> to vector<1x64xf32>
    %25 = vector.broadcast %23 : vector<64x1xf32> to vector<64x64xf32>
    %26 = vector.broadcast %24 : vector<1x64xf32> to vector<64x64xf32>
    %27 = arith.mulf %25, %26 : vector<64x64xf32>
    %28 = arith.addf %22, %27 : vector<64x64xf32>
    %29 = arith.truncf %28 : vector<64x64xf32> to vector<64x64xbf16>
    %30 = tpu.iota {dimensions = array<i32: 1>} : vector<24x24xi32>
    %c21_i32 = arith.constant 21 : i32
    %31 = vector.broadcast %c21_i32 : i32 to vector<24x24xi32>
    %32 = arith.cmpi sge, %30, %31 : vector<24x24xi32>
    %cst = arith.constant -1.000000e+30 : f32
    %cst_6 = arith.constant 0.000000e+00 : f32
    %33 = vector.broadcast %cst : f32 to vector<24x24xf32>
    %34 = vector.broadcast %cst_6 : f32 to vector<24x24xf32>
    %35 = arith.select %32, %33, %34 : vector<24x24xi1>, vector<24x24xf32>
    %c0_7 = arith.constant 0 : index
    %c0_8 = arith.constant 0 : index
    %36 = vector.load %arg4[%c0_7, %c0_8] : memref<24x64xf32, #tpu.memory_space<vmem>>, vector<24x64xf32>
    %c0_9 = arith.constant 0 : index
    %c0_10 = arith.constant 0 : index
    %c0_11 = arith.constant 0 : index
    %37 = vector.load %arg9[%c0_9, %c0_10, %c0_11] : memref<2x3x64xf32, #tpu.memory_space<vmem>>, vector<1x1x64xf32>
    %38 = vector.shape_cast %37 : vector<1x1x64xf32> to vector<64xf32>
    %c0_12 = arith.constant 0 : index
    %c0_13 = arith.constant 0 : index
    %c0_14 = arith.constant 0 : index
    %39 = vector.load %arg10[%c0_12, %c0_13, %c0_14] : memref<2x3x64xf32, #tpu.memory_space<vmem>>, vector<1x1x64xf32>
    %40 = vector.shape_cast %39 : vector<1x1x64xf32> to vector<64xf32>
    %cst_15 = arith.constant dense<0.000000e+00> : vector<24xf32>
    %41 = vector.multi_reduction <add>, %36, %cst_15 [1] : vector<24x64xf32> to vector<24xf32>
    %42 = vector.shape_cast %41 : vector<24xf32> to vector<24x1xf32>
    %cst_16 = arith.constant 6.400000e+01 : f32
    %43 = vector.broadcast %cst_16 : f32 to vector<24x1xf32>
    %44 = arith.divf %42, %43 : vector<24x1xf32>
    %45 = vector.broadcast %44 : vector<24x1xf32> to vector<24x64xf32>
    %46 = arith.subf %36, %45 : vector<24x64xf32>
    %47 = arith.mulf %46, %46 : vector<24x64xf32>
    %cst_17 = arith.constant dense<0.000000e+00> : vector<24xf32>
    %48 = vector.multi_reduction <add>, %47, %cst_17 [1] : vector<24x64xf32> to vector<24xf32>
    %49 = vector.shape_cast %48 : vector<24xf32> to vector<24x1xf32>
    %cst_18 = arith.constant 6.400000e+01 : f32
    %50 = vector.broadcast %cst_18 : f32 to vector<24x1xf32>
    %51 = arith.divf %49, %50 : vector<24x1xf32>
    %52 = vector.broadcast %44 : vector<24x1xf32> to vector<24x64xf32>
    %53 = arith.subf %36, %52 : vector<24x64xf32>
    %cst_19 = arith.constant 9.99999974E-6 : f32
    %54 = vector.broadcast %cst_19 : f32 to vector<24x1xf32>
    %55 = arith.addf %51, %54 : vector<24x1xf32>
    %56 = math.rsqrt %55 : vector<24x1xf32>
    %57 = vector.broadcast %56 : vector<24x1xf32> to vector<24x64xf32>
    %58 = arith.mulf %53, %57 : vector<24x64xf32>
    %59 = vector.shape_cast %38 : vector<64xf32> to vector<1x64xf32>
    %60 = vector.broadcast %59 : vector<1x64xf32> to vector<24x64xf32>
    %61 = arith.mulf %58, %60 : vector<24x64xf32>
    %62 = vector.shape_cast %40 : vector<64xf32> to vector<1x64xf32>
    %63 = vector.broadcast %62 : vector<1x64xf32> to vector<24x64xf32>
    %64 = arith.addf %61, %63 : vector<24x64xf32>
    %65 = arith.truncf %64 : vector<24x64xf32> to vector<24x64xbf16>
    %c0_20 = arith.constant 0 : index
    %c0_21 = arith.constant 0 : index
    %c0_22 = arith.constant 0 : index
    %c0_23 = arith.constant 0 : index
    %c0_24 = arith.constant 0 : index
    %66 = vector.load %arg5[%c0_20, %c0_21, %c0_22, %c0_23, %c0_24] : memref<2x2x3x64x64xbf16, #tpu.memory_space<vmem>>, vector<1x1x1x64x64xbf16>
    %67 = vector.shape_cast %66 : vector<1x1x1x64x64xbf16> to vector<64x64xbf16>
    %cst_25 = arith.constant dense<0.000000e+00> : vector<24x64xf32>
    %68 = tpu.matmul %65, %67, %cst_25 {dimension_numbers = #tpu.dot_dimension_numbers<[1], [0], [0], [1], [0, 0, 1, 1], [], []>} : vector<24x64xbf16>, vector<64x64xbf16>, vector<24x64xf32> -> vector<24x64xf32>
    %c0_26 = arith.constant 0 : index
    %c0_27 = arith.constant 0 : index
    %c0_28 = arith.constant 0 : index
    %c0_29 = arith.constant 0 : index
    %69 = vector.load %arg6[%c0_26, %c0_27, %c0_28, %c0_29] : memref<2x2x3x64xf32, #tpu.memory_space<vmem>>, vector<1x1x1x64xf32>
    %70 = vector.shape_cast %69 : vector<1x1x1x64xf32> to vector<64xf32>
    %71 = vector.shape_cast %70 : vector<64xf32> to vector<1x64xf32>
    %72 = vector.broadcast %71 : vector<1x64xf32> to vector<24x64xf32>
    %73 = arith.addf %68, %72 : vector<24x64xf32>
    %c0_30 = arith.constant 0 : index
    %c0_31 = arith.constant 0 : index
    %c1 = arith.constant 1 : index
    %c0_32 = arith.constant 0 : index
    %c0_33 = arith.constant 0 : index
    %74 = vector.load %arg5[%c0_30, %c0_31, %c1, %c0_32, %c0_33] : memref<2x2x3x64x64xbf16, #tpu.memory_space<vmem>>, vector<1x1x1x64x64xbf16>
    %75 = vector.shape_cast %74 : vector<1x1x1x64x64xbf16> to vector<64x64xbf16>
    %cst_34 = arith.constant dense<0.000000e+00> : vector<24x64xf32>
    %76 = tpu.matmul %65, %75, %cst_34 {dimension_numbers = #tpu.dot_dimension_numbers<[1], [0], [0], [1], [0, 0, 1, 1], [], []>} : vector<24x64xbf16>, vector<64x64xbf16>, vector<24x64xf32> -> vector<24x64xf32>
    %c0_35 = arith.constant 0 : index
    %c0_36 = arith.constant 0 : index
    %c1_37 = arith.constant 1 : index
    %c0_38 = arith.constant 0 : index
    %77 = vector.load %arg6[%c0_35, %c0_36, %c1_37, %c0_38] : memref<2x2x3x64xf32, #tpu.memory_space<vmem>>, vector<1x1x1x64xf32>
    %78 = vector.shape_cast %77 : vector<1x1x1x64xf32> to vector<64xf32>
    %79 = vector.shape_cast %78 : vector<64xf32> to vector<1x64xf32>
    %80 = vector.broadcast %79 : vector<1x64xf32> to vector<24x64xf32>
    %81 = arith.addf %76, %80 : vector<24x64xf32>
    %c0_39 = arith.constant 0 : index
    %c0_40 = arith.constant 0 : index
    %c2 = arith.constant 2 : index
    %c0_41 = arith.constant 0 : index
    %c0_42 = arith.constant 0 : index
    %82 = vector.load %arg5[%c0_39, %c0_40, %c2, %c0_41, %c0_42] : memref<2x2x3x64x64xbf16, #tpu.memory_space<vmem>>, vector<1x1x1x64x64xbf16>
    %83 = vector.shape_cast %82 : vector<1x1x1x64x64xbf16> to vector<64x64xbf16>
    %cst_43 = arith.constant dense<0.000000e+00> : vector<24x64xf32>
    %84 = tpu.matmul %65, %83, %cst_43 {dimension_numbers = #tpu.dot_dimension_numbers<[1], [0], [0], [1], [0, 0, 1, 1], [], []>} : vector<24x64xbf16>, vector<64x64xbf16>, vector<24x64xf32> -> vector<24x64xf32>
    %c0_44 = arith.constant 0 : index
    %c0_45 = arith.constant 0 : index
    %c2_46 = arith.constant 2 : index
    %c0_47 = arith.constant 0 : index
    %85 = vector.load %arg6[%c0_44, %c0_45, %c2_46, %c0_47] : memref<2x2x3x64xf32, #tpu.memory_space<vmem>>, vector<1x1x1x64xf32>
    %86 = vector.shape_cast %85 : vector<1x1x1x64xf32> to vector<64xf32>
    %87 = vector.shape_cast %86 : vector<64xf32> to vector<1x64xf32>
    %88 = vector.broadcast %87 : vector<1x64xf32> to vector<24x64xf32>
    %89 = arith.addf %84, %88 : vector<24x64xf32>
    %90 = arith.truncf %73 : vector<24x64xf32> to vector<24x64xbf16>
    %91 = arith.truncf %81 : vector<24x64xf32> to vector<24x64xbf16>
    %cst_48 = arith.constant dense<0.000000e+00> : vector<24x24xf32>
    %92 = tpu.matmul %90, %91, %cst_48 {dimension_numbers = #tpu.dot_dimension_numbers<[1], [1], [0], [0], [0, 0, 1, 0], [], []>} : vector<24x64xbf16>, vector<24x64xbf16>, vector<24x24xf32> -> vector<24x24xf32>
    %cst_49 = arith.constant 1.250000e-01 : f32
    %93 = vector.broadcast %cst_49 : f32 to vector<24x24xf32>
    %94 = arith.mulf %92, %93 : vector<24x24xf32>
    %95 = arith.addf %94, %35 : vector<24x24xf32>
    %cst_50 = arith.constant dense<0xFF800000> : vector<24xf32>
    %96 = vector.multi_reduction <maximumf>, %95, %cst_50 [1] : vector<24x24xf32> to vector<24xf32>
    %97 = vector.shape_cast %96 : vector<24xf32> to vector<24x1xf32>
    %98 = vector.broadcast %97 : vector<24x1xf32> to vector<24x24xf32>
    %99 = arith.subf %95, %98 : vector<24x24xf32>
    %100 = math.exp %99 : vector<24x24xf32>
    %cst_51 = arith.constant dense<0.000000e+00> : vector<24xf32>
    %101 = vector.multi_reduction <add>, %100, %cst_51 [1] : vector<24x24xf32> to vector<24xf32>
    %102 = vector.shape_cast %101 : vector<24xf32> to vector<24x1xf32>
    %103 = tpu.reciprocal %102 {approx = true} : vector<24x1xf32> -> vector<24x1xf32>
    %104 = vector.broadcast %103 : vector<24x1xf32> to vector<24x24xf32>
    %105 = arith.mulf %100, %104 : vector<24x24xf32>
    %106 = arith.truncf %105 : vector<24x24xf32> to vector<24x24xbf16>
    %107 = arith.truncf %89 : vector<24x64xf32> to vector<24x64xbf16>
    %cst_52 = arith.constant dense<0.000000e+00> : vector<24x64xf32>
    %108 = tpu.matmul %106, %107, %cst_52 {dimension_numbers = #tpu.dot_dimension_numbers<[1], [0], [0], [1], [0, 0, 1, 1], [], []>} : vector<24x24xbf16>, vector<24x64xbf16>, vector<24x64xf32> -> vector<24x64xf32>
    %109 = arith.truncf %108 : vector<24x64xf32> to vector<24x64xbf16>
    %c0_53 = arith.constant 0 : index
    %c0_54 = arith.constant 0 : index
    %c0_55 = arith.constant 0 : index
    %c0_56 = arith.constant 0 : index
    %110 = vector.load %arg7[%c0_53, %c0_54, %c0_55, %c0_56] : memref<2x2x64x64xbf16, #tpu.memory_space<vmem>>, vector<1x1x64x64xbf16>
    %111 = vector.shape_cast %110 : vector<1x1x64x64xbf16> to vector<64x64xbf16>
    %cst_57 = arith.constant dense<0.000000e+00> : vector<24x64xf32>
    %112 = tpu.matmul %109, %111, %cst_57 {dimension_numbers = #tpu.dot_dimension_numbers<[1], [0], [0], [1], [0, 0, 1, 1], [], []>} : vector<24x64xbf16>, vector<64x64xbf16>, vector<24x64xf32> -> vector<24x64xf32>
    %113 = arith.addf %36, %112 : vector<24x64xf32>
    %c0_58 = arith.constant 0 : index
    %c0_59 = arith.constant 0 : index
    %c0_60 = arith.constant 0 : index
    %114 = vector.load %arg8[%c0_58, %c0_59, %c0_60] : memref<2x2x64xf32, #tpu.memory_space<vmem>>, vector<1x1x64xf32>
    %115 = vector.shape_cast %114 : vector<1x1x64xf32> to vector<64xf32>
    %116 = vector.shape_cast %115 : vector<64xf32> to vector<1x64xf32>
    %117 = vector.broadcast %116 : vector<1x64xf32> to vector<24x64xf32>
    %118 = arith.addf %113, %117 : vector<24x64xf32>
    %c0_61 = arith.constant 0 : index
    %c1_62 = arith.constant 1 : index
    %c0_63 = arith.constant 0 : index
    %119 = vector.load %arg9[%c0_61, %c1_62, %c0_63] : memref<2x3x64xf32, #tpu.memory_space<vmem>>, vector<1x1x64xf32>
    %120 = vector.shape_cast %119 : vector<1x1x64xf32> to vector<64xf32>
    %c0_64 = arith.constant 0 : index
    %c1_65 = arith.constant 1 : index
    %c0_66 = arith.constant 0 : index
    %121 = vector.load %arg10[%c0_64, %c1_65, %c0_66] : memref<2x3x64xf32, #tpu.memory_space<vmem>>, vector<1x1x64xf32>
    %122 = vector.shape_cast %121 : vector<1x1x64xf32> to vector<64xf32>
    %cst_67 = arith.constant dense<0.000000e+00> : vector<24xf32>
    %123 = vector.multi_reduction <add>, %118, %cst_67 [1] : vector<24x64xf32> to vector<24xf32>
    %124 = vector.shape_cast %123 : vector<24xf32> to vector<24x1xf32>
    %cst_68 = arith.constant 6.400000e+01 : f32
    %125 = vector.broadcast %cst_68 : f32 to vector<24x1xf32>
    %126 = arith.divf %124, %125 : vector<24x1xf32>
    %127 = vector.broadcast %126 : vector<24x1xf32> to vector<24x64xf32>
    %128 = arith.subf %118, %127 : vector<24x64xf32>
    %129 = arith.mulf %128, %128 : vector<24x64xf32>
    %cst_69 = arith.constant dense<0.000000e+00> : vector<24xf32>
    %130 = vector.multi_reduction <add>, %129, %cst_69 [1] : vector<24x64xf32> to vector<24xf32>
    %131 = vector.shape_cast %130 : vector<24xf32> to vector<24x1xf32>
    %cst_70 = arith.constant 6.400000e+01 : f32
    %132 = vector.broadcast %cst_70 : f32 to vector<24x1xf32>
    %133 = arith.divf %131, %132 : vector<24x1xf32>
    %134 = vector.broadcast %126 : vector<24x1xf32> to vector<24x64xf32>
    %135 = arith.subf %118, %134 : vector<24x64xf32>
    %cst_71 = arith.constant 9.99999974E-6 : f32
    %136 = vector.broadcast %cst_71 : f32 to vector<24x1xf32>
    %137 = arith.addf %133, %136 : vector<24x1xf32>
    %138 = math.rsqrt %137 : vector<24x1xf32>
    %139 = vector.broadcast %138 : vector<24x1xf32> to vector<24x64xf32>
    %140 = arith.mulf %135, %139 : vector<24x64xf32>
    %141 = vector.shape_cast %120 : vector<64xf32> to vector<1x64xf32>
    %142 = vector.broadcast %141 : vector<1x64xf32> to vector<24x64xf32>
    %143 = arith.mulf %140, %142 : vector<24x64xf32>
    %144 = vector.shape_cast %122 : vector<64xf32> to vector<1x64xf32>
    %145 = vector.broadcast %144 : vector<1x64xf32> to vector<24x64xf32>
    %146 = arith.addf %143, %145 : vector<24x64xf32>
    %147 = arith.truncf %146 : vector<24x64xf32> to vector<24x64xbf16>
    %c0_72 = arith.constant 0 : index
    %c1_73 = arith.constant 1 : index
    %c0_74 = arith.constant 0 : index
    %c0_75 = arith.constant 0 : index
    %c0_76 = arith.constant 0 : index
    %148 = vector.load %arg5[%c0_72, %c1_73, %c0_74, %c0_75, %c0_76] : memref<2x2x3x64x64xbf16, #tpu.memory_space<vmem>>, vector<1x1x1x64x64xbf16>
    %149 = vector.shape_cast %148 : vector<1x1x1x64x64xbf16> to vector<64x64xbf16>
    %cst_77 = arith.constant dense<0.000000e+00> : vector<24x64xf32>
    %150 = tpu.matmul %147, %149, %cst_77 {dimension_numbers = #tpu.dot_dimension_numbers<[1], [0], [0], [1], [0, 0, 1, 1], [], []>} : vector<24x64xbf16>, vector<64x64xbf16>, vector<24x64xf32> -> vector<24x64xf32>
    %c0_78 = arith.constant 0 : index
    %c1_79 = arith.constant 1 : index
    %c0_80 = arith.constant 0 : index
    %c0_81 = arith.constant 0 : index
    %151 = vector.load %arg6[%c0_78, %c1_79, %c0_80, %c0_81] : memref<2x2x3x64xf32, #tpu.memory_space<vmem>>, vector<1x1x1x64xf32>
    %152 = vector.shape_cast %151 : vector<1x1x1x64xf32> to vector<64xf32>
    %153 = vector.shape_cast %152 : vector<64xf32> to vector<1x64xf32>
    %154 = vector.broadcast %153 : vector<1x64xf32> to vector<24x64xf32>
    %155 = arith.addf %150, %154 : vector<24x64xf32>
    %c0_82 = arith.constant 0 : index
    %c1_83 = arith.constant 1 : index
    %c1_84 = arith.constant 1 : index
    %c0_85 = arith.constant 0 : index
    %c0_86 = arith.constant 0 : index
    %156 = vector.load %arg5[%c0_82, %c1_83, %c1_84, %c0_85, %c0_86] : memref<2x2x3x64x64xbf16, #tpu.memory_space<vmem>>, vector<1x1x1x64x64xbf16>
    %157 = vector.shape_cast %156 : vector<1x1x1x64x64xbf16> to vector<64x64xbf16>
    %cst_87 = arith.constant dense<0.000000e+00> : vector<64x64xf32>
    %158 = tpu.matmul %29, %157, %cst_87 {dimension_numbers = #tpu.dot_dimension_numbers<[1], [0], [0], [1], [0, 0, 1, 1], [], []>} : vector<64x64xbf16>, vector<64x64xbf16>, vector<64x64xf32> -> vector<64x64xf32>
    %c0_88 = arith.constant 0 : index
    %c1_89 = arith.constant 1 : index
    %c1_90 = arith.constant 1 : index
    %c0_91 = arith.constant 0 : index
    %159 = vector.load %arg6[%c0_88, %c1_89, %c1_90, %c0_91] : memref<2x2x3x64xf32, #tpu.memory_space<vmem>>, vector<1x1x1x64xf32>
    %160 = vector.shape_cast %159 : vector<1x1x1x64xf32> to vector<64xf32>
    %161 = vector.shape_cast %160 : vector<64xf32> to vector<1x64xf32>
    %162 = vector.broadcast %161 : vector<1x64xf32> to vector<64x64xf32>
    %163 = arith.addf %158, %162 : vector<64x64xf32>
    %c0_92 = arith.constant 0 : index
    %c1_93 = arith.constant 1 : index
    %c2_94 = arith.constant 2 : index
    %c0_95 = arith.constant 0 : index
    %c0_96 = arith.constant 0 : index
    %164 = vector.load %arg5[%c0_92, %c1_93, %c2_94, %c0_95, %c0_96] : memref<2x2x3x64x64xbf16, #tpu.memory_space<vmem>>, vector<1x1x1x64x64xbf16>
    %165 = vector.shape_cast %164 : vector<1x1x1x64x64xbf16> to vector<64x64xbf16>
    %cst_97 = arith.constant dense<0.000000e+00> : vector<64x64xf32>
    %166 = tpu.matmul %29, %165, %cst_97 {dimension_numbers = #tpu.dot_dimension_numbers<[1], [0], [0], [1], [0, 0, 1, 1], [], []>} : vector<64x64xbf16>, vector<64x64xbf16>, vector<64x64xf32> -> vector<64x64xf32>
    %c0_98 = arith.constant 0 : index
    %c1_99 = arith.constant 1 : index
    %c2_100 = arith.constant 2 : index
    %c0_101 = arith.constant 0 : index
    %167 = vector.load %arg6[%c0_98, %c1_99, %c2_100, %c0_101] : memref<2x2x3x64xf32, #tpu.memory_space<vmem>>, vector<1x1x1x64xf32>
    %168 = vector.shape_cast %167 : vector<1x1x1x64xf32> to vector<64xf32>
    %169 = vector.shape_cast %168 : vector<64xf32> to vector<1x64xf32>
    %170 = vector.broadcast %169 : vector<1x64xf32> to vector<64x64xf32>
    %171 = arith.addf %166, %170 : vector<64x64xf32>
    %172 = arith.truncf %155 : vector<24x64xf32> to vector<24x64xbf16>
    %173 = arith.truncf %163 : vector<64x64xf32> to vector<64x64xbf16>
    %cst_102 = arith.constant dense<0.000000e+00> : vector<24x64xf32>
    %174 = tpu.matmul %172, %173, %cst_102 {dimension_numbers = #tpu.dot_dimension_numbers<[1], [1], [0], [0], [0, 0, 1, 0], [], []>} : vector<24x64xbf16>, vector<64x64xbf16>, vector<24x64xf32> -> vector<24x64xf32>
    %cst_103 = arith.constant 1.250000e-01 : f32
    %175 = vector.broadcast %cst_103 : f32 to vector<24x64xf32>
    %176 = arith.mulf %174, %175 : vector<24x64xf32>
    %cst_104 = arith.constant dense<0xFF800000> : vector<24xf32>
    %177 = vector.multi_reduction <maximumf>, %176, %cst_104 [1] : vector<24x64xf32> to vector<24xf32>
    %178 = vector.shape_cast %177 : vector<24xf32> to vector<24x1xf32>
    %179 = vector.broadcast %178 : vector<24x1xf32> to vector<24x64xf32>
    %180 = arith.subf %176, %179 : vector<24x64xf32>
    %181 = math.exp %180 : vector<24x64xf32>
    %cst_105 = arith.constant dense<0.000000e+00> : vector<24xf32>
    %182 = vector.multi_reduction <add>, %181, %cst_105 [1] : vector<24x64xf32> to vector<24xf32>
    %183 = vector.shape_cast %182 : vector<24xf32> to vector<24x1xf32>
    %184 = tpu.reciprocal %183 {approx = true} : vector<24x1xf32> -> vector<24x1xf32>
    %185 = vector.broadcast %184 : vector<24x1xf32> to vector<24x64xf32>
    %186 = arith.mulf %181, %185 : vector<24x64xf32>
    %187 = arith.truncf %186 : vector<24x64xf32> to vector<24x64xbf16>
    %188 = arith.truncf %171 : vector<64x64xf32> to vector<64x64xbf16>
    %cst_106 = arith.constant dense<0.000000e+00> : vector<24x64xf32>
    %189 = tpu.matmul %187, %188, %cst_106 {dimension_numbers = #tpu.dot_dimension_numbers<[1], [0], [0], [1], [0, 0, 1, 1], [], []>} : vector<24x64xbf16>, vector<64x64xbf16>, vector<24x64xf32> -> vector<24x64xf32>
    %190 = arith.truncf %189 : vector<24x64xf32> to vector<24x64xbf16>
    %c0_107 = arith.constant 0 : index
    %c1_108 = arith.constant 1 : index
    %c0_109 = arith.constant 0 : index
    %c0_110 = arith.constant 0 : index
    %191 = vector.load %arg7[%c0_107, %c1_108, %c0_109, %c0_110] : memref<2x2x64x64xbf16, #tpu.memory_space<vmem>>, vector<1x1x64x64xbf16>
    %192 = vector.shape_cast %191 : vector<1x1x64x64xbf16> to vector<64x64xbf16>
    %cst_111 = arith.constant dense<0.000000e+00> : vector<24x64xf32>
    %193 = tpu.matmul %190, %192, %cst_111 {dimension_numbers = #tpu.dot_dimension_numbers<[1], [0], [0], [1], [0, 0, 1, 1], [], []>} : vector<24x64xbf16>, vector<64x64xbf16>, vector<24x64xf32> -> vector<24x64xf32>
    %194 = arith.addf %118, %193 : vector<24x64xf32>
    %c0_112 = arith.constant 0 : index
    %c1_113 = arith.constant 1 : index
    %c0_114 = arith.constant 0 : index
    %195 = vector.load %arg8[%c0_112, %c1_113, %c0_114] : memref<2x2x64xf32, #tpu.memory_space<vmem>>, vector<1x1x64xf32>
    %196 = vector.shape_cast %195 : vector<1x1x64xf32> to vector<64xf32>
    %197 = vector.shape_cast %196 : vector<64xf32> to vector<1x64xf32>
    %198 = vector.broadcast %197 : vector<1x64xf32> to vector<24x64xf32>
    %199 = arith.addf %194, %198 : vector<24x64xf32>
    %c0_115 = arith.constant 0 : index
    %c2_116 = arith.constant 2 : index
    %c0_117 = arith.constant 0 : index
    %200 = vector.load %arg9[%c0_115, %c2_116, %c0_117] : memref<2x3x64xf32, #tpu.memory_space<vmem>>, vector<1x1x64xf32>
    %201 = vector.shape_cast %200 : vector<1x1x64xf32> to vector<64xf32>
    %c0_118 = arith.constant 0 : index
    %c2_119 = arith.constant 2 : index
    %c0_120 = arith.constant 0 : index
    %202 = vector.load %arg10[%c0_118, %c2_119, %c0_120] : memref<2x3x64xf32, #tpu.memory_space<vmem>>, vector<1x1x64xf32>
    %203 = vector.shape_cast %202 : vector<1x1x64xf32> to vector<64xf32>
    %cst_121 = arith.constant dense<0.000000e+00> : vector<24xf32>
    %204 = vector.multi_reduction <add>, %199, %cst_121 [1] : vector<24x64xf32> to vector<24xf32>
    %205 = vector.shape_cast %204 : vector<24xf32> to vector<24x1xf32>
    %cst_122 = arith.constant 6.400000e+01 : f32
    %206 = vector.broadcast %cst_122 : f32 to vector<24x1xf32>
    %207 = arith.divf %205, %206 : vector<24x1xf32>
    %208 = vector.broadcast %207 : vector<24x1xf32> to vector<24x64xf32>
    %209 = arith.subf %199, %208 : vector<24x64xf32>
    %210 = arith.mulf %209, %209 : vector<24x64xf32>
    %cst_123 = arith.constant dense<0.000000e+00> : vector<24xf32>
    %211 = vector.multi_reduction <add>, %210, %cst_123 [1] : vector<24x64xf32> to vector<24xf32>
    %212 = vector.shape_cast %211 : vector<24xf32> to vector<24x1xf32>
    %cst_124 = arith.constant 6.400000e+01 : f32
    %213 = vector.broadcast %cst_124 : f32 to vector<24x1xf32>
    %214 = arith.divf %212, %213 : vector<24x1xf32>
    %215 = vector.broadcast %207 : vector<24x1xf32> to vector<24x64xf32>
    %216 = arith.subf %199, %215 : vector<24x64xf32>
    %cst_125 = arith.constant 9.99999974E-6 : f32
    %217 = vector.broadcast %cst_125 : f32 to vector<24x1xf32>
    %218 = arith.addf %214, %217 : vector<24x1xf32>
    %219 = math.rsqrt %218 : vector<24x1xf32>
    %220 = vector.broadcast %219 : vector<24x1xf32> to vector<24x64xf32>
    %221 = arith.mulf %216, %220 : vector<24x64xf32>
    %222 = vector.shape_cast %201 : vector<64xf32> to vector<1x64xf32>
    %223 = vector.broadcast %222 : vector<1x64xf32> to vector<24x64xf32>
    %224 = arith.mulf %221, %223 : vector<24x64xf32>
    %225 = vector.shape_cast %203 : vector<64xf32> to vector<1x64xf32>
    %226 = vector.broadcast %225 : vector<1x64xf32> to vector<24x64xf32>
    %227 = arith.addf %224, %226 : vector<24x64xf32>
    %228 = arith.truncf %227 : vector<24x64xf32> to vector<24x64xbf16>
    %c0_126 = arith.constant 0 : index
    %c0_127 = arith.constant 0 : index
    %c0_128 = arith.constant 0 : index
    %229 = vector.load %arg11[%c0_126, %c0_127, %c0_128] : memref<2x64x256xbf16, #tpu.memory_space<vmem>>, vector<1x64x256xbf16>
    %230 = vector.shape_cast %229 : vector<1x64x256xbf16> to vector<64x256xbf16>
    %cst_129 = arith.constant dense<0.000000e+00> : vector<24x256xf32>
    %231 = tpu.matmul %228, %230, %cst_129 {dimension_numbers = #tpu.dot_dimension_numbers<[1], [0], [0], [1], [0, 0, 1, 1], [], []>} : vector<24x64xbf16>, vector<64x256xbf16>, vector<24x256xf32> -> vector<24x256xf32>
    %c0_130 = arith.constant 0 : index
    %c0_131 = arith.constant 0 : index
    %232 = vector.load %arg12[%c0_130, %c0_131] : memref<2x256xf32, #tpu.memory_space<vmem>>, vector<1x256xf32>
    %233 = vector.shape_cast %232 : vector<1x256xf32> to vector<256xf32>
    %234 = vector.shape_cast %233 : vector<256xf32> to vector<1x256xf32>
    %235 = vector.broadcast %234 : vector<1x256xf32> to vector<24x256xf32>
    %236 = arith.addf %231, %235 : vector<24x256xf32>
    %cst_132 = arith.constant 0.000000e+00 : f32
    %237 = vector.broadcast %cst_132 : f32 to vector<24x256xf32>
    %238 = arith.maximumf %236, %237 : vector<24x256xf32>
    %239 = arith.truncf %238 : vector<24x256xf32> to vector<24x256xbf16>
    %c0_133 = arith.constant 0 : index
    %c0_134 = arith.constant 0 : index
    %c0_135 = arith.constant 0 : index
    %240 = vector.load %arg13[%c0_133, %c0_134, %c0_135] : memref<2x256x64xbf16, #tpu.memory_space<vmem>>, vector<1x256x64xbf16>
    %241 = vector.shape_cast %240 : vector<1x256x64xbf16> to vector<256x64xbf16>
    %cst_136 = arith.constant dense<0.000000e+00> : vector<24x64xf32>
    %242 = tpu.matmul %239, %241, %cst_136 {dimension_numbers = #tpu.dot_dimension_numbers<[1], [0], [0], [1], [0, 0, 1, 1], [], []>} : vector<24x256xbf16>, vector<256x64xbf16>, vector<24x64xf32> -> vector<24x64xf32>
    %243 = arith.addf %199, %242 : vector<24x64xf32>
    %c0_137 = arith.constant 0 : index
    %c0_138 = arith.constant 0 : index
    %244 = vector.load %arg14[%c0_137, %c0_138] : memref<2x64xf32, #tpu.memory_space<vmem>>, vector<1x64xf32>
    %245 = vector.shape_cast %244 : vector<1x64xf32> to vector<64xf32>
    %246 = vector.shape_cast %245 : vector<64xf32> to vector<1x64xf32>
    %247 = vector.broadcast %246 : vector<1x64xf32> to vector<24x64xf32>
    %248 = arith.addf %243, %247 : vector<24x64xf32>
    %c1_139 = arith.constant 1 : index
    %c0_140 = arith.constant 0 : index
    %c0_141 = arith.constant 0 : index
    %249 = vector.load %arg9[%c1_139, %c0_140, %c0_141] : memref<2x3x64xf32, #tpu.memory_space<vmem>>, vector<1x1x64xf32>
    %250 = vector.shape_cast %249 : vector<1x1x64xf32> to vector<64xf32>
    %c1_142 = arith.constant 1 : index
    %c0_143 = arith.constant 0 : index
    %c0_144 = arith.constant 0 : index
    %251 = vector.load %arg10[%c1_142, %c0_143, %c0_144] : memref<2x3x64xf32, #tpu.memory_space<vmem>>, vector<1x1x64xf32>
    %252 = vector.shape_cast %251 : vector<1x1x64xf32> to vector<64xf32>
    %cst_145 = arith.constant dense<0.000000e+00> : vector<24xf32>
    %253 = vector.multi_reduction <add>, %248, %cst_145 [1] : vector<24x64xf32> to vector<24xf32>
    %254 = vector.shape_cast %253 : vector<24xf32> to vector<24x1xf32>
    %cst_146 = arith.constant 6.400000e+01 : f32
    %255 = vector.broadcast %cst_146 : f32 to vector<24x1xf32>
    %256 = arith.divf %254, %255 : vector<24x1xf32>
    %257 = vector.broadcast %256 : vector<24x1xf32> to vector<24x64xf32>
    %258 = arith.subf %248, %257 : vector<24x64xf32>
    %259 = arith.mulf %258, %258 : vector<24x64xf32>
    %cst_147 = arith.constant dense<0.000000e+00> : vector<24xf32>
    %260 = vector.multi_reduction <add>, %259, %cst_147 [1] : vector<24x64xf32> to vector<24xf32>
    %261 = vector.shape_cast %260 : vector<24xf32> to vector<24x1xf32>
    %cst_148 = arith.constant 6.400000e+01 : f32
    %262 = vector.broadcast %cst_148 : f32 to vector<24x1xf32>
    %263 = arith.divf %261, %262 : vector<24x1xf32>
    %264 = vector.broadcast %256 : vector<24x1xf32> to vector<24x64xf32>
    %265 = arith.subf %248, %264 : vector<24x64xf32>
    %cst_149 = arith.constant 9.99999974E-6 : f32
    %266 = vector.broadcast %cst_149 : f32 to vector<24x1xf32>
    %267 = arith.addf %263, %266 : vector<24x1xf32>
    %268 = math.rsqrt %267 : vector<24x1xf32>
    %269 = vector.broadcast %268 : vector<24x1xf32> to vector<24x64xf32>
    %270 = arith.mulf %265, %269 : vector<24x64xf32>
    %271 = vector.shape_cast %250 : vector<64xf32> to vector<1x64xf32>
    %272 = vector.broadcast %271 : vector<1x64xf32> to vector<24x64xf32>
    %273 = arith.mulf %270, %272 : vector<24x64xf32>
    %274 = vector.shape_cast %252 : vector<64xf32> to vector<1x64xf32>
    %275 = vector.broadcast %274 : vector<1x64xf32> to vector<24x64xf32>
    %276 = arith.addf %273, %275 : vector<24x64xf32>
    %277 = arith.truncf %276 : vector<24x64xf32> to vector<24x64xbf16>
    %c1_150 = arith.constant 1 : index
    %c0_151 = arith.constant 0 : index
    %c0_152 = arith.constant 0 : index
    %c0_153 = arith.constant 0 : index
    %c0_154 = arith.constant 0 : index
    %278 = vector.load %arg5[%c1_150, %c0_151, %c0_152, %c0_153, %c0_154] : memref<2x2x3x64x64xbf16, #tpu.memory_space<vmem>>, vector<1x1x1x64x64xbf16>
    %279 = vector.shape_cast %278 : vector<1x1x1x64x64xbf16> to vector<64x64xbf16>
    %cst_155 = arith.constant dense<0.000000e+00> : vector<24x64xf32>
    %280 = tpu.matmul %277, %279, %cst_155 {dimension_numbers = #tpu.dot_dimension_numbers<[1], [0], [0], [1], [0, 0, 1, 1], [], []>} : vector<24x64xbf16>, vector<64x64xbf16>, vector<24x64xf32> -> vector<24x64xf32>
    %c1_156 = arith.constant 1 : index
    %c0_157 = arith.constant 0 : index
    %c0_158 = arith.constant 0 : index
    %c0_159 = arith.constant 0 : index
    %281 = vector.load %arg6[%c1_156, %c0_157, %c0_158, %c0_159] : memref<2x2x3x64xf32, #tpu.memory_space<vmem>>, vector<1x1x1x64xf32>
    %282 = vector.shape_cast %281 : vector<1x1x1x64xf32> to vector<64xf32>
    %283 = vector.shape_cast %282 : vector<64xf32> to vector<1x64xf32>
    %284 = vector.broadcast %283 : vector<1x64xf32> to vector<24x64xf32>
    %285 = arith.addf %280, %284 : vector<24x64xf32>
    %c1_160 = arith.constant 1 : index
    %c0_161 = arith.constant 0 : index
    %c1_162 = arith.constant 1 : index
    %c0_163 = arith.constant 0 : index
    %c0_164 = arith.constant 0 : index
    %286 = vector.load %arg5[%c1_160, %c0_161, %c1_162, %c0_163, %c0_164] : memref<2x2x3x64x64xbf16, #tpu.memory_space<vmem>>, vector<1x1x1x64x64xbf16>
    %287 = vector.shape_cast %286 : vector<1x1x1x64x64xbf16> to vector<64x64xbf16>
    %cst_165 = arith.constant dense<0.000000e+00> : vector<24x64xf32>
    %288 = tpu.matmul %277, %287, %cst_165 {dimension_numbers = #tpu.dot_dimension_numbers<[1], [0], [0], [1], [0, 0, 1, 1], [], []>} : vector<24x64xbf16>, vector<64x64xbf16>, vector<24x64xf32> -> vector<24x64xf32>
    %c1_166 = arith.constant 1 : index
    %c0_167 = arith.constant 0 : index
    %c1_168 = arith.constant 1 : index
    %c0_169 = arith.constant 0 : index
    %289 = vector.load %arg6[%c1_166, %c0_167, %c1_168, %c0_169] : memref<2x2x3x64xf32, #tpu.memory_space<vmem>>, vector<1x1x1x64xf32>
    %290 = vector.shape_cast %289 : vector<1x1x1x64xf32> to vector<64xf32>
    %291 = vector.shape_cast %290 : vector<64xf32> to vector<1x64xf32>
    %292 = vector.broadcast %291 : vector<1x64xf32> to vector<24x64xf32>
    %293 = arith.addf %288, %292 : vector<24x64xf32>
    %c1_170 = arith.constant 1 : index
    %c0_171 = arith.constant 0 : index
    %c2_172 = arith.constant 2 : index
    %c0_173 = arith.constant 0 : index
    %c0_174 = arith.constant 0 : index
    %294 = vector.load %arg5[%c1_170, %c0_171, %c2_172, %c0_173, %c0_174] : memref<2x2x3x64x64xbf16, #tpu.memory_space<vmem>>, vector<1x1x1x64x64xbf16>
    %295 = vector.shape_cast %294 : vector<1x1x1x64x64xbf16> to vector<64x64xbf16>
    %cst_175 = arith.constant dense<0.000000e+00> : vector<24x64xf32>
    %296 = tpu.matmul %277, %295, %cst_175 {dimension_numbers = #tpu.dot_dimension_numbers<[1], [0], [0], [1], [0, 0, 1, 1], [], []>} : vector<24x64xbf16>, vector<64x64xbf16>, vector<24x64xf32> -> vector<24x64xf32>
    %c1_176 = arith.constant 1 : index
    %c0_177 = arith.constant 0 : index
    %c2_178 = arith.constant 2 : index
    %c0_179 = arith.constant 0 : index
    %297 = vector.load %arg6[%c1_176, %c0_177, %c2_178, %c0_179] : memref<2x2x3x64xf32, #tpu.memory_space<vmem>>, vector<1x1x1x64xf32>
    %298 = vector.shape_cast %297 : vector<1x1x1x64xf32> to vector<64xf32>
    %299 = vector.shape_cast %298 : vector<64xf32> to vector<1x64xf32>
    %300 = vector.broadcast %299 : vector<1x64xf32> to vector<24x64xf32>
    %301 = arith.addf %296, %300 : vector<24x64xf32>
    %302 = arith.truncf %285 : vector<24x64xf32> to vector<24x64xbf16>
    %303 = arith.truncf %293 : vector<24x64xf32> to vector<24x64xbf16>
    %cst_180 = arith.constant dense<0.000000e+00> : vector<24x24xf32>
    %304 = tpu.matmul %302, %303, %cst_180 {dimension_numbers = #tpu.dot_dimension_numbers<[1], [1], [0], [0], [0, 0, 1, 0], [], []>} : vector<24x64xbf16>, vector<24x64xbf16>, vector<24x24xf32> -> vector<24x24xf32>
    %cst_181 = arith.constant 1.250000e-01 : f32
    %305 = vector.broadcast %cst_181 : f32 to vector<24x24xf32>
    %306 = arith.mulf %304, %305 : vector<24x24xf32>
    %307 = arith.addf %306, %35 : vector<24x24xf32>
    %cst_182 = arith.constant dense<0xFF800000> : vector<24xf32>
    %308 = vector.multi_reduction <maximumf>, %307, %cst_182 [1] : vector<24x24xf32> to vector<24xf32>
    %309 = vector.shape_cast %308 : vector<24xf32> to vector<24x1xf32>
    %310 = vector.broadcast %309 : vector<24x1xf32> to vector<24x24xf32>
    %311 = arith.subf %307, %310 : vector<24x24xf32>
    %312 = math.exp %311 : vector<24x24xf32>
    %cst_183 = arith.constant dense<0.000000e+00> : vector<24xf32>
    %313 = vector.multi_reduction <add>, %312, %cst_183 [1] : vector<24x24xf32> to vector<24xf32>
    %314 = vector.shape_cast %313 : vector<24xf32> to vector<24x1xf32>
    %315 = tpu.reciprocal %314 {approx = true} : vector<24x1xf32> -> vector<24x1xf32>
    %316 = vector.broadcast %315 : vector<24x1xf32> to vector<24x24xf32>
    %317 = arith.mulf %312, %316 : vector<24x24xf32>
    %318 = arith.truncf %317 : vector<24x24xf32> to vector<24x24xbf16>
    %319 = arith.truncf %301 : vector<24x64xf32> to vector<24x64xbf16>
    %cst_184 = arith.constant dense<0.000000e+00> : vector<24x64xf32>
    %320 = tpu.matmul %318, %319, %cst_184 {dimension_numbers = #tpu.dot_dimension_numbers<[1], [0], [0], [1], [0, 0, 1, 1], [], []>} : vector<24x24xbf16>, vector<24x64xbf16>, vector<24x64xf32> -> vector<24x64xf32>
    %321 = arith.truncf %320 : vector<24x64xf32> to vector<24x64xbf16>
    %c1_185 = arith.constant 1 : index
    %c0_186 = arith.constant 0 : index
    %c0_187 = arith.constant 0 : index
    %c0_188 = arith.constant 0 : index
    %322 = vector.load %arg7[%c1_185, %c0_186, %c0_187, %c0_188] : memref<2x2x64x64xbf16, #tpu.memory_space<vmem>>, vector<1x1x64x64xbf16>
    %323 = vector.shape_cast %322 : vector<1x1x64x64xbf16> to vector<64x64xbf16>
    %cst_189 = arith.constant dense<0.000000e+00> : vector<24x64xf32>
    %324 = tpu.matmul %321, %323, %cst_189 {dimension_numbers = #tpu.dot_dimension_numbers<[1], [0], [0], [1], [0, 0, 1, 1], [], []>} : vector<24x64xbf16>, vector<64x64xbf16>, vector<24x64xf32> -> vector<24x64xf32>
    %325 = arith.addf %248, %324 : vector<24x64xf32>
    %c1_190 = arith.constant 1 : index
    %c0_191 = arith.constant 0 : index
    %c0_192 = arith.constant 0 : index
    %326 = vector.load %arg8[%c1_190, %c0_191, %c0_192] : memref<2x2x64xf32, #tpu.memory_space<vmem>>, vector<1x1x64xf32>
    %327 = vector.shape_cast %326 : vector<1x1x64xf32> to vector<64xf32>
    %328 = vector.shape_cast %327 : vector<64xf32> to vector<1x64xf32>
    %329 = vector.broadcast %328 : vector<1x64xf32> to vector<24x64xf32>
    %330 = arith.addf %325, %329 : vector<24x64xf32>
    %c1_193 = arith.constant 1 : index
    %c1_194 = arith.constant 1 : index
    %c0_195 = arith.constant 0 : index
    %331 = vector.load %arg9[%c1_193, %c1_194, %c0_195] : memref<2x3x64xf32, #tpu.memory_space<vmem>>, vector<1x1x64xf32>
    %332 = vector.shape_cast %331 : vector<1x1x64xf32> to vector<64xf32>
    %c1_196 = arith.constant 1 : index
    %c1_197 = arith.constant 1 : index
    %c0_198 = arith.constant 0 : index
    %333 = vector.load %arg10[%c1_196, %c1_197, %c0_198] : memref<2x3x64xf32, #tpu.memory_space<vmem>>, vector<1x1x64xf32>
    %334 = vector.shape_cast %333 : vector<1x1x64xf32> to vector<64xf32>
    %cst_199 = arith.constant dense<0.000000e+00> : vector<24xf32>
    %335 = vector.multi_reduction <add>, %330, %cst_199 [1] : vector<24x64xf32> to vector<24xf32>
    %336 = vector.shape_cast %335 : vector<24xf32> to vector<24x1xf32>
    %cst_200 = arith.constant 6.400000e+01 : f32
    %337 = vector.broadcast %cst_200 : f32 to vector<24x1xf32>
    %338 = arith.divf %336, %337 : vector<24x1xf32>
    %339 = vector.broadcast %338 : vector<24x1xf32> to vector<24x64xf32>
    %340 = arith.subf %330, %339 : vector<24x64xf32>
    %341 = arith.mulf %340, %340 : vector<24x64xf32>
    %cst_201 = arith.constant dense<0.000000e+00> : vector<24xf32>
    %342 = vector.multi_reduction <add>, %341, %cst_201 [1] : vector<24x64xf32> to vector<24xf32>
    %343 = vector.shape_cast %342 : vector<24xf32> to vector<24x1xf32>
    %cst_202 = arith.constant 6.400000e+01 : f32
    %344 = vector.broadcast %cst_202 : f32 to vector<24x1xf32>
    %345 = arith.divf %343, %344 : vector<24x1xf32>
    %346 = vector.broadcast %338 : vector<24x1xf32> to vector<24x64xf32>
    %347 = arith.subf %330, %346 : vector<24x64xf32>
    %cst_203 = arith.constant 9.99999974E-6 : f32
    %348 = vector.broadcast %cst_203 : f32 to vector<24x1xf32>
    %349 = arith.addf %345, %348 : vector<24x1xf32>
    %350 = math.rsqrt %349 : vector<24x1xf32>
    %351 = vector.broadcast %350 : vector<24x1xf32> to vector<24x64xf32>
    %352 = arith.mulf %347, %351 : vector<24x64xf32>
    %353 = vector.shape_cast %332 : vector<64xf32> to vector<1x64xf32>
    %354 = vector.broadcast %353 : vector<1x64xf32> to vector<24x64xf32>
    %355 = arith.mulf %352, %354 : vector<24x64xf32>
    %356 = vector.shape_cast %334 : vector<64xf32> to vector<1x64xf32>
    %357 = vector.broadcast %356 : vector<1x64xf32> to vector<24x64xf32>
    %358 = arith.addf %355, %357 : vector<24x64xf32>
    %359 = arith.truncf %358 : vector<24x64xf32> to vector<24x64xbf16>
    %c1_204 = arith.constant 1 : index
    %c1_205 = arith.constant 1 : index
    %c0_206 = arith.constant 0 : index
    %c0_207 = arith.constant 0 : index
    %c0_208 = arith.constant 0 : index
    %360 = vector.load %arg5[%c1_204, %c1_205, %c0_206, %c0_207, %c0_208] : memref<2x2x3x64x64xbf16, #tpu.memory_space<vmem>>, vector<1x1x1x64x64xbf16>
    %361 = vector.shape_cast %360 : vector<1x1x1x64x64xbf16> to vector<64x64xbf16>
    %cst_209 = arith.constant dense<0.000000e+00> : vector<24x64xf32>
    %362 = tpu.matmul %359, %361, %cst_209 {dimension_numbers = #tpu.dot_dimension_numbers<[1], [0], [0], [1], [0, 0, 1, 1], [], []>} : vector<24x64xbf16>, vector<64x64xbf16>, vector<24x64xf32> -> vector<24x64xf32>
    %c1_210 = arith.constant 1 : index
    %c1_211 = arith.constant 1 : index
    %c0_212 = arith.constant 0 : index
    %c0_213 = arith.constant 0 : index
    %363 = vector.load %arg6[%c1_210, %c1_211, %c0_212, %c0_213] : memref<2x2x3x64xf32, #tpu.memory_space<vmem>>, vector<1x1x1x64xf32>
    %364 = vector.shape_cast %363 : vector<1x1x1x64xf32> to vector<64xf32>
    %365 = vector.shape_cast %364 : vector<64xf32> to vector<1x64xf32>
    %366 = vector.broadcast %365 : vector<1x64xf32> to vector<24x64xf32>
    %367 = arith.addf %362, %366 : vector<24x64xf32>
    %c1_214 = arith.constant 1 : index
    %c1_215 = arith.constant 1 : index
    %c1_216 = arith.constant 1 : index
    %c0_217 = arith.constant 0 : index
    %c0_218 = arith.constant 0 : index
    %368 = vector.load %arg5[%c1_214, %c1_215, %c1_216, %c0_217, %c0_218] : memref<2x2x3x64x64xbf16, #tpu.memory_space<vmem>>, vector<1x1x1x64x64xbf16>
    %369 = vector.shape_cast %368 : vector<1x1x1x64x64xbf16> to vector<64x64xbf16>
    %cst_219 = arith.constant dense<0.000000e+00> : vector<64x64xf32>
    %370 = tpu.matmul %29, %369, %cst_219 {dimension_numbers = #tpu.dot_dimension_numbers<[1], [0], [0], [1], [0, 0, 1, 1], [], []>} : vector<64x64xbf16>, vector<64x64xbf16>, vector<64x64xf32> -> vector<64x64xf32>
    %c1_220 = arith.constant 1 : index
    %c1_221 = arith.constant 1 : index
    %c1_222 = arith.constant 1 : index
    %c0_223 = arith.constant 0 : index
    %371 = vector.load %arg6[%c1_220, %c1_221, %c1_222, %c0_223] : memref<2x2x3x64xf32, #tpu.memory_space<vmem>>, vector<1x1x1x64xf32>
    %372 = vector.shape_cast %371 : vector<1x1x1x64xf32> to vector<64xf32>
    %373 = vector.shape_cast %372 : vector<64xf32> to vector<1x64xf32>
    %374 = vector.broadcast %373 : vector<1x64xf32> to vector<64x64xf32>
    %375 = arith.addf %370, %374 : vector<64x64xf32>
    %c1_224 = arith.constant 1 : index
    %c1_225 = arith.constant 1 : index
    %c2_226 = arith.constant 2 : index
    %c0_227 = arith.constant 0 : index
    %c0_228 = arith.constant 0 : index
    %376 = vector.load %arg5[%c1_224, %c1_225, %c2_226, %c0_227, %c0_228] : memref<2x2x3x64x64xbf16, #tpu.memory_space<vmem>>, vector<1x1x1x64x64xbf16>
    %377 = vector.shape_cast %376 : vector<1x1x1x64x64xbf16> to vector<64x64xbf16>
    %cst_229 = arith.constant dense<0.000000e+00> : vector<64x64xf32>
    %378 = tpu.matmul %29, %377, %cst_229 {dimension_numbers = #tpu.dot_dimension_numbers<[1], [0], [0], [1], [0, 0, 1, 1], [], []>} : vector<64x64xbf16>, vector<64x64xbf16>, vector<64x64xf32> -> vector<64x64xf32>
    %c1_230 = arith.constant 1 : index
    %c1_231 = arith.constant 1 : index
    %c2_232 = arith.constant 2 : index
    %c0_233 = arith.constant 0 : index
    %379 = vector.load %arg6[%c1_230, %c1_231, %c2_232, %c0_233] : memref<2x2x3x64xf32, #tpu.memory_space<vmem>>, vector<1x1x1x64xf32>
    %380 = vector.shape_cast %379 : vector<1x1x1x64xf32> to vector<64xf32>
    %381 = vector.shape_cast %380 : vector<64xf32> to vector<1x64xf32>
    %382 = vector.broadcast %381 : vector<1x64xf32> to vector<64x64xf32>
    %383 = arith.addf %378, %382 : vector<64x64xf32>
    %384 = arith.truncf %367 : vector<24x64xf32> to vector<24x64xbf16>
    %385 = arith.truncf %375 : vector<64x64xf32> to vector<64x64xbf16>
    %cst_234 = arith.constant dense<0.000000e+00> : vector<24x64xf32>
    %386 = tpu.matmul %384, %385, %cst_234 {dimension_numbers = #tpu.dot_dimension_numbers<[1], [1], [0], [0], [0, 0, 1, 0], [], []>} : vector<24x64xbf16>, vector<64x64xbf16>, vector<24x64xf32> -> vector<24x64xf32>
    %cst_235 = arith.constant 1.250000e-01 : f32
    %387 = vector.broadcast %cst_235 : f32 to vector<24x64xf32>
    %388 = arith.mulf %386, %387 : vector<24x64xf32>
    %cst_236 = arith.constant dense<0xFF800000> : vector<24xf32>
    %389 = vector.multi_reduction <maximumf>, %388, %cst_236 [1] : vector<24x64xf32> to vector<24xf32>
    %390 = vector.shape_cast %389 : vector<24xf32> to vector<24x1xf32>
    %391 = vector.broadcast %390 : vector<24x1xf32> to vector<24x64xf32>
    %392 = arith.subf %388, %391 : vector<24x64xf32>
    %393 = math.exp %392 : vector<24x64xf32>
    %cst_237 = arith.constant dense<0.000000e+00> : vector<24xf32>
    %394 = vector.multi_reduction <add>, %393, %cst_237 [1] : vector<24x64xf32> to vector<24xf32>
    %395 = vector.shape_cast %394 : vector<24xf32> to vector<24x1xf32>
    %396 = tpu.reciprocal %395 {approx = true} : vector<24x1xf32> -> vector<24x1xf32>
    %397 = vector.broadcast %396 : vector<24x1xf32> to vector<24x64xf32>
    %398 = arith.mulf %393, %397 : vector<24x64xf32>
    %399 = arith.truncf %398 : vector<24x64xf32> to vector<24x64xbf16>
    %400 = arith.truncf %383 : vector<64x64xf32> to vector<64x64xbf16>
    %cst_238 = arith.constant dense<0.000000e+00> : vector<24x64xf32>
    %401 = tpu.matmul %399, %400, %cst_238 {dimension_numbers = #tpu.dot_dimension_numbers<[1], [0], [0], [1], [0, 0, 1, 1], [], []>} : vector<24x64xbf16>, vector<64x64xbf16>, vector<24x64xf32> -> vector<24x64xf32>
    %402 = arith.truncf %401 : vector<24x64xf32> to vector<24x64xbf16>
    %c1_239 = arith.constant 1 : index
    %c1_240 = arith.constant 1 : index
    %c0_241 = arith.constant 0 : index
    %c0_242 = arith.constant 0 : index
    %403 = vector.load %arg7[%c1_239, %c1_240, %c0_241, %c0_242] : memref<2x2x64x64xbf16, #tpu.memory_space<vmem>>, vector<1x1x64x64xbf16>
    %404 = vector.shape_cast %403 : vector<1x1x64x64xbf16> to vector<64x64xbf16>
    %cst_243 = arith.constant dense<0.000000e+00> : vector<24x64xf32>
    %405 = tpu.matmul %402, %404, %cst_243 {dimension_numbers = #tpu.dot_dimension_numbers<[1], [0], [0], [1], [0, 0, 1, 1], [], []>} : vector<24x64xbf16>, vector<64x64xbf16>, vector<24x64xf32> -> vector<24x64xf32>
    %406 = arith.addf %330, %405 : vector<24x64xf32>
    %c1_244 = arith.constant 1 : index
    %c1_245 = arith.constant 1 : index
    %c0_246 = arith.constant 0 : index
    %407 = vector.load %arg8[%c1_244, %c1_245, %c0_246] : memref<2x2x64xf32, #tpu.memory_space<vmem>>, vector<1x1x64xf32>
    %408 = vector.shape_cast %407 : vector<1x1x64xf32> to vector<64xf32>
    %409 = vector.shape_cast %408 : vector<64xf32> to vector<1x64xf32>
    %410 = vector.broadcast %409 : vector<1x64xf32> to vector<24x64xf32>
    %411 = arith.addf %406, %410 : vector<24x64xf32>
    %c1_247 = arith.constant 1 : index
    %c2_248 = arith.constant 2 : index
    %c0_249 = arith.constant 0 : index
    %412 = vector.load %arg9[%c1_247, %c2_248, %c0_249] : memref<2x3x64xf32, #tpu.memory_space<vmem>>, vector<1x1x64xf32>
    %413 = vector.shape_cast %412 : vector<1x1x64xf32> to vector<64xf32>
    %c1_250 = arith.constant 1 : index
    %c2_251 = arith.constant 2 : index
    %c0_252 = arith.constant 0 : index
    %414 = vector.load %arg10[%c1_250, %c2_251, %c0_252] : memref<2x3x64xf32, #tpu.memory_space<vmem>>, vector<1x1x64xf32>
    %415 = vector.shape_cast %414 : vector<1x1x64xf32> to vector<64xf32>
    %cst_253 = arith.constant dense<0.000000e+00> : vector<24xf32>
    %416 = vector.multi_reduction <add>, %411, %cst_253 [1] : vector<24x64xf32> to vector<24xf32>
    %417 = vector.shape_cast %416 : vector<24xf32> to vector<24x1xf32>
    %cst_254 = arith.constant 6.400000e+01 : f32
    %418 = vector.broadcast %cst_254 : f32 to vector<24x1xf32>
    %419 = arith.divf %417, %418 : vector<24x1xf32>
    %420 = vector.broadcast %419 : vector<24x1xf32> to vector<24x64xf32>
    %421 = arith.subf %411, %420 : vector<24x64xf32>
    %422 = arith.mulf %421, %421 : vector<24x64xf32>
    %cst_255 = arith.constant dense<0.000000e+00> : vector<24xf32>
    %423 = vector.multi_reduction <add>, %422, %cst_255 [1] : vector<24x64xf32> to vector<24xf32>
    %424 = vector.shape_cast %423 : vector<24xf32> to vector<24x1xf32>
    %cst_256 = arith.constant 6.400000e+01 : f32
    %425 = vector.broadcast %cst_256 : f32 to vector<24x1xf32>
    %426 = arith.divf %424, %425 : vector<24x1xf32>
    %427 = vector.broadcast %419 : vector<24x1xf32> to vector<24x64xf32>
    %428 = arith.subf %411, %427 : vector<24x64xf32>
    %cst_257 = arith.constant 9.99999974E-6 : f32
    %429 = vector.broadcast %cst_257 : f32 to vector<24x1xf32>
    %430 = arith.addf %426, %429 : vector<24x1xf32>
    %431 = math.rsqrt %430 : vector<24x1xf32>
    %432 = vector.broadcast %431 : vector<24x1xf32> to vector<24x64xf32>
    %433 = arith.mulf %428, %432 : vector<24x64xf32>
    %434 = vector.shape_cast %413 : vector<64xf32> to vector<1x64xf32>
    %435 = vector.broadcast %434 : vector<1x64xf32> to vector<24x64xf32>
    %436 = arith.mulf %433, %435 : vector<24x64xf32>
    %437 = vector.shape_cast %415 : vector<64xf32> to vector<1x64xf32>
    %438 = vector.broadcast %437 : vector<1x64xf32> to vector<24x64xf32>
    %439 = arith.addf %436, %438 : vector<24x64xf32>
    %440 = arith.truncf %439 : vector<24x64xf32> to vector<24x64xbf16>
    %c1_258 = arith.constant 1 : index
    %c0_259 = arith.constant 0 : index
    %c0_260 = arith.constant 0 : index
    %441 = vector.load %arg11[%c1_258, %c0_259, %c0_260] : memref<2x64x256xbf16, #tpu.memory_space<vmem>>, vector<1x64x256xbf16>
    %442 = vector.shape_cast %441 : vector<1x64x256xbf16> to vector<64x256xbf16>
    %cst_261 = arith.constant dense<0.000000e+00> : vector<24x256xf32>
    %443 = tpu.matmul %440, %442, %cst_261 {dimension_numbers = #tpu.dot_dimension_numbers<[1], [0], [0], [1], [0, 0, 1, 1], [], []>} : vector<24x64xbf16>, vector<64x256xbf16>, vector<24x256xf32> -> vector<24x256xf32>
    %c1_262 = arith.constant 1 : index
    %c0_263 = arith.constant 0 : index
    %444 = vector.load %arg12[%c1_262, %c0_263] : memref<2x256xf32, #tpu.memory_space<vmem>>, vector<1x256xf32>
    %445 = vector.shape_cast %444 : vector<1x256xf32> to vector<256xf32>
    %446 = vector.shape_cast %445 : vector<256xf32> to vector<1x256xf32>
    %447 = vector.broadcast %446 : vector<1x256xf32> to vector<24x256xf32>
    %448 = arith.addf %443, %447 : vector<24x256xf32>
    %cst_264 = arith.constant 0.000000e+00 : f32
    %449 = vector.broadcast %cst_264 : f32 to vector<24x256xf32>
    %450 = arith.maximumf %448, %449 : vector<24x256xf32>
    %451 = arith.truncf %450 : vector<24x256xf32> to vector<24x256xbf16>
    %c1_265 = arith.constant 1 : index
    %c0_266 = arith.constant 0 : index
    %c0_267 = arith.constant 0 : index
    %452 = vector.load %arg13[%c1_265, %c0_266, %c0_267] : memref<2x256x64xbf16, #tpu.memory_space<vmem>>, vector<1x256x64xbf16>
    %453 = vector.shape_cast %452 : vector<1x256x64xbf16> to vector<256x64xbf16>
    %cst_268 = arith.constant dense<0.000000e+00> : vector<24x64xf32>
    %454 = tpu.matmul %451, %453, %cst_268 {dimension_numbers = #tpu.dot_dimension_numbers<[1], [0], [0], [1], [0, 0, 1, 1], [], []>} : vector<24x256xbf16>, vector<256x64xbf16>, vector<24x64xf32> -> vector<24x64xf32>
    %455 = arith.addf %411, %454 : vector<24x64xf32>
    %c1_269 = arith.constant 1 : index
    %c0_270 = arith.constant 0 : index
    %456 = vector.load %arg14[%c1_269, %c0_270] : memref<2x64xf32, #tpu.memory_space<vmem>>, vector<1x64xf32>
    %457 = vector.shape_cast %456 : vector<1x64xf32> to vector<64xf32>
    %458 = vector.shape_cast %457 : vector<64xf32> to vector<1x64xf32>
    %459 = vector.broadcast %458 : vector<1x64xf32> to vector<24x64xf32>
    %460 = arith.addf %455, %459 : vector<24x64xf32>
    %461 = arith.truncf %460 : vector<24x64xf32> to vector<24x64xbf16>
    %c0_271 = arith.constant 0 : index
    %c0_272 = arith.constant 0 : index
    %462 = vector.load %arg15[%c0_271, %c0_272] : memref<64x128xbf16, #tpu.memory_space<vmem>>, vector<64x128xbf16>
    %cst_273 = arith.constant dense<0.000000e+00> : vector<24x128xf32>
    %463 = tpu.matmul %461, %462, %cst_273 {dimension_numbers = #tpu.dot_dimension_numbers<[1], [0], [0], [1], [0, 0, 1, 1], [], []>} : vector<24x64xbf16>, vector<64x128xbf16>, vector<24x128xf32> -> vector<24x128xf32>
    %c0_274 = arith.constant 0 : index
    %c0_275 = arith.constant 0 : index
    %464 = vector.load %arg16[%c0_274, %c0_275] : memref<1x128xf32, #tpu.memory_space<vmem>>, vector<1x128xf32>
    %465 = vector.broadcast %464 : vector<1x128xf32> to vector<24x128xf32>
    %466 = arith.addf %463, %465 : vector<24x128xf32>
    %c0_276 = arith.constant 0 : index
    %c0_277 = arith.constant 0 : index
    %c0_278 = arith.constant 0 : index
    %467 = vector.load %arg17[%c0_276, %c0_277, %c0_278] : memref<1x24x128xf32, #tpu.memory_space<vmem>>, vector<1x24x128xf32>
    %468 = vector.shape_cast %467 : vector<1x24x128xf32> to vector<24x128xf32>
    %469 = vector.shape_cast %466 : vector<24x128xf32> to vector<1x24x128xf32>
    tpu.vector_store %arg17[%c0_276, %c0_277, %c0_278], %469 {strides = array<i32>} : memref<1x24x128xf32, #tpu.memory_space<vmem>>, vector<1x24x128xf32>,
    return
  }
  func.func @transform_0(%arg0: i32) -> (i32, i32, i32) {
    %c0_i32 = arith.constant 0 : i32
    %c0_i32_0 = arith.constant 0 : i32
    %c0_i32_1 = arith.constant 0 : i32
    return %arg0, %c0_i32, %c0_i32_0 : i32, i32, i32
  }
  func.func @transform_1(%arg0: i32) -> (i32, i32) {
    %c0_i32 = arith.constant 0 : i32
    %c0_i32_0 = arith.constant 0 : i32
    %c0_i32_1 = arith.constant 0 : i32
    return %c0_i32, %c0_i32_0 : i32, i32
  }
  func.func @transform_2(%arg0: i32) -> (i32, i32) {
    %c0_i32 = arith.constant 0 : i32
    %c0_i32_0 = arith.constant 0 : i32
    %c0_i32_1 = arith.constant 0 : i32
    return %c0_i32, %c0_i32_0 : i32, i32
  }
  func.func @transform_3(%arg0: i32) -> (i32, i32) {
    %c0_i32 = arith.constant 0 : i32
    %c0_i32_0 = arith.constant 0 : i32
    %c0_i32_1 = arith.constant 0 : i32
    return %c0_i32, %c0_i32_0 : i32, i32
  }
  func.func @transform_4(%arg0: i32) -> (i32, i32, i32, i32, i32) {
    %c0_i32 = arith.constant 0 : i32
    %c0_i32_0 = arith.constant 0 : i32
    %c0_i32_1 = arith.constant 0 : i32
    %c0_i32_2 = arith.constant 0 : i32
    %c0_i32_3 = arith.constant 0 : i32
    %c0_i32_4 = arith.constant 0 : i32
    return %c0_i32, %c0_i32_0, %c0_i32_1, %c0_i32_2, %c0_i32_3 : i32, i32, i32, i32, i32
  }
  func.func @transform_5(%arg0: i32) -> (i32, i32, i32, i32) {
    %c0_i32 = arith.constant 0 : i32
    %c0_i32_0 = arith.constant 0 : i32
    %c0_i32_1 = arith.constant 0 : i32
    %c0_i32_2 = arith.constant 0 : i32
    %c0_i32_3 = arith.constant 0 : i32
    return %c0_i32, %c0_i32_0, %c0_i32_1, %c0_i32_2 : i32, i32, i32, i32
  }
  func.func @transform_6(%arg0: i32) -> (i32, i32, i32, i32) {
    %c0_i32 = arith.constant 0 : i32
    %c0_i32_0 = arith.constant 0 : i32
    %c0_i32_1 = arith.constant 0 : i32
    %c0_i32_2 = arith.constant 0 : i32
    %c0_i32_3 = arith.constant 0 : i32
    return %c0_i32, %c0_i32_0, %c0_i32_1, %c0_i32_2 : i32, i32, i32, i32
  }
  func.func @transform_7(%arg0: i32) -> (i32, i32, i32) {
    %c0_i32 = arith.constant 0 : i32
    %c0_i32_0 = arith.constant 0 : i32
    %c0_i32_1 = arith.constant 0 : i32
    %c0_i32_2 = arith.constant 0 : i32
    return %c0_i32, %c0_i32_0, %c0_i32_1 : i32, i32, i32
  }
  func.func @transform_8(%arg0: i32) -> (i32, i32, i32) {
    %c0_i32 = arith.constant 0 : i32
    %c0_i32_0 = arith.constant 0 : i32
    %c0_i32_1 = arith.constant 0 : i32
    %c0_i32_2 = arith.constant 0 : i32
    return %c0_i32, %c0_i32_0, %c0_i32_1 : i32, i32, i32
  }
  func.func @transform_9(%arg0: i32) -> (i32, i32, i32) {
    %c0_i32 = arith.constant 0 : i32
    %c0_i32_0 = arith.constant 0 : i32
    %c0_i32_1 = arith.constant 0 : i32
    %c0_i32_2 = arith.constant 0 : i32
    return %c0_i32, %c0_i32_0, %c0_i32_1 : i32, i32, i32
  }
  func.func @transform_10(%arg0: i32) -> (i32, i32, i32) {
    %c0_i32 = arith.constant 0 : i32
    %c0_i32_0 = arith.constant 0 : i32
    %c0_i32_1 = arith.constant 0 : i32
    %c0_i32_2 = arith.constant 0 : i32
    return %c0_i32, %c0_i32_0, %c0_i32_1 : i32, i32, i32
  }
  func.func @transform_11(%arg0: i32) -> (i32, i32) {
    %c0_i32 = arith.constant 0 : i32
    %c0_i32_0 = arith.constant 0 : i32
    %c0_i32_1 = arith.constant 0 : i32
    return %c0_i32, %c0_i32_0 : i32, i32
  }
  func.func @transform_12(%arg0: i32) -> (i32, i32, i32) {
    %c0_i32 = arith.constant 0 : i32
    %c0_i32_0 = arith.constant 0 : i32
    %c0_i32_1 = arith.constant 0 : i32
    %c0_i32_2 = arith.constant 0 : i32
    return %c0_i32, %c0_i32_0, %c0_i32_1 : i32, i32, i32
  }
  func.func @transform_13(%arg0: i32) -> (i32, i32) {
    %c0_i32 = arith.constant 0 : i32
    %c0_i32_0 = arith.constant 0 : i32
    %c0_i32_1 = arith.constant 0 : i32
    return %c0_i32, %c0_i32_0 : i32, i32
  }
  func.func @transform_14(%arg0: i32) -> (i32, i32) {
    %c0_i32 = arith.constant 0 : i32
    %c0_i32_0 = arith.constant 0 : i32
    %c0_i32_1 = arith.constant 0 : i32
    return %c0_i32, %c0_i32_0 : i32, i32
  }
  func.func @transform_15(%arg0: i32) -> (i32, i32) {
    %c0_i32 = arith.constant 0 : i32
    %c0_i32_0 = arith.constant 0 : i32
    %c0_i32_1 = arith.constant 0 : i32
    return %c0_i32, %c0_i32_0 : i32, i32
  }
  func.func @transform_16(%arg0: i32) -> (i32, i32, i32) {
    %c0_i32 = arith.constant 0 : i32
    %c0_i32_0 = arith.constant 0 : i32
    %c0_i32_1 = arith.constant 0 : i32
    return %arg0, %c0_i32, %c0_i32_0 : i32, i32, i32
  }
}

</mosaic_0001>

<llo_original>
// kernel: tpu_custom_call.1
$region0: #{tpu_custom_call.1}
  #allocation0 [shape = 'u32[]', space=smem, size = 0x4, offset = 0x4, fixed_abs, tag = 'smem constant byte address 0x4 - core index']
  #allocation1 [shape = 'u32[144,128]{1,0:T(1,128)}', space=vmem, size = 0x12000, scoped, tag = 'internal scratch']
  %s0 = inlined_call_operand.vmem [shape: f32[2,64,4], index: 0, kind: input, shape index: {}]
  %s1 = inlined_call_operand.vmem [shape: f32[4,64], index: 1, kind: input, shape index: {}]
  %s2 = inlined_call_operand.vmem [shape: f32[1,64], index: 2, kind: input, shape index: {}]
  %s3 = inlined_call_operand.vmem [shape: f32[24,64], index: 3, kind: input, shape index: {}]
  %s4 = inlined_call_operand.vmem [shape: bf16[2,2,3,64,64], index: 4, kind: input, shape index: {}]
  %s5 = inlined_call_operand.vmem [shape: f32[2,2,3,64], index: 5, kind: input, shape index: {}]
  %s6 = inlined_call_operand.hbm [shape: bf16[2,2,64,64], index: 6, kind: input, shape index: {}]
  %s7 = inlined_call_operand.vmem [shape: f32[2,2,64], index: 7, kind: input, shape index: {}]
  %s8 = inlined_call_operand.vmem [shape: f32[2,3,64], index: 8, kind: input, shape index: {}]
  %s9 = inlined_call_operand.vmem [shape: f32[2,3,64], index: 9, kind: input, shape index: {}]
  %s10 = inlined_call_operand.hbm [shape: bf16[2,64,256], index: 10, kind: input, shape index: {}]
  %s11 = inlined_call_operand.vmem [shape: f32[2,256], index: 11, kind: input, shape index: {}]
  %s12 = inlined_call_operand.vmem [shape: bf16[2,256,64], index: 12, kind: input, shape index: {}]
  %s13 = inlined_call_operand.vmem [shape: f32[2,64], index: 13, kind: input, shape index: {}]
  %s14 = inlined_call_operand.vmem [shape: bf16[64,128], index: 14, kind: input, shape index: {}]
  %s15 = inlined_call_operand.vmem [shape: f32[1,128], index: 15, kind: input, shape index: {}]
  %s16 = inlined_call_operand.hbm [shape: f32[2,24,128], index: 16, kind: output, shape index: {}]
  %s17 = sld [smem:[#allocation0]]
  $region105: #{tpu_custom_call.1} parent=0
    _
  %s19 = ssub.s32 1, %s17
  %s20 = scalar_select 0, %s19, %s17
  $region1: #{tpu_custom_call.1} parent=0
    #allocation2 [shape = 'u8[65536]{0}', space=vmem, size = 0x10000, scoped, tag = 'input window, operand 6, single buffered']
    #allocation3 [shape = 's32[2]{0}', space=sflag, size = 0x8, scoped, tag = 'scoped memory for tpu_custom_call.1']
    #allocation4 [shape = 's32[2]{0}', space=sflag, size = 0x8, scoped, tag = 'scoped memory for tpu_custom_call.1']
    #allocation5 [shape = 'u8[65536]{0}', space=vmem, size = 0x10000, scoped, tag = 'input window, operand 10, single buffered']
    #allocation6 [shape = 's32[1]{0}', space=sflag, size = 0x4, scoped, tag = 'scoped memory for tpu_custom_call.1']
    #allocation7 [shape = 'u8[24576]{0}', space=vmem, size = 0x6000, scoped, tag = 'output window, operand 0']
    %21 = vsyncpa [#allocation3], 0
    %22 = vsyncpa [#allocation6], 0
    %23 = vsyncpa [#allocation4], 0
    %s24 = scalar_lea.sflag [#allocation4], 1
    %25 = vsyncpa %s24, 0
    loop: start=0, step=1, limit=4
    $region2: #{tpu_custom_call.1} parent=1 // loop_pre_header
      _
    $region3: #{tpu_custom_call.1} parent=1 // loop_header
      %s27 = sphi 0, %s31
      %p28 = scmp.ge.s32.totalorder %s27, 4
      %s37 = sphi 0, %s39
      %s40 = sphi 0, %s37
      %s41 = sphi 0, %s40
      %s57 = sphi 0, %s41
      %s61 = sphi 0, %s61
      %s63 = sphi 0, %s61
      %s64 = sphi 0, %s63
      %s78 = sphi 0, %s64
      %s82 = sphi 0, %s82
      %s84 = sphi 0, %s82
      %s85 = sphi 0, %s84
      %s99 = sphi 0, %s85
      %s103 = sphi 0, %s103
      %s105 = sphi 0, %s103
      %s106 = sphi 0, %s105
      %s120 = sphi 0, %s106
      %s124 = sphi 0, %s124
      %s126 = sphi 0, %s124
      %s127 = sphi 0, %s126
      %s141 = sphi 0, %s127
      %s145 = sphi 0, %s145
      %s147 = sphi 0, %s145
      %s148 = sphi 0, %s147
      %s162 = sphi 0, %s148
      %s166 = sphi 0, %s166
      %s168 = sphi 0, %s166
      %s169 = sphi 0, %s168
      %s183 = sphi 0, %s169
      %s187 = sphi 0, %s187
      %s189 = sphi 0, %s187
      %s190 = sphi 0, %s189
      %s204 = sphi 0, %s190
      %s208 = sphi 0, %s208
      %s210 = sphi 0, %s208
      %s211 = sphi 0, %s210
      %s225 = sphi 0, %s211
      %s229 = sphi 0, %s229
      %s231 = sphi 0, %s229
      %s232 = sphi 0, %s231
      %s246 = sphi 0, %s232
      %s250 = sphi 0, %s250
      %s252 = sphi 0, %s250
      %s253 = sphi 0, %s252
      %s267 = sphi 0, %s253
      %s271 = sphi 0, %s271
      %s273 = sphi 0, %s271
      %s274 = sphi 0, %s273
      %s288 = sphi 0, %s274
      %s292 = sphi 0, %s292
      %s294 = sphi 0, %s292
      %s295 = sphi 0, %s294
      %s309 = sphi 0, %s295
      %s313 = sphi 0, %s313
      %s315 = sphi 0, %s313
      %s316 = sphi 0, %s315
      %s330 = sphi 0, %s316
      %s334 = sphi 0, %s334
      %s336 = sphi 0, %s334
      %s337 = sphi 0, %s336
      %s351 = sphi 0, %s337
      %s355 = sphi 0, %s355
      %s357 = sphi 0, %s355
      %s358 = sphi 0, %s357
      %s372 = sphi 0, %s358
      %s378 = sphi 0, %s380
      %s381 = sphi 0, %s378
      %s382 = sphi 0, %s381
      %s398 = sphi 0, %s382
    $region4: #{tpu_custom_call.1} parent=1 // loop_header_branch
      %30 = sbr.rel (%p28) target = $region8
    $region5: #{tpu_custom_call.1} parent=1 // loop_body
      %s32 = ssub.s32 %s27, 1
      %s33 = ssub.s32 %s27, 2
      %s34 = sadd.s32 %s27, 1
      %s35 = ssub.s32 %s27, %s34
      %p36 = scmp.eq.s32.totalorder %s35, 0
      %s38 = sadd.s32 %s37, 1
      %s39 = scalar_select %p36, %s37, %s38
      %p42 = pneg %p36
      %p43 = scmp.eq.s32.totalorder %s27, 1
      %p44 = por %p42, %p43
      %p45 = scmp.ne.s32.totalorder %s37, %s40
      %p46 = scmp.eq.s32.totalorder %s27, 0
      %p47 = por %p45, %p46
      %p48 = scmp.ne.s32.totalorder %s37, %s40
      %p49 = scmp.eq.s32.totalorder %s32, 1
      %p50 = por %p48, %p49
      %p51 = scmp.ne.s32.totalorder %s40, %s41
      %p52 = scmp.eq.s32.totalorder %s32, 0
      %p53 = por %p51, %p52
      %p54 = scmp.ne.s32.totalorder %s40, %s41
      %p55 = scmp.eq.s32.totalorder %s33, 1
      %p56 = por %p54, %p55
      %p58 = scmp.ne.s32.totalorder %s41, %s57
      %p59 = scmp.eq.s32.totalorder %s33, 0
      %p60 = por %p58, %p59
      %s62 = sadd.s32 %s61, 1
      %p65 = scmp.eq.s32.totalorder %s27, 1
      %p66 = scmp.ne.s32.totalorder %s61, %s63
      %p67 = scmp.eq.s32.totalorder %s27, 0
      %p68 = por %p66, %p67
      %p69 = scmp.ne.s32.totalorder %s61, %s63
      %p70 = scmp.eq.s32.totalorder %s32, 1
      %p71 = por %p69, %p70
      %p72 = scmp.ne.s32.totalorder %s63, %s64
      %p73 = scmp.eq.s32.totalorder %s32, 0
      %p74 = por %p72, %p73
      %p75 = scmp.ne.s32.totalorder %s63, %s64
      %p76 = scmp.eq.s32.totalorder %s33, 1
      %p77 = por %p75, %p76
      %p79 = scmp.ne.s32.totalorder %s64, %s78
      %p80 = scmp.eq.s32.totalorder %s33, 0
      %p81 = por %p79, %p80
      %s83 = sadd.s32 %s82, 1
      %p86 = scmp.eq.s32.totalorder %s27, 1
      %p87 = scmp.ne.s32.totalorder %s82, %s84
      %p88 = scmp.eq.s32.totalorder %s27, 0
      %p89 = por %p87, %p88
      %p90 = scmp.ne.s32.totalorder %s82, %s84
      %p91 = scmp.eq.s32.totalorder %s32, 1
      %p92 = por %p90, %p91
      %p93 = scmp.ne.s32.totalorder %s84, %s85
      %p94 = scmp.eq.s32.totalorder %s32, 0
      %p95 = por %p93, %p94
      %p96 = scmp.ne.s32.totalorder %s84, %s85
      %p97 = scmp.eq.s32.totalorder %s33, 1
      %p98 = por %p96, %p97
      %p100 = scmp.ne.s32.totalorder %s85, %s99
      %p101 = scmp.eq.s32.totalorder %s33, 0
      %p102 = por %p100, %p101
      %s104 = sadd.s32 %s103, 1
      %p107 = scmp.eq.s32.totalorder %s27, 1
      %p108 = scmp.ne.s32.totalorder %s103, %s105
      %p109 = scmp.eq.s32.totalorder %s27, 0
      %p110 = por %p108, %p109
      %p111 = scmp.ne.s32.totalorder %s103, %s105
      %p112 = scmp.eq.s32.totalorder %s32, 1
      %p113 = por %p111, %p112
      %p114 = scmp.ne.s32.totalorder %s105, %s106
      %p115 = scmp.eq.s32.totalorder %s32, 0
      %p116 = por %p114, %p115
      %p117 = scmp.ne.s32.totalorder %s105, %s106
      %p118 = scmp.eq.s32.totalorder %s33, 1
      %p119 = por %p117, %p118
      %p121 = scmp.ne.s32.totalorder %s106, %s120
      %p122 = scmp.eq.s32.totalorder %s33, 0
      %p123 = por %p121, %p122
      %s125 = sadd.s32 %s124, 1
      %p128 = scmp.eq.s32.totalorder %s27, 1
      %p129 = scmp.ne.s32.totalorder %s124, %s126
      %p130 = scmp.eq.s32.totalorder %s27, 0
      %p131 = por %p129, %p130
      %p132 = scmp.ne.s32.totalorder %s124, %s126
      %p133 = scmp.eq.s32.totalorder %s32, 1
      %p134 = por %p132, %p133
      %p135 = scmp.ne.s32.totalorder %s126, %s127
      %p136 = scmp.eq.s32.totalorder %s32, 0
      %p137 = por %p135, %p136
      %p138 = scmp.ne.s32.totalorder %s126, %s127
      %p139 = scmp.eq.s32.totalorder %s33, 1
      %p140 = por %p138, %p139
      %p142 = scmp.ne.s32.totalorder %s127, %s141
      %p143 = scmp.eq.s32.totalorder %s33, 0
      %p144 = por %p142, %p143
      %s146 = sadd.s32 %s145, 1
      %p149 = scmp.eq.s32.totalorder %s27, 1
      %p150 = scmp.ne.s32.totalorder %s145, %s147
      %p151 = scmp.eq.s32.totalorder %s27, 0
      %p152 = por %p150, %p151
      %p153 = scmp.ne.s32.totalorder %s145, %s147
      %p154 = scmp.eq.s32.totalorder %s32, 1
      %p155 = por %p153, %p154
      %p156 = scmp.ne.s32.totalorder %s147, %s148
      %p157 = scmp.eq.s32.totalorder %s32, 0
      %p158 = por %p156, %p157
      %p159 = scmp.ne.s32.totalorder %s147, %s148
      %p160 = scmp.eq.s32.totalorder %s33, 1
      %p161 = por %p159, %p160
      %p163 = scmp.ne.s32.totalorder %s148, %s162
      %p164 = scmp.eq.s32.totalorder %s33, 0
      %p165 = por %p163, %p164
      %s167 = sadd.s32 %s166, 1
      %p170 = scmp.eq.s32.totalorder %s27, 1
      %p171 = scmp.ne.s32.totalorder %s166, %s168
      %p172 = scmp.eq.s32.totalorder %s27, 0
      %p173 = por %p171, %p172
      %p174 = scmp.ne.s32.totalorder %s166, %s168
      %p175 = scmp.eq.s32.totalorder %s32, 1
      %p176 = por %p174, %p175
      %p177 = scmp.ne.s32.totalorder %s168, %s169
      %p178 = scmp.eq.s32.totalorder %s32, 0
      %p179 = por %p177, %p178
      %p180 = scmp.ne.s32.totalorder %s168, %s169
      %p181 = scmp.eq.s32.totalorder %s33, 1
      %p182 = por %p180, %p181
      %p184 = scmp.ne.s32.totalorder %s169, %s183
      %p185 = scmp.eq.s32.totalorder %s33, 0
      %p186 = por %p184, %p185
      %s188 = sadd.s32 %s187, 1
      %p191 = scmp.eq.s32.totalorder %s27, 1
      %p192 = scmp.ne.s32.totalorder %s187, %s189
      %p193 = scmp.eq.s32.totalorder %s27, 0
      %p194 = por %p192, %p193
      %p195 = scmp.ne.s32.totalorder %s187, %s189
      %p196 = scmp.eq.s32.totalorder %s32, 1
      %p197 = por %p195, %p196
      %p198 = scmp.ne.s32.totalorder %s189, %s190
      %p199 = scmp.eq.s32.totalorder %s32, 0
      %p200 = por %p198, %p199
      %p201 = scmp.ne.s32.totalorder %s189, %s190
      %p202 = scmp.eq.s32.totalorder %s33, 1
      %p203 = por %p201, %p202
      %p205 = scmp.ne.s32.totalorder %s190, %s204
      %p206 = scmp.eq.s32.totalorder %s33, 0
      %p207 = por %p205, %p206
      %s209 = sadd.s32 %s208, 1
      %p212 = scmp.eq.s32.totalorder %s27, 1
      %p213 = scmp.ne.s32.totalorder %s208, %s210
      %p214 = scmp.eq.s32.totalorder %s27, 0
      %p215 = por %p213, %p214
      %p216 = scmp.ne.s32.totalorder %s208, %s210
      %p217 = scmp.eq.s32.totalorder %s32, 1
      %p218 = por %p216, %p217
      %p219 = scmp.ne.s32.totalorder %s210, %s211
      %p220 = scmp.eq.s32.totalorder %s32, 0
      %p221 = por %p219, %p220
      %p222 = scmp.ne.s32.totalorder %s210, %s211
      %p223 = scmp.eq.s32.totalorder %s33, 1
      %p224 = por %p222, %p223
      %p226 = scmp.ne.s32.totalorder %s211, %s225
      %p227 = scmp.eq.s32.totalorder %s33, 0
      %p228 = por %p226, %p227
      %s230 = sadd.s32 %s229, 1
      %p233 = scmp.eq.s32.totalorder %s27, 1
      %p234 = scmp.ne.s32.totalorder %s229, %s231
      %p235 = scmp.eq.s32.totalorder %s27, 0
      %p236 = por %p234, %p235
      %p237 = scmp.ne.s32.totalorder %s229, %s231
      %p238 = scmp.eq.s32.totalorder %s32, 1
      %p239 = por %p237, %p238
      %p240 = scmp.ne.s32.totalorder %s231, %s232
      %p241 = scmp.eq.s32.totalorder %s32, 0
      %p242 = por %p240, %p241
      %p243 = scmp.ne.s32.totalorder %s231, %s232
      %p244 = scmp.eq.s32.totalorder %s33, 1
      %p245 = por %p243, %p244
      %p247 = scmp.ne.s32.totalorder %s232, %s246
      %p248 = scmp.eq.s32.totalorder %s33, 0
      %p249 = por %p247, %p248
      %s251 = sadd.s32 %s250, 1
      %p254 = scmp.eq.s32.totalorder %s27, 1
      %p255 = scmp.ne.s32.totalorder %s250, %s252
      %p256 = scmp.eq.s32.totalorder %s27, 0
      %p257 = por %p255, %p256
      %p258 = scmp.ne.s32.totalorder %s250, %s252
      %p259 = scmp.eq.s32.totalorder %s32, 1
      %p260 = por %p258, %p259
      %p261 = scmp.ne.s32.totalorder %s252, %s253
      %p262 = scmp.eq.s32.totalorder %s32, 0
      %p263 = por %p261, %p262
      %p264 = scmp.ne.s32.totalorder %s252, %s253
      %p265 = scmp.eq.s32.totalorder %s33, 1
      %p266 = por %p264, %p265
      %p268 = scmp.ne.s32.totalorder %s253, %s267
      %p269 = scmp.eq.s32.totalorder %s33, 0
      %p270 = por %p268, %p269
      %s272 = sadd.s32 %s271, 1
      %p275 = scmp.eq.s32.totalorder %s27, 1
      %p276 = scmp.ne.s32.totalorder %s271, %s273
      %p277 = scmp.eq.s32.totalorder %s27, 0
      %p278 = por %p276, %p277
      %p279 = scmp.ne.s32.totalorder %s271, %s273
      %p280 = scmp.eq.s32.totalorder %s32, 1
      %p281 = por %p279, %p280
      %p282 = scmp.ne.s32.totalorder %s273, %s274
      %p283 = scmp.eq.s32.totalorder %s32, 0
      %p284 = por %p282, %p283
      %p285 = scmp.ne.s32.totalorder %s273, %s274
      %p286 = scmp.eq.s32.totalorder %s33, 1
      %p287 = por %p285, %p286
      %p289 = scmp.ne.s32.totalorder %s274, %s288
      %p290 = scmp.eq.s32.totalorder %s33, 0
      %p291 = por %p289, %p290
      %s293 = sadd.s32 %s292, 1
      %p296 = scmp.eq.s32.totalorder %s27, 1
      %p297 = scmp.ne.s32.totalorder %s292, %s294
      %p298 = scmp.eq.s32.totalorder %s27, 0
      %p299 = por %p297, %p298
      %p300 = scmp.ne.s32.totalorder %s292, %s294
      %p301 = scmp.eq.s32.totalorder %s32, 1
      %p302 = por %p300, %p301
      %p303 = scmp.ne.s32.totalorder %s294, %s295
      %p304 = scmp.eq.s32.totalorder %s32, 0
      %p305 = por %p303, %p304
      %p306 = scmp.ne.s32.totalorder %s294, %s295
      %p307 = scmp.eq.s32.totalorder %s33, 1
      %p308 = por %p306, %p307
      %p310 = scmp.ne.s32.totalorder %s295, %s309
      %p311 = scmp.eq.s32.totalorder %s33, 0
      %p312 = por %p310, %p311
      %s314 = sadd.s32 %s313, 1
      %p317 = scmp.eq.s32.totalorder %s27, 1
      %p318 = scmp.ne.s32.totalorder %s313, %s315
      %p319 = scmp.eq.s32.totalorder %s27, 0
      %p320 = por %p318, %p319
      %p321 = scmp.ne.s32.totalorder %s313, %s315
      %p322 = scmp.eq.s32.totalorder %s32, 1
      %p323 = por %p321, %p322
      %p324 = scmp.ne.s32.totalorder %s315, %s316
      %p325 = scmp.eq.s32.totalorder %s32, 0
      %p326 = por %p324, %p325
      %p327 = scmp.ne.s32.totalorder %s315, %s316
      %p328 = scmp.eq.s32.totalorder %s33, 1
      %p329 = por %p327, %p328
      %p331 = scmp.ne.s32.totalorder %s316, %s330
      %p332 = scmp.eq.s32.totalorder %s33, 0
      %p333 = por %p331, %p332
      %s335 = sadd.s32 %s334, 1
      %p338 = scmp.eq.s32.totalorder %s27, 1
      %p339 = scmp.ne.s32.totalorder %s334, %s336
      %p340 = scmp.eq.s32.totalorder %s27, 0
      %p341 = por %p339, %p340
      %p342 = scmp.ne.s32.totalorder %s334, %s336
      %p343 = scmp.eq.s32.totalorder %s32, 1
      %p344 = por %p342, %p343
      %p345 = scmp.ne.s32.totalorder %s336, %s337
      %p346 = scmp.eq.s32.totalorder %s32, 0
      %p347 = por %p345, %p346
      %p348 = scmp.ne.s32.totalorder %s336, %s337
      %p349 = scmp.eq.s32.totalorder %s33, 1
      %p350 = por %p348, %p349
      %p352 = scmp.ne.s32.totalorder %s337, %s351
      %p353 = scmp.eq.s32.totalorder %s33, 0
      %p354 = por %p352, %p353
      %s356 = sadd.s32 %s355, 1
      %p359 = scmp.eq.s32.totalorder %s27, 1
      %p360 = scmp.ne.s32.totalorder %s355, %s357
      %p361 = scmp.eq.s32.totalorder %s27, 0
      %p362 = por %p360, %p361
      %p363 = scmp.ne.s32.totalorder %s355, %s357
      %p364 = scmp.eq.s32.totalorder %s32, 1
      %p365 = por %p363, %p364
      %p366 = scmp.ne.s32.totalorder %s357, %s358
      %p367 = scmp.eq.s32.totalorder %s32, 0
      %p368 = por %p366, %p367
      %p369 = scmp.ne.s32.totalorder %s357, %s358
      %p370 = scmp.eq.s32.totalorder %s33, 1
      %p371 = por %p369, %p370
      %p373 = scmp.ne.s32.totalorder %s358, %s372
      %p374 = scmp.eq.s32.totalorder %s33, 0
      %p375 = por %p373, %p374
      %s376 = ssub.s32 %s27, %s34
      %p377 = scmp.eq.s32.totalorder %s376, 0
      %s379 = sadd.s32 %s378, 1
      %s380 = scalar_select %p377, %s378, %s379
      %p383 = pneg %p377
      %p384 = scmp.eq.s32.totalorder %s27, 1
      %p385 = por %p383, %p384
      %p386 = scmp.ne.s32.totalorder %s378, %s381
      %p387 = scmp.eq.s32.totalorder %s27, 0
      %p388 = por %p386, %p387
      %p389 = scmp.ne.s32.totalorder %s378, %s381
      %p390 = scmp.eq.s32.totalorder %s32, 1
      %p391 = por %p389, %p390
      %p392 = scmp.ne.s32.totalorder %s381, %s382
      %p393 = scmp.eq.s32.totalorder %s32, 0
      %p394 = por %p392, %p393
      %p395 = scmp.ne.s32.totalorder %s381, %s382
      %p396 = scmp.eq.s32.totalorder %s33, 1
      %p397 = por %p395, %p396
      %p399 = scmp.ne.s32.totalorder %s382, %s398
      %p400 = scmp.eq.s32.totalorder %s33, 0
      %p401 = por %p399, %p400
      %p402 = scmp.le.s32.totalorder 1, %s27
      %p403 = scmp.lt.s32.totalorder %s27, 3
      %p404 = pnand %p402, %p403
      %p405 = pneg %p404
      // Predicated region
      $region9: #{tpu_custom_call.1} parent=5 // pred_check
        _
      $region10: #{tpu_custom_call.1} parent=5 // pred_check_branch
        %407 = sbr.rel (%p404) target = $region12
      $region11: #{tpu_custom_call.1} parent=5 // pred_region
        %s408 = ssub.s32 %s27, 1
        // Predicated region
        $region13: #{tpu_custom_call.1} parent=11 // pred_check
          %p409 = pneg %p74
        $region14: #{tpu_custom_call.1} parent=11 // pred_check_branch
          %411 = sbr.rel (%p409) target = $region16
        $region15: #{tpu_custom_call.1} parent=11 // pred_region
          _
        $region16: #{tpu_custom_call.1} parent=11 // pred_fallthru
          _
        // Predicated region
        $region17: #{tpu_custom_call.1} parent=11 // pred_check
          %p412 = pneg %p95
        $region18: #{tpu_custom_call.1} parent=11 // pred_check_branch
          %414 = sbr.rel (%p412) target = $region20
        $region19: #{tpu_custom_call.1} parent=11 // pred_region
          _
        $region20: #{tpu_custom_call.1} parent=11 // pred_fallthru
          _
        // Predicated region
        $region21: #{tpu_custom_call.1} parent=11 // pred_check
          %p415 = pneg %p116
        $region22: #{tpu_custom_call.1} parent=11 // pred_check_branch
          %417 = sbr.rel (%p415) target = $region24
        $region23: #{tpu_custom_call.1} parent=11 // pred_region
          _
        $region24: #{tpu_custom_call.1} parent=11 // pred_fallthru
          _
        // Predicated region
        $region25: #{tpu_custom_call.1} parent=11 // pred_check
          %p418 = pneg %p137
        $region26: #{tpu_custom_call.1} parent=11 // pred_check_branch
          %420 = sbr.rel (%p418) target = $region28
        $region27: #{tpu_custom_call.1} parent=11 // pred_region
          _
        $region28: #{tpu_custom_call.1} parent=11 // pred_fallthru
          _
        // Predicated region
        $region29: #{tpu_custom_call.1} parent=11 // pred_check
          %p421 = pneg %p158
        $region30: #{tpu_custom_call.1} parent=11 // pred_check_branch
          %423 = sbr.rel (%p421) target = $region32
        $region31: #{tpu_custom_call.1} parent=11 // pred_region
          _
        $region32: #{tpu_custom_call.1} parent=11 // pred_fallthru
          _
        // Predicated region
        $region33: #{tpu_custom_call.1} parent=11 // pred_check
          %p424 = pneg %p179
        $region34: #{tpu_custom_call.1} parent=11 // pred_check_branch
          %426 = sbr.rel (%p424) target = $region36
        $region35: #{tpu_custom_call.1} parent=11 // pred_region
          %s428 = ssub.s32 2048, 2048
          %429 = vsyncadd [#allocation3], %s428
          %s430 = sshll.u32 [#allocation2], 4
          %s431 = int_to_ptr.vmem [resolvable:$true] %s430
          %436 = dma.hbm_to_vmem [thread:$0]  %s6, 2048, %s431, [#allocation3], 64, 64, 4
        $region36: #{tpu_custom_call.1} parent=11 // pred_fallthru
          _
        // Predicated region
        $region37: #{tpu_custom_call.1} parent=11 // pred_check
          %p437 = pneg %p200
        $region38: #{tpu_custom_call.1} parent=11 // pred_check_branch
          %439 = sbr.rel (%p437) target = $region40
        $region39: #{tpu_custom_call.1} parent=11 // pred_region
          _
        $region40: #{tpu_custom_call.1} parent=11 // pred_fallthru
          _
        // Predicated region
        $region41: #{tpu_custom_call.1} parent=11 // pred_check
          %p440 = pneg %p221
        $region42: #{tpu_custom_call.1} parent=11 // pred_check_branch
          %442 = sbr.rel (%p440) target = $region44
        $region43: #{tpu_custom_call.1} parent=11 // pred_region
          _
        $region44: #{tpu_custom_call.1} parent=11 // pred_fallthru
          _
        // Predicated region
        $region45: #{tpu_custom_call.1} parent=11 // pred_check
          %p443 = pneg %p242
        $region46: #{tpu_custom_call.1} parent=11 // pred_check_branch
          %445 = sbr.rel (%p443) target = $region48
        $region47: #{tpu_custom_call.1} parent=11 // pred_region
          _
        $region48: #{tpu_custom_call.1} parent=11 // pred_fallthru
          _
        // Predicated region
        $region49: #{tpu_custom_call.1} parent=11 // pred_check
          %p446 = pneg %p263
        $region50: #{tpu_custom_call.1} parent=11 // pred_check_branch
          %448 = sbr.rel (%p446) target = $region52
        $region51: #{tpu_custom_call.1} parent=11 // pred_region
          %s450 = ssub.s32 2048, 2048
          %451 = vsyncadd [#allocation6], %s450
          %s452 = sshll.u32 [#allocation5], 4
          %s453 = int_to_ptr.vmem [resolvable:$true] %s452
          %458 = dma.hbm_to_vmem [thread:$0]  %s10, 2048, %s453, [#allocation6], 128, 128, 8
        $region52: #{tpu_custom_call.1} parent=11 // pred_fallthru
          _
        // Predicated region
        $region53: #{tpu_custom_call.1} parent=11 // pred_check
          %p459 = pneg %p284
        $region54: #{tpu_custom_call.1} parent=11 // pred_check_branch
          %461 = sbr.rel (%p459) target = $region56
        $region55: #{tpu_custom_call.1} parent=11 // pred_region
          _
        $region56: #{tpu_custom_call.1} parent=11 // pred_fallthru
          _
        // Predicated region
        $region57: #{tpu_custom_call.1} parent=11 // pred_check
          %p462 = pneg %p305
        $region58: #{tpu_custom_call.1} parent=11 // pred_check_branch
          %464 = sbr.rel (%p462) target = $region60
        $region59: #{tpu_custom_call.1} parent=11 // pred_region
          _
        $region60: #{tpu_custom_call.1} parent=11 // pred_fallthru
          _
        // Predicated region
        $region61: #{tpu_custom_call.1} parent=11 // pred_check
          %p465 = pneg %p326
        $region62: #{tpu_custom_call.1} parent=11 // pred_check_branch
          %467 = sbr.rel (%p465) target = $region64
        $region63: #{tpu_custom_call.1} parent=11 // pred_region
          _
        $region64: #{tpu_custom_call.1} parent=11 // pred_fallthru
          _
        // Predicated region
        $region65: #{tpu_custom_call.1} parent=11 // pred_check
          %p468 = pneg %p347
        $region66: #{tpu_custom_call.1} parent=11 // pred_check_branch
          %470 = sbr.rel (%p468) target = $region68
        $region67: #{tpu_custom_call.1} parent=11 // pred_region
          _
        $region68: #{tpu_custom_call.1} parent=11 // pred_fallthru
          _
        // Predicated region
        $region69: #{tpu_custom_call.1} parent=11 // pred_check
          %p471 = pneg %p368
        $region70: #{tpu_custom_call.1} parent=11 // pred_check_branch
          %473 = sbr.rel (%p471) target = $region72
        $region71: #{tpu_custom_call.1} parent=11 // pred_region
          _
        $region72: #{tpu_custom_call.1} parent=11 // pred_fallthru
          _
      $region12: #{tpu_custom_call.1} parent=5 // pred_fallthru
        _
      %p474 = scmp.lt.s32.totalorder %s27, 2
      // Predicated region
      $region73: #{tpu_custom_call.1} parent=5 // pred_check
        %p475 = pneg %p474
      $region74: #{tpu_custom_call.1} parent=5 // pred_check_branch
        %477 = sbr.rel (%p475) target = $region76
      $region75: #{tpu_custom_call.1} parent=5 // pred_region
        // Predicated region
        $region77: #{tpu_custom_call.1} parent=75 // pred_check
          %p478 = pneg %p47
        $region78: #{tpu_custom_call.1} parent=75 // pred_check_branch
          %480 = sbr.rel (%p478) target = $region80
        $region79: #{tpu_custom_call.1} parent=75 // pred_region
          %p481 = scmp.lt.s32.totalorder %s27, 1
          %s482 = scalar_select %p481, %s27, 1
          %s483 = smul.addr %s482, 8
          %s484 = smul.addr %s483, 8
          %s485 = scalar_lea.vmem %s0, %s484
        $region80: #{tpu_custom_call.1} parent=75 // pred_fallthru
          _
      $region76: #{tpu_custom_call.1} parent=5 // pred_fallthru
        _
      %p486 = scmp.le.s32.totalorder 1, %s27
      %p487 = scmp.lt.s32.totalorder %s27, 3
      %p488 = pnand %p486, %p487
      %p489 = pneg %p488
      // Predicated region
      $region81: #{tpu_custom_call.1} parent=5 // pred_check
        _
      $region82: #{tpu_custom_call.1} parent=5 // pred_check_branch
        %491 = sbr.rel (%p488) target = $region84
      $region83: #{tpu_custom_call.1} parent=5 // pred_region
        %s492 = ssub.s32 %s27, 1
        // Predicated region
        $region85: #{tpu_custom_call.1} parent=83 // pred_check
          %p493 = pneg %p179
        $region86: #{tpu_custom_call.1} parent=83 // pred_check_branch
          %495 = sbr.rel (%p493) target = $region88
        $region87: #{tpu_custom_call.1} parent=83 // pred_region
          %496 = dma.done [#allocation3], 2048
        $region88: #{tpu_custom_call.1} parent=83 // pred_fallthru
          _
        // Predicated region
        $region89: #{tpu_custom_call.1} parent=83 // pred_check
          %p497 = pneg %p263
        $region90: #{tpu_custom_call.1} parent=83 // pred_check_branch
          %499 = sbr.rel (%p497) target = $region92
        $region91: #{tpu_custom_call.1} parent=83 // pred_region
          %500 = dma.done [#allocation6], 2048
        $region92: #{tpu_custom_call.1} parent=83 // pred_fallthru
          _
        %p501 = scmp.lt.s32.totalorder %s32, 1
        %s502 = scalar_select %p501, %s32, 1
        %s503 = smul.addr %s502, 8
        %s504 = smul.addr %s503, 8
        %s505 = scalar_lea.vmem %s0, %s504
        %p506 = pneg %p53
        %p507 = pneg %p50
        %p508 = pneg %p74
        %p509 = pneg %p71
        %p510 = pneg %p95
        %p511 = pneg %p92
        %p512 = pneg %p116
        %p513 = pneg %p113
        %p514 = pneg %p137
        %p515 = pneg %p134
        %p516 = pneg %p158
        %p517 = pneg %p155
        %p518 = pneg %p179
        %p519 = pneg %p176
        %p520 = pneg %p200
        %p521 = pneg %p197
        %p522 = pneg %p221
        %p523 = pneg %p218
        %p524 = pneg %p242
        %p525 = pneg %p239
        %p526 = pneg %p263
        %p527 = pneg %p260
        %p528 = pneg %p284
        %p529 = pneg %p281
        %p530 = pneg %p305
        %p531 = pneg %p302
        %p532 = pneg %p326
        %p533 = pneg %p323
        %p534 = pneg %p347
        %p535 = pneg %p344
        %p536 = pneg %p368
        %p537 = pneg %p365
        %p538 = pneg %p394
        %p539 = pneg %p391
        %s540 = sand.u32 %s381, 1
        %s541 = scalar_lea.sflag [#allocation4], %s540
        %s542 = sand.u32 %s381, 1
        %s543 = smul.addr %s542, 24
        %s544 = scalar_lea.vmem [#allocation7], %s543
        %p545 = scmp.lt.s32.totalorder %s32, 1
        %s546 = scalar_select %p545, %s32, 1
        %s547 = smul.addr %s546, 8
        %s548 = smul.addr %s547, 8
        %s549 = scalar_lea.vmem %s0, %s548
        %v551 = vld [vmem:[%s549] sm:$0xff]
        %v552 = vld [vmem:[%s549 + $0x8] sm:$0xff]
        %v553 = vld [vmem:[%s549 + $0x10] sm:$0xff]
        %v554 = vld [vmem:[%s549 + $0x18] sm:$0xff]
        %v555 = vld [vmem:[%s549 + $0x20] sm:$0xff]
        %v556 = vld [vmem:[%s549 + $0x28] sm:$0xff]
        %v557 = vld [vmem:[%s549 + $0x30] sm:$0xff]
        %v558 = vld [vmem:[%s549 + $0x38] sm:$0xff]
        %v559 = vld [vmem:[%s1] sm:$0xf]
        %v560 = vld [vmem:[%s2] sm:$0x1]
        %562 = vset.pattern.permute.xlu0 0
        %563 = vperm.xlu0 %562, %v551
        %v564 = vpop.permute.xlu0 %563
        %567 = vset.pattern.permute.xlu0 0
        %568 = vperm.xlu0 %567, %v552
        %v569 = vpop.permute.xlu0 %568
        %572 = vset.pattern.permute.xlu0 0
        %573 = vperm.xlu0 %572, %v553
        %v574 = vpop.permute.xlu0 %573
        %577 = vset.pattern.permute.xlu0 0
        %578 = vperm.xlu0 %577, %v554
        %v579 = vpop.permute.xlu0 %578
        %582 = vset.pattern.permute.xlu0 0
        %583 = vperm.xlu0 %582, %v555
        %v584 = vpop.permute.xlu0 %583
        %587 = vset.pattern.permute.xlu0 0
        %588 = vperm.xlu0 %587, %v556
        %v589 = vpop.permute.xlu0 %588
        %592 = vset.pattern.permute.xlu0 0
        %593 = vperm.xlu0 %592, %v557
        %v594 = vpop.permute.xlu0 %593
        %597 = vset.pattern.permute.xlu0 0
        %598 = vperm.xlu0 %597, %v558
        %v599 = vpop.permute.xlu0 %598
        %v601 = vlaneseq
        %v602 = vshrl.u32 %v601, 7
        %v603 = vsub.s32 0, %v602
        %v604 = vrot.slane %v559, %v603
        %v605 = vmul.f32 %v564, %v604
        %v606 = vmul.f32 %v569, %v604
        %v607 = vmul.f32 %v574, %v604
        %v608 = vmul.f32 %v579, %v604
        %v609 = vmul.f32 %v584, %v604
        %v610 = vmul.f32 %v589, %v604
        %v611 = vmul.f32 %v594, %v604
        %v612 = vmul.f32 %v599, %v604
        %v614 = vlaneseq
        %v615 = vshrl.u32 %v614, 7
        %v616 = vsub.s32 0, %v615
        %v617 = vrot.slane %v560, %v616
        %v619 = vadd.f32 %v617, %v605
        %v620 = vadd.f32 %v617, %v606
        %v621 = vadd.f32 %v617, %v607
        %v622 = vadd.f32 %v617, %v608
        %v623 = vadd.f32 %v617, %v609
        %v624 = vadd.f32 %v617, %v610
        %v625 = vadd.f32 %v617, %v611
        %v626 = vadd.f32 %v617, %v612
        %627 = vset.pattern.permute.xlu0 1
        %628 = vperm.xlu0 %627, %v551
        %v629 = vpop.permute.xlu0 %628
        %631 = vset.pattern.permute.xlu0 1
        %632 = vperm.xlu0 %631, %v552
        %v633 = vpop.permute.xlu0 %632
        %635 = vset.pattern.permute.xlu0 1
        %636 = vperm.xlu0 %635, %v553
        %v637 = vpop.permute.xlu0 %636
        %639 = vset.pattern.permute.xlu0 1
        %640 = vperm.xlu0 %639, %v554
        %v641 = vpop.permute.xlu0 %640
        %643 = vset.pattern.permute.xlu0 1
        %644 = vperm.xlu0 %643, %v555
        %v645 = vpop.permute.xlu0 %644
        %647 = vset.pattern.permute.xlu0 1
        %648 = vperm.xlu0 %647, %v556
        %v649 = vpop.permute.xlu0 %648
        %651 = vset.pattern.permute.xlu0 1
        %652 = vperm.xlu0 %651, %v557
        %v653 = vpop.permute.xlu0 %652
        %655 = vset.pattern.permute.xlu0 1
        %656 = vperm.xlu0 %655, %v558
        %v657 = vpop.permute.xlu0 %656
        %v659 = vlaneseq
        %v660 = vshrl.u32 %v659, 7
        %v661 = vsub.s32 1, %v660
        %v662 = vrot.slane %v559, %v661
        %v663 = vmul.f32 %v629, %v662
        %v664 = vmul.f32 %v633, %v662
        %v665 = vmul.f32 %v637, %v662
        %v666 = vmul.f32 %v641, %v662
        %v667 = vmul.f32 %v645, %v662
        %v668 = vmul.f32 %v649, %v662
        %v669 = vmul.f32 %v653, %v662
        %v670 = vmul.f32 %v657, %v662
        %v671 = vadd.f32 %v619, %v663
        %v672 = vadd.f32 %v620, %v664
        %v673 = vadd.f32 %v621, %v665
        %v674 = vadd.f32 %v622, %v666
        %v675 = vadd.f32 %v623, %v667
        %v676 = vadd.f32 %v624, %v668
        %v677 = vadd.f32 %v625, %v669
        %v678 = vadd.f32 %v626, %v670
        %679 = vset.pattern.permute.xlu0 2
        %680 = vperm.xlu0 %679, %v551
        %v681 = vpop.permute.xlu0 %680
        %683 = vset.pattern.permute.xlu0 2
        %684 = vperm.xlu0 %683, %v552
        %v685 = vpop.permute.xlu0 %684
        %687 = vset.pattern.permute.xlu0 2
        %688 = vperm.xlu0 %687, %v553
        %v689 = vpop.permute.xlu0 %688
        %691 = vset.pattern.permute.xlu0 2
        %692 = vperm.xlu0 %691, %v554
        %v693 = vpop.permute.xlu0 %692
        %695 = vset.pattern.permute.xlu0 2
        %696 = vperm.xlu0 %695, %v555
        %v697 = vpop.permute.xlu0 %696
        %699 = vset.pattern.permute.xlu0 2
        %700 = vperm.xlu0 %699, %v556
        %v701 = vpop.permute.xlu0 %700
        %703 = vset.pattern.permute.xlu0 2
        %704 = vperm.xlu0 %703, %v557
        %v705 = vpop.permute.xlu0 %704
        %707 = vset.pattern.permute.xlu0 2
        %708 = vperm.xlu0 %707, %v558
        %v709 = vpop.permute.xlu0 %708
        %v711 = vlaneseq
        %v712 = vshrl.u32 %v711, 7
        %v713 = vsub.s32 2, %v712
        %v714 = vrot.slane %v559, %v713
        %v715 = vmul.f32 %v681, %v714
        %v716 = vmul.f32 %v685, %v714
        %v717 = vmul.f32 %v689, %v714
        %v718 = vmul.f32 %v693, %v714
        %v719 = vmul.f32 %v697, %v714
        %v720 = vmul.f32 %v701, %v714
        %v721 = vmul.f32 %v705, %v714
        %v722 = vmul.f32 %v709, %v714
        %v723 = vadd.f32 %v671, %v715
        %v724 = vadd.f32 %v672, %v716
        %v725 = vadd.f32 %v673, %v717
        %v726 = vadd.f32 %v674, %v718
        %v727 = vadd.f32 %v675, %v719
        %v728 = vadd.f32 %v676, %v720
        %v729 = vadd.f32 %v677, %v721
        %v730 = vadd.f32 %v678, %v722
        %731 = vset.pattern.permute.xlu0 3
        %732 = vperm.xlu0 %731, %v551
        %v733 = vpop.permute.xlu0 %732
        %735 = vset.pattern.permute.xlu0 3
        %736 = vperm.xlu0 %735, %v552
        %v737 = vpop.permute.xlu0 %736
        %739 = vset.pattern.permute.xlu0 3
        %740 = vperm.xlu0 %739, %v553
        %v741 = vpop.permute.xlu0 %740
        %743 = vset.pattern.permute.xlu0 3
        %744 = vperm.xlu0 %743, %v554
        %v745 = vpop.permute.xlu0 %744
        %747 = vset.pattern.permute.xlu0 3
        %748 = vperm.xlu0 %747, %v555
        %v749 = vpop.permute.xlu0 %748
        %751 = vset.pattern.permute.xlu0 3
        %752 = vperm.xlu0 %751, %v556
        %v753 = vpop.permute.xlu0 %752
        %755 = vset.pattern.permute.xlu0 3
        %756 = vperm.xlu0 %755, %v557
        %v757 = vpop.permute.xlu0 %756
        %759 = vset.pattern.permute.xlu0 3
        %760 = vperm.xlu0 %759, %v558
        %v761 = vpop.permute.xlu0 %760
        %v763 = vlaneseq
        %v764 = vshrl.u32 %v763, 7
        %v765 = vsub.s32 3, %v764
        %v766 = vrot.slane %v559, %v765
        %v767 = vmul.f32 %v733, %v766
        %v768 = vmul.f32 %v737, %v766
        %v769 = vmul.f32 %v741, %v766
        %v770 = vmul.f32 %v745, %v766
        %v771 = vmul.f32 %v749, %v766
        %v772 = vmul.f32 %v753, %v766
        %v773 = vmul.f32 %v757, %v766
        %v774 = vmul.f32 %v761, %v766
        %v775 = vadd.f32 %v723, %v767
        %v776 = vadd.f32 %v724, %v768
        %v777 = vadd.f32 %v725, %v769
        %v778 = vadd.f32 %v726, %v770
        %v779 = vadd.f32 %v727, %v771
        %v780 = vadd.f32 %v728, %v772
        %v781 = vadd.f32 %v729, %v773
        %v782 = vadd.f32 %v730, %v774
        %v783 = vpack.c.bf16 %v776, %v775
        %v784 = vpack.c.bf16 %v778, %v777
        %v785 = vpack.c.bf16 %v780, %v779
        %v786 = vpack.c.bf16 %v782, %v781
        %v787 = vlaneseq
        %v788 = vand.u32 %v787, 127
        %vm789 = vcmp.ge.s32.totalorder %v788, 21
        %v790 = vsel %vm789, -1e+30, 0.0
        %v791 = vld [vmem:[%s3] sm:$0xff]
        %v792 = vld [vmem:[%s3 + $0x8] sm:$0xff]
        %v793 = vld [vmem:[%s3 + $0x10] sm:$0xff]
        %v794 = vld [vmem:[%s8] sm:$0x1]
        %v795 = vld [vmem:[%s9] sm:$0x1]
        %vm796 = vcmask 523264
        %v797 = vsel %vm796, %v791, 0.0
        %798 = vadd.xlane.f32.xlu0 %v797
        %v799 = vpop.xlane.xlu0 %798
        %v800 = vsel %vm796, %v792, 0.0
        %801 = vadd.xlane.f32.xlu0 %v800
        %v802 = vpop.xlane.xlu0 %801
        %v803 = vsel %vm796, %v793, 0.0
        %804 = vadd.xlane.f32.xlu0 %v803
        %v805 = vpop.xlane.xlu0 %804
        %v806 = vrcp.pop 64.0
        %v807 = vmul.f32 %v799, %v806
        %v808 = vmul.f32 %v802, %v806
        %v809 = vmul.f32 %v805, %v806
        %v810 = vsub.f32 %v791, %v807
        %v811 = vsub.f32 %v792, %v808
        %v812 = vsub.f32 %v793, %v809
        %v813 = vmul.f32 %v810, %v810
        %v814 = vmul.f32 %v811, %v811
        %v815 = vmul.f32 %v812, %v812
        %v816 = vsel %vm796, %v813, 0.0
        %817 = vadd.xlane.f32.xlu0 %v816
        %v818 = vpop.xlane.xlu0 %817
        %v819 = vsel %vm796, %v814, 0.0
        %820 = vadd.xlane.f32.xlu0 %v819
        %v821 = vpop.xlane.xlu0 %820
        %v822 = vsel %vm796, %v815, 0.0
        %823 = vadd.xlane.f32.xlu0 %v822
        %v824 = vpop.xlane.xlu0 %823
        %v825 = vmul.f32 %v818, %v806
        %v826 = vmul.f32 %v821, %v806
        %v827 = vmul.f32 %v824, %v806
        %v828 = vadd.f32 %v825, 1e-05
        %v829 = vadd.f32 %v826, 1e-05
        %v830 = vadd.f32 %v827, 1e-05
        %v831 = vrsqrt.pop %v828
        %v832 = vrsqrt.pop %v829
        %v833 = vrsqrt.pop %v830
        %v834 = vmul.f32 %v810, %v831
        %v835 = vmul.f32 %v811, %v832
        %v836 = vmul.f32 %v812, %v833
        %v837 = vlaneseq
        %v838 = vshrl.u32 %v837, 7
        %v839 = vsub.s32 0, %v838
        %v840 = vrot.slane %v794, %v839
        %v841 = vmul.f32 %v834, %v840
        %v842 = vmul.f32 %v835, %v840
        %v843 = vmul.f32 %v836, %v840
        %v844 = vlaneseq
        %v845 = vshrl.u32 %v844, 7
        %v846 = vsub.s32 0, %v845
        %v847 = vrot.slane %v795, %v846
        %v848 = vadd.f32 %v841, %v847
        %v849 = vadd.f32 %v842, %v847
        %v850 = vadd.f32 %v843, %v847
        %v851 = vpack.c.bf16 %v849, %v848
        %v852 = vpack.c.bf16 %v850, %v850
        %v853 = vld [vmem:[%s4] sm:$0xf]
        %v854 = vld [vmem:[%s4 + $0x4] sm:$0xf]
        %v855 = vld [vmem:[%s4 + $0x8] sm:$0xf]
        %v856 = vld [vmem:[%s4 + $0xc] sm:$0xf]
        %v857 = vld [vmem:[%s4 + $0x10] sm:$0xf]
        %v858 = vld [vmem:[%s4 + $0x14] sm:$0xf]
        %v859 = vld [vmem:[%s4 + $0x18] sm:$0xf]
        %v860 = vld [vmem:[%s4 + $0x1c] sm:$0xf]
        %v861 = vld [vmem:[%s5] sm:$0x1]
        %v862 = vlaneseq
        %v863 = vshrl.u32 %v862, 7
        %v864 = vsub.s32 0, %v863
        %v865 = vrot.slane %v861, %v864
        %v874 = vunpack.c.l.b16 %v853
        %v875 = vunpack.c.l.b16 %v854
        %v876 = vunpack.c.l.b16 %v855
        %v877 = vunpack.c.l.b16 %v856
        %v878 = vunpack.c.l.b16 %v857
        %v879 = vunpack.c.l.b16 %v858
        %v880 = vunpack.c.l.b16 %v859
        %v881 = vunpack.c.l.b16 %v860
        %v882 = vpack.c.b16 %v875, %v874
        %v883 = vpack.c.b16 %v877, %v876
        %v884 = vpack.c.b16 %v879, %v878
        %v885 = vpack.c.b16 %v881, %v880
        %v891 = vsel %vm796, %v851, 0
        %v894 = vsel %vm796, %v852, 0
        %896 = vmatprep.subr.bf16.mxu0 0
        %897 = vmatpush1.bf16.msra.mxu0 %v882
        %898 = vmatprep.subr.bf16.mxu0 0
        %899 = vmatpush1.bf16.msra.mxu0 %v883
        %900 = vmatprep.subr.bf16.mxu0 0
        %901 = vmatpush1.bf16.msra.mxu0 %v884
        %902 = vmatprep.subr.bf16.mxu0 0
        %903 = vmatpush1.bf16.msra.mxu0 %v885
        %904 = vmatprep.subr.bf16.mxu0 0
        %905 = vmatpush1.bf16.msra.mxu0 0
        %906 = vmatprep.subr.bf16.mxu0 0
        %907 = vmatpush1.bf16.msra.mxu0 0
        %908 = vmatprep.subr.bf16.mxu0 0
        %909 = vmatpush1.bf16.msra.mxu0 0
        %910 = vmatprep.subr.bf16.mxu0 0
        %911 = vmatpush1.bf16.msra.mxu0 0
        %912 = vmatprep.subr.bf16.mxu0 0
        %913 = vmatpush1.bf16.msra.mxu0 0
        %914 = vmatprep.subr.bf16.mxu0 0
        %915 = vmatpush1.bf16.msra.mxu0 0
        %916 = vmatprep.subr.bf16.mxu0 0
        %917 = vmatpush1.bf16.msra.mxu0 0
        %918 = vmatprep.subr.bf16.mxu0 0
        %919 = vmatpush1.bf16.msra.mxu0 0
        %920 = vmatprep.subr.bf16.mxu0 0
        %921 = vmatpush1.bf16.msra.mxu0 0
        %922 = vmatprep.subr.bf16.mxu0 0
        %923 = vmatpush1.bf16.msra.mxu0 0
        %924 = vmatprep.subr.bf16.mxu0 0
        %925 = vmatpush1.bf16.msra.mxu0 0
        %926 = vmatprep.subr.bf16.mxu0 0
        %927 = vmatpush1.bf16.msra.mxu0 0
        %928 = vmatprep.mubr.bf16.mxu0 0
        %929 = vmatmul.mubr.bf16.gmra.mrb[0].mxu0 %v891
        %v930 = vpop.f32.mrb[0].mxu0
        %v931 = vadd.f32 %v865, %v930
        %v932 = vpop.f32.mrb[0].mxu0
        %v933 = vpop.f32.mrb[0].mxu0
        %v934 = vadd.f32 %v865, %v933
        %v935 = vpop.f32.mrb[0].mxu0
        %936 = vmatprep.mubr.bf16.mxu0 0
        %937 = vmatmul.mubr.bf16.gmra.mrb[0].mxu0 %v894
        %v938 = vpop.f32.mrb[0].mxu0
        %v939 = vadd.f32 %v865, %v938
        %v940 = vpop.f32.mrb[0].mxu0
        %v941 = vpop.f32.mrb[0].mxu0
        %v942 = vpop.f32.mrb[0].mxu0
        %943 = vdwg.mxu0
        %s944 = scalar_lea.vmem %s4, 32
        %v945 = vld [vmem:[%s944] sm:$0xf]
        %v946 = vld [vmem:[%s944 + $0x4] sm:$0xf]
        %v947 = vld [vmem:[%s944 + $0x8] sm:$0xf]
        %v948 = vld [vmem:[%s944 + $0xc] sm:$0xf]
        %v949 = vld [vmem:[%s944 + $0x10] sm:$0xf]
        %v950 = vld [vmem:[%s944 + $0x14] sm:$0xf]
        %v951 = vld [vmem:[%s944 + $0x18] sm:$0xf]
        %v952 = vld [vmem:[%s944 + $0x1c] sm:$0xf]
        %v953 = vld [vmem:[%s5 + $0x1] sm:$0x1]
        %v954 = vlaneseq
        %v955 = vshrl.u32 %v954, 7
        %v956 = vsub.s32 0, %v955
        %v957 = vrot.slane %v953, %v956
        %v966 = vunpack.c.l.b16 %v945
        %v967 = vunpack.c.l.b16 %v946
        %v968 = vunpack.c.l.b16 %v947
        %v969 = vunpack.c.l.b16 %v948
        %v970 = vunpack.c.l.b16 %v949
        %v971 = vunpack.c.l.b16 %v950
        %v972 = vunpack.c.l.b16 %v951
        %v973 = vunpack.c.l.b16 %v952
        %v974 = vpack.c.b16 %v967, %v966
        %v975 = vpack.c.b16 %v969, %v968
        %v976 = vpack.c.b16 %v971, %v970
        %v977 = vpack.c.b16 %v973, %v972
        %982 = vmatprep.subr.bf16.mxu0 0
        %983 = vmatpush1.bf16.msra.mxu0 %v974
        %984 = vmatprep.subr.bf16.mxu0 0
        %985 = vmatpush1.bf16.msra.mxu0 %v975
        %986 = vmatprep.subr.bf16.mxu0 0
        %987 = vmatpush1.bf16.msra.mxu0 %v976
        %988 = vmatprep.subr.bf16.mxu0 0
        %989 = vmatpush1.bf16.msra.mxu0 %v977
        %990 = vmatprep.subr.bf16.mxu0 0
        %991 = vmatpush1.bf16.msra.mxu0 0
        %992 = vmatprep.subr.bf16.mxu0 0
        %993 = vmatpush1.bf16.msra.mxu0 0
        %994 = vmatprep.subr.bf16.mxu0 0
        %995 = vmatpush1.bf16.msra.mxu0 0
        %996 = vmatprep.subr.bf16.mxu0 0
        %997 = vmatpush1.bf16.msra.mxu0 0
        %998 = vmatprep.subr.bf16.mxu0 0
        %999 = vmatpush1.bf16.msra.mxu0 0
        %1000 = vmatprep.subr.bf16.mxu0 0
        %1001 = vmatpush1.bf16.msra.mxu0 0
        %1002 = vmatprep.subr.bf16.mxu0 0
        %1003 = vmatpush1.bf16.msra.mxu0 0
        %1004 = vmatprep.subr.bf16.mxu0 0
        %1005 = vmatpush1.bf16.msra.mxu0 0
        %1006 = vmatprep.subr.bf16.mxu0 0
        %1007 = vmatpush1.bf16.msra.mxu0 0
        %1008 = vmatprep.subr.bf16.mxu0 0
        %1009 = vmatpush1.bf16.msra.mxu0 0
        %1010 = vmatprep.subr.bf16.mxu0 0
        %1011 = vmatpush1.bf16.msra.mxu0 0
        %1012 = vmatprep.subr.bf16.mxu0 0
        %1013 = vmatpush1.bf16.msra.mxu0 0
        %1014 = vmatprep.mubr.bf16.mxu0 0
        %1015 = vmatmul.mubr.bf16.gmra.mrb[0].mxu0 %v891
        %v1016 = vpop.f32.mrb[0].mxu0
        %v1017 = vadd.f32 %v957, %v1016
        %v1018 = vpop.f32.mrb[0].mxu0
        %v1019 = vpop.f32.mrb[0].mxu0
        %v1020 = vadd.f32 %v957, %v1019
        %v1021 = vpop.f32.mrb[0].mxu0
        %1022 = vmatprep.mubr.bf16.mxu0 0
        %1023 = vmatmul.mubr.bf16.gmra.mrb[0].mxu0 %v894
        %v1024 = vpop.f32.mrb[0].mxu0
        %v1025 = vadd.f32 %v957, %v1024
        %v1026 = vpop.f32.mrb[0].mxu0
        %v1027 = vpop.f32.mrb[0].mxu0
        %v1028 = vpop.f32.mrb[0].mxu0
        %1029 = vdwg.mxu0
        %s1030 = scalar_lea.vmem %s4, 64
        %v1031 = vld [vmem:[%s1030] sm:$0xf]
        %v1032 = vld [vmem:[%s1030 + $0x4] sm:$0xf]
        %v1033 = vld [vmem:[%s1030 + $0x8] sm:$0xf]
        %v1034 = vld [vmem:[%s1030 + $0xc] sm:$0xf]
        %v1035 = vld [vmem:[%s1030 + $0x10] sm:$0xf]
        %v1036 = vld [vmem:[%s1030 + $0x14] sm:$0xf]
        %v1037 = vld [vmem:[%s1030 + $0x18] sm:$0xf]
        %v1038 = vld [vmem:[%s1030 + $0x1c] sm:$0xf]
        %v1039 = vld [vmem:[%s5 + $0x2] sm:$0x1]
        %v1040 = vlaneseq
        %v1041 = vshrl.u32 %v1040, 7
        %v1042 = vsub.s32 0, %v1041
        %v1043 = vrot.slane %v1039, %v1042
        %v1052 = vunpack.c.l.b16 %v1031
        %v1053 = vunpack.c.l.b16 %v1032
        %v1054 = vunpack.c.l.b16 %v1033
        %v1055 = vunpack.c.l.b16 %v1034
        %v1056 = vunpack.c.l.b16 %v1035
        %v1057 = vunpack.c.l.b16 %v1036
        %v1058 = vunpack.c.l.b16 %v1037
        %v1059 = vunpack.c.l.b16 %v1038
        %v1060 = vpack.c.b16 %v1053, %v1052
        %v1061 = vpack.c.b16 %v1055, %v1054
        %v1062 = vpack.c.b16 %v1057, %v1056
        %v1063 = vpack.c.b16 %v1059, %v1058
        %1068 = vmatprep.subr.bf16.mxu0 0
        %1069 = vmatpush1.bf16.msra.mxu0 %v1060
        %1070 = vmatprep.subr.bf16.mxu0 0
        %1071 = vmatpush1.bf16.msra.mxu0 %v1061
        %1072 = vmatprep.subr.bf16.mxu0 0
        %1073 = vmatpush1.bf16.msra.mxu0 %v1062
        %1074 = vmatprep.subr.bf16.mxu0 0
        %1075 = vmatpush1.bf16.msra.mxu0 %v1063
        %1076 = vmatprep.subr.bf16.mxu0 0
        %1077 = vmatpush1.bf16.msra.mxu0 0
        %1078 = vmatprep.subr.bf16.mxu0 0
        %1079 = vmatpush1.bf16.msra.mxu0 0
        %1080 = vmatprep.subr.bf16.mxu0 0
        %1081 = vmatpush1.bf16.msra.mxu0 0
        %1082 = vmatprep.subr.bf16.mxu0 0
        %1083 = vmatpush1.bf16.msra.mxu0 0
        %1084 = vmatprep.subr.bf16.mxu0 0
        %1085 = vmatpush1.bf16.msra.mxu0 0
        %1086 = vmatprep.subr.bf16.mxu0 0
        %1087 = vmatpush1.bf16.msra.mxu0 0
        %1088 = vmatprep.subr.bf16.mxu0 0
        %1089 = vmatpush1.bf16.msra.mxu0 0
        %1090 = vmatprep.subr.bf16.mxu0 0
        %1091 = vmatpush1.bf16.msra.mxu0 0
        %1092 = vmatprep.subr.bf16.mxu0 0
        %1093 = vmatpush1.bf16.msra.mxu0 0
        %1094 = vmatprep.subr.bf16.mxu0 0
        %1095 = vmatpush1.bf16.msra.mxu0 0
        %1096 = vmatprep.subr.bf16.mxu0 0
        %1097 = vmatpush1.bf16.msra.mxu0 0
        %1098 = vmatprep.subr.bf16.mxu0 0
        %1099 = vmatpush1.bf16.msra.mxu0 0
        %1100 = vmatprep.mubr.bf16.mxu0 0
        %1101 = vmatmul.mubr.bf16.gmra.mrb[0].mxu0 %v891
        %v1102 = vpop.f32.mrb[0].mxu0
        %v1103 = vadd.f32 %v1043, %v1102
        %v1104 = vpop.f32.mrb[0].mxu0
        %v1105 = vpop.f32.mrb[0].mxu0
        %v1106 = vadd.f32 %v1043, %v1105
        %v1107 = vpop.f32.mrb[0].mxu0
        %1108 = vmatprep.mubr.bf16.mxu0 0
        %1109 = vmatmul.mubr.bf16.gmra.mrb[0].mxu0 %v894
        %v1110 = vpop.f32.mrb[0].mxu0
        %v1111 = vadd.f32 %v1043, %v1110
        %v1112 = vpop.f32.mrb[0].mxu0
        %v1113 = vpop.f32.mrb[0].mxu0
        %v1114 = vpop.f32.mrb[0].mxu0
        %1115 = vdwg.mxu0
        %v1116 = vpack.c.bf16 %v934, %v931
        %v1117 = vpack.c.bf16 %v939, %v939
        %v1118 = vpack.c.bf16 %v1020, %v1017
        %v1119 = vpack.c.bf16 %v1025, %v1025
        %v1121 = vsel %vm796, %v1116, 0
        %v1124 = vsel %vm796, %v1117, 0
        %v1127 = vsel %vm796, %v1118, 0
        %v1130 = vsel %vm796, %v1119, 0
        %1132 = vmatprep.subr.bf16.mxu0 0
        %1133 = vmatpush1.bf16.xpose.msra.mxu0 %v1127
        %1134 = vmatprep.subr.bf16.mxu0 0
        %1135 = vmatpush1.bf16.xpose.msra.mxu0 %v1130
        %1136 = vmatprep.subr.bf16.mxu0 0
        %1137 = vmatpush1.bf16.xpose.msra.mxu0 0
        %1138 = vmatprep.subr.bf16.mxu0 0
        %1139 = vmatpush1.bf16.xpose.msra.mxu0 0
        %1140 = vmatprep.subr.bf16.mxu0 0
        %1141 = vmatpush1.bf16.xpose.msra.mxu0 0
        %1142 = vmatprep.subr.bf16.mxu0 0
        %1143 = vmatpush1.bf16.xpose.msra.mxu0 0
        %1144 = vmatprep.subr.bf16.mxu0 0
        %1145 = vmatpush1.bf16.xpose.msra.mxu0 0
        %1146 = vmatprep.subr.bf16.mxu0 0
        %1147 = vmatpush1.bf16.xpose.msra.mxu0 0
        %1148 = vmatprep.subr.bf16.mxu0 0
        %1149 = vmatpush1.bf16.xpose.msra.mxu0 0
        %1150 = vmatprep.subr.bf16.mxu0 0
        %1151 = vmatpush1.bf16.xpose.msra.mxu0 0
        %1152 = vmatprep.subr.bf16.mxu0 0
        %1153 = vmatpush1.bf16.xpose.msra.mxu0 0
        %1154 = vmatprep.subr.bf16.mxu0 0
        %1155 = vmatpush1.bf16.xpose.msra.mxu0 0
        %1156 = vmatprep.subr.bf16.mxu0 0
        %1157 = vmatpush1.bf16.xpose.msra.mxu0 0
        %1158 = vmatprep.subr.bf16.mxu0 0
        %1159 = vmatpush1.bf16.xpose.msra.mxu0 0
        %1160 = vmatprep.subr.bf16.mxu0 0
        %1161 = vmatpush1.bf16.xpose.msra.mxu0 0
        %1162 = vmatprep.subr.bf16.mxu0 0
        %1163 = vmatpush1.bf16.xpose.msra.mxu0 0
        %1164 = vmatprep.mubr.bf16.mxu0 0
        %1165 = vmatmul.mubr.bf16.gmra.mrb[0].mxu0 %v1121
        %v1166 = vpop.f32.mrb[0].mxu0
        %v1167 = vadd.f32 0.0, %v1166
        %v1168 = vpop.f32.mrb[0].mxu0
        %v1169 = vpop.f32.mrb[0].mxu0
        %v1170 = vadd.f32 0.0, %v1169
        %v1171 = vpop.f32.mrb[0].mxu0
        %1172 = vmatprep.mubr.bf16.mxu0 0
        %1173 = vmatmul.mubr.bf16.gmra.mrb[0].mxu0 %v1124
        %v1174 = vpop.f32.mrb[0].mxu0
        %v1175 = vadd.f32 0.0, %v1174
        %v1176 = vpop.f32.mrb[0].mxu0
        %v1177 = vpop.f32.mrb[0].mxu0
        %v1178 = vpop.f32.mrb[0].mxu0
        %1179 = vdwg.mxu0
        %v1180 = vmul.f32 %v1167, 0.125
        %v1181 = vmul.f32 %v1170, 0.125
        %v1182 = vmul.f32 %v1175, 0.125
        %v1183 = vadd.f32 %v1180, %v790
        %v1184 = vadd.f32 %v1181, %v790
        %v1185 = vadd.f32 %v1182, %v790
        %vm1186 = vcmask 195584
        %v1187 = vsel %vm1186, %v1183, -inf
        %1188 = vmax.xlane.f32.xlu0 %v1187
        %v1189 = vpop.xlane.xlu0 %1188
        %v1190 = vsel %vm1186, %v1184, -inf
        %1191 = vmax.xlane.f32.xlu0 %v1190
        %v1192 = vpop.xlane.xlu0 %1191
        %v1193 = vsel %vm1186, %v1185, -inf
        %1194 = vmax.xlane.f32.xlu0 %v1193
        %v1195 = vpop.xlane.xlu0 %1194
        %v1196 = vsub.f32 %v1183, %v1189
        %v1197 = vsub.f32 %v1184, %v1192
        %v1198 = vsub.f32 %v1185, %v1195
        %v1199 = vmul.f32 %v1196, 1.442695
        %v1200 = vpow.pop %v1199
        %v1201 = vmul.f32 %v1197, 1.442695
        %v1202 = vpow.pop %v1201
        %v1203 = vmul.f32 %v1198, 1.442695
        %v1204 = vpow.pop %v1203
        %v1205 = vsel %vm1186, %v1200, 0.0
        %1206 = vadd.xlane.f32.xlu0 %v1205
        %v1207 = vpop.xlane.xlu0 %1206
        %v1208 = vsel %vm1186, %v1202, 0.0
        %1209 = vadd.xlane.f32.xlu0 %v1208
        %v1210 = vpop.xlane.xlu0 %1209
        %v1211 = vsel %vm1186, %v1204, 0.0
        %1212 = vadd.xlane.f32.xlu0 %v1211
        %v1213 = vpop.xlane.xlu0 %1212
        %v1214 = vrcp.pop %v1207
        %v1215 = vrcp.pop %v1210
        %v1216 = vrcp.pop %v1213
        %v1217 = vmul.f32 %v1200, %v1214
        %v1218 = vmul.f32 %v1202, %v1215
        %v1219 = vmul.f32 %v1204, %v1216
        %v1220 = vpack.c.bf16 %v1218, %v1217
        %v1221 = vpack.c.bf16 %v1219, %v1219
        %v1222 = vpack.c.bf16 %v1106, %v1103
        %v1223 = vpack.c.bf16 %v1111, %v1111
        %v1225 = vsel %vm1186, %v1220, 0
        %v1228 = vsel %vm1186, %v1221, 0
        %vm1230 = vcmask 1043456
        %v1232 = vsel %vm1230, %v1223, 0
        %1234 = vmatprep.subr.bf16.mxu0 0
        %1235 = vmatpush1.bf16.msra.mxu0 %v1222
        %1236 = vmatprep.subr.bf16.mxu0 0
        %1237 = vmatpush1.bf16.msra.mxu0 %v1232
        %1238 = vmatprep.subr.bf16.mxu0 0
        %1239 = vmatpush1.bf16.msra.mxu0 0
        %1240 = vmatprep.subr.bf16.mxu0 0
        %1241 = vmatpush1.bf16.msra.mxu0 0
        %1242 = vmatprep.subr.bf16.mxu0 0
        %1243 = vmatpush1.bf16.msra.mxu0 0
        %1244 = vmatprep.subr.bf16.mxu0 0
        %1245 = vmatpush1.bf16.msra.mxu0 0
        %1246 = vmatprep.subr.bf16.mxu0 0
        %1247 = vmatpush1.bf16.msra.mxu0 0
        %1248 = vmatprep.subr.bf16.mxu0 0
        %1249 = vmatpush1.bf16.msra.mxu0 0
        %1250 = vmatprep.subr.bf16.mxu0 0
        %1251 = vmatpush1.bf16.msra.mxu0 0
        %1252 = vmatprep.subr.bf16.mxu0 0
        %1253 = vmatpush1.bf16.msra.mxu0 0
        %1254 = vmatprep.subr.bf16.mxu0 0
        %1255 = vmatpush1.bf16.msra.mxu0 0
        %1256 = vmatprep.subr.bf16.mxu0 0
        %1257 = vmatpush1.bf16.msra.mxu0 0
        %1258 = vmatprep.subr.bf16.mxu0 0
        %1259 = vmatpush1.bf16.msra.mxu0 0
        %1260 = vmatprep.subr.bf16.mxu0 0
        %1261 = vmatpush1.bf16.msra.mxu0 0
        %1262 = vmatprep.subr.bf16.mxu0 0
        %1263 = vmatpush1.bf16.msra.mxu0 0
        %1264 = vmatprep.subr.bf16.mxu0 0
        %1265 = vmatpush1.bf16.msra.mxu0 0
        %1266 = vmatprep.mubr.bf16.mxu0 0
        %1267 = vmatmul.mubr.bf16.gmra.mrb[0].mxu0 %v1225
        %v1268 = vpop.f32.mrb[0].mxu0
        %v1269 = vadd.f32 0.0, %v1268
        %v1270 = vpop.f32.mrb[0].mxu0
        %v1271 = vpop.f32.mrb[0].mxu0
        %v1272 = vadd.f32 0.0, %v1271
        %v1273 = vpop.f32.mrb[0].mxu0
        %1274 = vmatprep.mubr.bf16.mxu0 0
        %1275 = vmatmul.mubr.bf16.gmra.mrb[0].mxu0 %v1228
        %v1276 = vpop.f32.mrb[0].mxu0
        %v1277 = vadd.f32 0.0, %v1276
        %v1278 = vpop.f32.mrb[0].mxu0
        %v1279 = vpop.f32.mrb[0].mxu0
        %v1280 = vpop.f32.mrb[0].mxu0
        %1281 = vdwg.mxu0
        %v1282 = vpack.c.bf16 %v1272, %v1269
        %v1283 = vpack.c.bf16 %v1277, %v1277
        %v1284 = vld [vmem:[#allocation2] sm:$0xf]
        %v1285 = vld [vmem:[#allocation2 + $0x4] sm:$0xf]
        %v1286 = vld [vmem:[#allocation2 + $0x8] sm:$0xf]
        %v1287 = vld [vmem:[#allocation2 + $0xc] sm:$0xf]
        %v1288 = vld [vmem:[#allocation2 + $0x10] sm:$0xf]
        %v1289 = vld [vmem:[#allocation2 + $0x14] sm:$0xf]
        %v1290 = vld [vmem:[#allocation2 + $0x18] sm:$0xf]
        %v1291 = vld [vmem:[#allocation2 + $0x1c] sm:$0xf]
        %v1300 = vunpack.c.l.b16 %v1284
        %v1301 = vunpack.c.l.b16 %v1285
        %v1302 = vunpack.c.l.b16 %v1286
        %v1303 = vunpack.c.l.b16 %v1287
        %v1304 = vunpack.c.l.b16 %v1288
        %v1305 = vunpack.c.l.b16 %v1289
        %v1306 = vunpack.c.l.b16 %v1290
        %v1307 = vunpack.c.l.b16 %v1291
        %v1308 = vpack.c.b16 %v1301, %v1300
        %v1309 = vpack.c.b16 %v1303, %v1302
        %v1310 = vpack.c.b16 %v1305, %v1304
        %v1311 = vpack.c.b16 %v1307, %v1306
        %v1317 = vsel %vm796, %v1282, 0
        %v1320 = vsel %vm796, %v1283, 0
        %1322 = vmatprep.subr.bf16.mxu0 0
        %1323 = vmatpush1.bf16.msra.mxu0 %v1308
        %1324 = vmatprep.subr.bf16.mxu0 0
        %1325 = vmatpush1.bf16.msra.mxu0 %v1309
        %1326 = vmatprep.subr.bf16.mxu0 0
        %1327 = vmatpush1.bf16.msra.mxu0 %v1310
        %1328 = vmatprep.subr.bf16.mxu0 0
        %1329 = vmatpush1.bf16.msra.mxu0 %v1311
        %1330 = vmatprep.subr.bf16.mxu0 0
        %1331 = vmatpush1.bf16.msra.mxu0 0
        %1332 = vmatprep.subr.bf16.mxu0 0
        %1333 = vmatpush1.bf16.msra.mxu0 0
        %1334 = vmatprep.subr.bf16.mxu0 0
        %1335 = vmatpush1.bf16.msra.mxu0 0
        %1336 = vmatprep.subr.bf16.mxu0 0
        %1337 = vmatpush1.bf16.msra.mxu0 0
        %1338 = vmatprep.subr.bf16.mxu0 0
        %1339 = vmatpush1.bf16.msra.mxu0 0
        %1340 = vmatprep.subr.bf16.mxu0 0
        %1341 = vmatpush1.bf16.msra.mxu0 0
        %1342 = vmatprep.subr.bf16.mxu0 0
        %1343 = vmatpush1.bf16.msra.mxu0 0
        %1344 = vmatprep.subr.bf16.mxu0 0
        %1345 = vmatpush1.bf16.msra.mxu0 0
        %1346 = vmatprep.subr.bf16.mxu0 0
        %1347 = vmatpush1.bf16.msra.mxu0 0
        %1348 = vmatprep.subr.bf16.mxu0 0
        %1349 = vmatpush1.bf16.msra.mxu0 0
        %1350 = vmatprep.subr.bf16.mxu0 0
        %1351 = vmatpush1.bf16.msra.mxu0 0
        %1352 = vmatprep.subr.bf16.mxu0 0
        %1353 = vmatpush1.bf16.msra.mxu0 0
        %1354 = vmatprep.mubr.bf16.mxu0 0
        %1355 = vmatmul.mubr.bf16.gmra.mrb[0].mxu0 %v1317
        %v1356 = vpop.f32.mrb[0].mxu0
        %v1357 = vadd.f32 0.0, %v1356
        %v1358 = vpop.f32.mrb[0].mxu0
        %v1359 = vpop.f32.mrb[0].mxu0
        %v1360 = vadd.f32 0.0, %v1359
        %v1361 = vpop.f32.mrb[0].mxu0
        %1362 = vmatprep.mubr.bf16.mxu0 0
        %1363 = vmatmul.mubr.bf16.gmra.mrb[0].mxu0 %v1320
        %v1364 = vpop.f32.mrb[0].mxu0
        %v1365 = vadd.f32 0.0, %v1364
        %v1366 = vpop.f32.mrb[0].mxu0
        %v1367 = vpop.f32.mrb[0].mxu0
        %v1368 = vpop.f32.mrb[0].mxu0
        %1369 = vdwg.mxu0
        %v1370 = vadd.f32 %v791, %v1357
        %v1371 = vadd.f32 %v792, %v1360
        %v1372 = vadd.f32 %v793, %v1365
        %v1373 = vld [vmem:[%s7] sm:$0x1]
        %v1374 = vlaneseq
        %v1375 = vshrl.u32 %v1374, 7
        %v1376 = vsub.s32 0, %v1375
        %v1377 = vrot.slane %v1373, %v1376
        %v1378 = vadd.f32 %v1370, %v1377
        %v1379 = vadd.f32 %v1371, %v1377
        %v1380 = vadd.f32 %v1372, %v1377
        %v1381 = vld [vmem:[%s8 + $0x1] sm:$0x1]
        %v1382 = vld [vmem:[%s9 + $0x1] sm:$0x1]
        %v1383 = vsel %vm796, %v1378, 0.0
        %1384 = vadd.xlane.f32.xlu0 %v1383
        %v1385 = vpop.xlane.xlu0 %1384
        %v1386 = vsel %vm796, %v1379, 0.0
        %1387 = vadd.xlane.f32.xlu0 %v1386
        %v1388 = vpop.xlane.xlu0 %1387
        %v1389 = vsel %vm796, %v1380, 0.0
        %1390 = vadd.xlane.f32.xlu0 %v1389
        %v1391 = vpop.xlane.xlu0 %1390
        %v1392 = vmul.f32 %v1385, %v806
        %v1393 = vmul.f32 %v1388, %v806
        %v1394 = vmul.f32 %v1391, %v806
        %v1395 = vsub.f32 %v1378, %v1392
        %v1396 = vsub.f32 %v1379, %v1393
        %v1397 = vsub.f32 %v1380, %v1394
        %v1398 = vmul.f32 %v1395, %v1395
        %v1399 = vmul.f32 %v1396, %v1396
        %v1400 = vmul.f32 %v1397, %v1397
        %v1401 = vsel %vm796, %v1398, 0.0
        %1402 = vadd.xlane.f32.xlu0 %v1401
        %v1403 = vpop.xlane.xlu0 %1402
        %v1404 = vsel %vm796, %v1399, 0.0
        %1405 = vadd.xlane.f32.xlu0 %v1404
        %v1406 = vpop.xlane.xlu0 %1405
        %v1407 = vsel %vm796, %v1400, 0.0
        %1408 = vadd.xlane.f32.xlu0 %v1407
        %v1409 = vpop.xlane.xlu0 %1408
        %v1410 = vmul.f32 %v1403, %v806
        %v1411 = vmul.f32 %v1406, %v806
        %v1412 = vmul.f32 %v1409, %v806
        %v1413 = vadd.f32 %v1410, 1e-05
        %v1414 = vadd.f32 %v1411, 1e-05
        %v1415 = vadd.f32 %v1412, 1e-05
        %v1416 = vrsqrt.pop %v1413
        %v1417 = vrsqrt.pop %v1414
        %v1418 = vrsqrt.pop %v1415
        %v1419 = vmul.f32 %v1395, %v1416
        %v1420 = vmul.f32 %v1396, %v1417
        %v1421 = vmul.f32 %v1397, %v1418
        %v1422 = vlaneseq
        %v1423 = vshrl.u32 %v1422, 7
        %v1424 = vsub.s32 0, %v1423
        %v1425 = vrot.slane %v1381, %v1424
        %v1426 = vmul.f32 %v1419, %v1425
        %v1427 = vmul.f32 %v1420, %v1425
        %v1428 = vmul.f32 %v1421, %v1425
        %v1429 = vlaneseq
        %v1430 = vshrl.u32 %v1429, 7
        %v1431 = vsub.s32 0, %v1430
        %v1432 = vrot.slane %v1382, %v1431
        %v1433 = vadd.f32 %v1426, %v1432
        %v1434 = vadd.f32 %v1427, %v1432
        %v1435 = vadd.f32 %v1428, %v1432
        %v1436 = vpack.c.bf16 %v1434, %v1433
        %v1437 = vpack.c.bf16 %v1435, %v1435
        %s1438 = scalar_lea.vmem %s4, 96
        %v1439 = vld [vmem:[%s1438] sm:$0xf]
        %v1440 = vld [vmem:[%s1438 + $0x4] sm:$0xf]
        %v1441 = vld [vmem:[%s1438 + $0x8] sm:$0xf]
        %v1442 = vld [vmem:[%s1438 + $0xc] sm:$0xf]
        %v1443 = vld [vmem:[%s1438 + $0x10] sm:$0xf]
        %v1444 = vld [vmem:[%s1438 + $0x14] sm:$0xf]
        %v1445 = vld [vmem:[%s1438 + $0x18] sm:$0xf]
        %v1446 = vld [vmem:[%s1438 + $0x1c] sm:$0xf]
        %s1447 = scalar_lea.vmem %s5, 4
        %v1448 = vld [vmem:[%s1447] sm:$0x1]
        %v1449 = vlaneseq
        %v1450 = vshrl.u32 %v1449, 7
        %v1451 = vsub.s32 0, %v1450
        %v1452 = vrot.slane %v1448, %v1451
        %v1461 = vunpack.c.l.b16 %v1439
        %v1462 = vunpack.c.l.b16 %v1440
        %v1463 = vunpack.c.l.b16 %v1441
        %v1464 = vunpack.c.l.b16 %v1442
        %v1465 = vunpack.c.l.b16 %v1443
        %v1466 = vunpack.c.l.b16 %v1444
        %v1467 = vunpack.c.l.b16 %v1445
        %v1468 = vunpack.c.l.b16 %v1446
        %v1469 = vpack.c.b16 %v1462, %v1461
        %v1470 = vpack.c.b16 %v1464, %v1463
        %v1471 = vpack.c.b16 %v1466, %v1465
        %v1472 = vpack.c.b16 %v1468, %v1467
        %v1478 = vsel %vm796, %v1436, 0
        %v1481 = vsel %vm796, %v1437, 0
        %1483 = vmatprep.subr.bf16.mxu0 0
        %1484 = vmatpush1.bf16.msra.mxu0 %v1469
        %1485 = vmatprep.subr.bf16.mxu0 0
        %1486 = vmatpush1.bf16.msra.mxu0 %v1470
        %1487 = vmatprep.subr.bf16.mxu0 0
        %1488 = vmatpush1.bf16.msra.mxu0 %v1471
        %1489 = vmatprep.subr.bf16.mxu0 0
        %1490 = vmatpush1.bf16.msra.mxu0 %v1472
        %1491 = vmatprep.subr.bf16.mxu0 0
        %1492 = vmatpush1.bf16.msra.mxu0 0
        %1493 = vmatprep.subr.bf16.mxu0 0
        %1494 = vmatpush1.bf16.msra.mxu0 0
        %1495 = vmatprep.subr.bf16.mxu0 0
        %1496 = vmatpush1.bf16.msra.mxu0 0
        %1497 = vmatprep.subr.bf16.mxu0 0
        %1498 = vmatpush1.bf16.msra.mxu0 0
        %1499 = vmatprep.subr.bf16.mxu0 0
        %1500 = vmatpush1.bf16.msra.mxu0 0
        %1501 = vmatprep.subr.bf16.mxu0 0
        %1502 = vmatpush1.bf16.msra.mxu0 0
        %1503 = vmatprep.subr.bf16.mxu0 0
        %1504 = vmatpush1.bf16.msra.mxu0 0
        %1505 = vmatprep.subr.bf16.mxu0 0
        %1506 = vmatpush1.bf16.msra.mxu0 0
        %1507 = vmatprep.subr.bf16.mxu0 0
        %1508 = vmatpush1.bf16.msra.mxu0 0
        %1509 = vmatprep.subr.bf16.mxu0 0
        %1510 = vmatpush1.bf16.msra.mxu0 0
        %1511 = vmatprep.subr.bf16.mxu0 0
        %1512 = vmatpush1.bf16.msra.mxu0 0
        %1513 = vmatprep.subr.bf16.mxu0 0
        %1514 = vmatpush1.bf16.msra.mxu0 0
        %1515 = vmatprep.mubr.bf16.mxu0 0
        %1516 = vmatmul.mubr.bf16.gmra.mrb[0].mxu0 %v1478
        %v1517 = vpop.f32.mrb[0].mxu0
        %v1518 = vadd.f32 %v1452, %v1517
        %v1519 = vpop.f32.mrb[0].mxu0
        %v1520 = vpop.f32.mrb[0].mxu0
        %v1521 = vadd.f32 %v1452, %v1520
        %v1522 = vpop.f32.mrb[0].mxu0
        %1523 = vmatprep.mubr.bf16.mxu0 0
        %1524 = vmatmul.mubr.bf16.gmra.mrb[0].mxu0 %v1481
        %v1525 = vpop.f32.mrb[0].mxu0
        %v1526 = vadd.f32 %v1452, %v1525
        %v1527 = vpop.f32.mrb[0].mxu0
        %v1528 = vpop.f32.mrb[0].mxu0
        %v1529 = vpop.f32.mrb[0].mxu0
        %1530 = vdwg.mxu0
        %s1531 = scalar_lea.vmem %s4, 128
        %v1532 = vld [vmem:[%s1531] sm:$0xf]
        %v1533 = vld [vmem:[%s1531 + $0x4] sm:$0xf]
        %v1534 = vld [vmem:[%s1531 + $0x8] sm:$0xf]
        %v1535 = vld [vmem:[%s1531 + $0xc] sm:$0xf]
        %v1536 = vld [vmem:[%s1531 + $0x10] sm:$0xf]
        %v1537 = vld [vmem:[%s1531 + $0x14] sm:$0xf]
        %v1538 = vld [vmem:[%s1531 + $0x18] sm:$0xf]
        %v1539 = vld [vmem:[%s1531 + $0x1c] sm:$0xf]
        %v1540 = vld [vmem:[%s1447 + $0x1] sm:$0x1]
        %v1541 = vlaneseq
        %v1542 = vshrl.u32 %v1541, 7
        %v1543 = vsub.s32 0, %v1542
        %v1544 = vrot.slane %v1540, %v1543
        %v1553 = vunpack.c.l.b16 %v1532
        %v1554 = vunpack.c.l.b16 %v1533
        %v1555 = vunpack.c.l.b16 %v1534
        %v1556 = vunpack.c.l.b16 %v1535
        %v1557 = vunpack.c.l.b16 %v1536
        %v1558 = vunpack.c.l.b16 %v1537
        %v1559 = vunpack.c.l.b16 %v1538
        %v1560 = vunpack.c.l.b16 %v1539
        %v1561 = vpack.c.b16 %v1554, %v1553
        %v1562 = vpack.c.b16 %v1556, %v1555
        %v1563 = vpack.c.b16 %v1558, %v1557
        %v1564 = vpack.c.b16 %v1560, %v1559
        %v1570 = vsel %vm796, %v783, 0
        %v1573 = vsel %vm796, %v784, 0
        %v1576 = vsel %vm796, %v785, 0
        %v1579 = vsel %vm796, %v786, 0
        %1581 = vmatprep.subr.bf16.mxu0 0
        %1582 = vmatpush1.bf16.msra.mxu0 %v1561
        %1583 = vmatprep.subr.bf16.mxu0 0
        %1584 = vmatpush1.bf16.msra.mxu0 %v1562
        %1585 = vmatprep.subr.bf16.mxu0 0
        %1586 = vmatpush1.bf16.msra.mxu0 %v1563
        %1587 = vmatprep.subr.bf16.mxu0 0
        %1588 = vmatpush1.bf16.msra.mxu0 %v1564
        %1589 = vmatprep.subr.bf16.mxu0 0
        %1590 = vmatpush1.bf16.msra.mxu0 0
        %1591 = vmatprep.subr.bf16.mxu0 0
        %1592 = vmatpush1.bf16.msra.mxu0 0
        %1593 = vmatprep.subr.bf16.mxu0 0
        %1594 = vmatpush1.bf16.msra.mxu0 0
        %1595 = vmatprep.subr.bf16.mxu0 0
        %1596 = vmatpush1.bf16.msra.mxu0 0
        %1597 = vmatprep.subr.bf16.mxu0 0
        %1598 = vmatpush1.bf16.msra.mxu0 0
        %1599 = vmatprep.subr.bf16.mxu0 0
        %1600 = vmatpush1.bf16.msra.mxu0 0
        %1601 = vmatprep.subr.bf16.mxu0 0
        %1602 = vmatpush1.bf16.msra.mxu0 0
        %1603 = vmatprep.subr.bf16.mxu0 0
        %1604 = vmatpush1.bf16.msra.mxu0 0
        %1605 = vmatprep.subr.bf16.mxu0 0
        %1606 = vmatpush1.bf16.msra.mxu0 0
        %1607 = vmatprep.subr.bf16.mxu0 0
        %1608 = vmatpush1.bf16.msra.mxu0 0
        %1609 = vmatprep.subr.bf16.mxu0 0
        %1610 = vmatpush1.bf16.msra.mxu0 0
        %1611 = vmatprep.subr.bf16.mxu0 0
        %1612 = vmatpush1.bf16.msra.mxu0 0
        %1613 = vmatprep.mubr.bf16.mxu0 0
        %1614 = vmatmul.mubr.bf16.gmra.mrb[0].mxu0 %v1570
        %v1615 = vpop.f32.mrb[0].mxu0
        %v1616 = vadd.f32 %v1544, %v1615
        %v1617 = vpop.f32.mrb[0].mxu0
        %v1618 = vpop.f32.mrb[0].mxu0
        %v1619 = vadd.f32 %v1544, %v1618
        %v1620 = vpop.f32.mrb[0].mxu0
        %1621 = vmatprep.mubr.bf16.mxu0 0
        %1622 = vmatmul.mubr.bf16.gmra.mrb[0].mxu0 %v1573
        %v1623 = vpop.f32.mrb[0].mxu0
        %v1624 = vadd.f32 %v1544, %v1623
        %v1625 = vpop.f32.mrb[0].mxu0
        %v1626 = vpop.f32.mrb[0].mxu0
        %v1627 = vadd.f32 %v1544, %v1626
        %v1628 = vpop.f32.mrb[0].mxu0
        %1629 = vmatprep.mubr.bf16.mxu0 0
        %1630 = vmatmul.mubr.bf16.gmra.mrb[0].mxu0 %v1576
        %v1631 = vpop.f32.mrb[0].mxu0
        %v1632 = vadd.f32 %v1544, %v1631
        %v1633 = vpop.f32.mrb[0].mxu0
        %v1634 = vpop.f32.mrb[0].mxu0
        %v1635 = vadd.f32 %v1544, %v1634
        %v1636 = vpop.f32.mrb[0].mxu0
        %1637 = vmatprep.mubr.bf16.mxu0 0
        %1638 = vmatmul.mubr.bf16.gmra.mrb[0].mxu0 %v1579
        %v1639 = vpop.f32.mrb[0].mxu0
        %v1640 = vadd.f32 %v1544, %v1639
        %v1641 = vpop.f32.mrb[0].mxu0
        %v1642 = vpop.f32.mrb[0].mxu0
        %v1643 = vadd.f32 %v1544, %v1642
        %v1644 = vpop.f32.mrb[0].mxu0
        %1645 = vdwg.mxu0
        %s1646 = scalar_lea.vmem %s4, 160
        %v1647 = vld [vmem:[%s1646] sm:$0xf]
        %v1648 = vld [vmem:[%s1646 + $0x4] sm:$0xf]
        %v1649 = vld [vmem:[%s1646 + $0x8] sm:$0xf]
        %v1650 = vld [vmem:[%s1646 + $0xc] sm:$0xf]
        %v1651 = vld [vmem:[%s1646 + $0x10] sm:$0xf]
        %v1652 = vld [vmem:[%s1646 + $0x14] sm:$0xf]
        %v1653 = vld [vmem:[%s1646 + $0x18] sm:$0xf]
        %v1654 = vld [vmem:[%s1646 + $0x1c] sm:$0xf]
        %v1655 = vld [vmem:[%s1447 + $0x2] sm:$0x1]
        %v1656 = vlaneseq
        %v1657 = vshrl.u32 %v1656, 7
        %v1658 = vsub.s32 0, %v1657
        %v1659 = vrot.slane %v1655, %v1658
        %v1668 = vunpack.c.l.b16 %v1647
        %v1669 = vunpack.c.l.b16 %v1648
        %v1670 = vunpack.c.l.b16 %v1649
        %v1671 = vunpack.c.l.b16 %v1650
        %v1672 = vunpack.c.l.b16 %v1651
        %v1673 = vunpack.c.l.b16 %v1652
        %v1674 = vunpack.c.l.b16 %v1653
        %v1675 = vunpack.c.l.b16 %v1654
        %v1676 = vpack.c.b16 %v1669, %v1668
        %v1677 = vpack.c.b16 %v1671, %v1670
        %v1678 = vpack.c.b16 %v1673, %v1672
        %v1679 = vpack.c.b16 %v1675, %v1674
        %1684 = vmatprep.subr.bf16.mxu0 0
        %1685 = vmatpush1.bf16.msra.mxu0 %v1676
        %1686 = vmatprep.subr.bf16.mxu0 0
        %1687 = vmatpush1.bf16.msra.mxu0 %v1677
        %1688 = vmatprep.subr.bf16.mxu0 0
        %1689 = vmatpush1.bf16.msra.mxu0 %v1678
        %1690 = vmatprep.subr.bf16.mxu0 0
        %1691 = vmatpush1.bf16.msra.mxu0 %v1679
        %1692 = vmatprep.subr.bf16.mxu0 0
        %1693 = vmatpush1.bf16.msra.mxu0 0
        %1694 = vmatprep.subr.bf16.mxu0 0
        %1695 = vmatpush1.bf16.msra.mxu0 0
        %1696 = vmatprep.subr.bf16.mxu0 0
        %1697 = vmatpush1.bf16.msra.mxu0 0
        %1698 = vmatprep.subr.bf16.mxu0 0
        %1699 = vmatpush1.bf16.msra.mxu0 0
        %1700 = vmatprep.subr.bf16.mxu0 0
        %1701 = vmatpush1.bf16.msra.mxu0 0
        %1702 = vmatprep.subr.bf16.mxu0 0
        %1703 = vmatpush1.bf16.msra.mxu0 0
        %1704 = vmatprep.subr.bf16.mxu0 0
        %1705 = vmatpush1.bf16.msra.mxu0 0
        %1706 = vmatprep.subr.bf16.mxu0 0
        %1707 = vmatpush1.bf16.msra.mxu0 0
        %1708 = vmatprep.subr.bf16.mxu0 0
        %1709 = vmatpush1.bf16.msra.mxu0 0
        %1710 = vmatprep.subr.bf16.mxu0 0
        %1711 = vmatpush1.bf16.msra.mxu0 0
        %1712 = vmatprep.subr.bf16.mxu0 0
        %1713 = vmatpush1.bf16.msra.mxu0 0
        %1714 = vmatprep.subr.bf16.mxu0 0
        %1715 = vmatpush1.bf16.msra.mxu0 0
        %1716 = vmatprep.mubr.bf16.mxu0 0
        %1717 = vmatmul.mubr.bf16.gmra.mrb[0].mxu0 %v1570
        %v1718 = vpop.f32.mrb[0].mxu0
        %v1719 = vadd.f32 %v1659, %v1718
        %v1720 = vpop.f32.mrb[0].mxu0
        %v1721 = vpop.f32.mrb[0].mxu0
        %v1722 = vadd.f32 %v1659, %v1721
        %v1723 = vpop.f32.mrb[0].mxu0
        %1724 = vmatprep.mubr.bf16.mxu0 0
        %1725 = vmatmul.mubr.bf16.gmra.mrb[0].mxu0 %v1573
        %v1726 = vpop.f32.mrb[0].mxu0
        %v1727 = vadd.f32 %v1659, %v1726
        %v1728 = vpop.f32.mrb[0].mxu0
        %v1729 = vpop.f32.mrb[0].mxu0
        %v1730 = vadd.f32 %v1659, %v1729
        %v1731 = vpop.f32.mrb[0].mxu0
        %1732 = vmatprep.mubr.bf16.mxu0 0
        %1733 = vmatmul.mubr.bf16.gmra.mrb[0].mxu0 %v1576
        %v1734 = vpop.f32.mrb[0].mxu0
        %v1735 = vadd.f32 %v1659, %v1734
        %v1736 = vpop.f32.mrb[0].mxu0
        %v1737 = vpop.f32.mrb[0].mxu0
        %v1738 = vadd.f32 %v1659, %v1737
        %v1739 = vpop.f32.mrb[0].mxu0
        %1740 = vmatprep.mubr.bf16.mxu0 0
        %1741 = vmatmul.mubr.bf16.gmra.mrb[0].mxu0 %v1579
        %v1742 = vpop.f32.mrb[0].mxu0
        %v1743 = vadd.f32 %v1659, %v1742
        %v1744 = vpop.f32.mrb[0].mxu0
        %v1745 = vpop.f32.mrb[0].mxu0
        %v1746 = vadd.f32 %v1659, %v1745
        %v1747 = vpop.f32.mrb[0].mxu0
        %1748 = vdwg.mxu0
        %v1749 = vpack.c.bf16 %v1521, %v1518
        %v1750 = vpack.c.bf16 %v1526, %v1526
        %v1751 = vpack.c.bf16 %v1619, %v1616
        %v1752 = vpack.c.bf16 %v1627, %v1624
        %v1753 = vpack.c.bf16 %v1635, %v1632
        %v1754 = vpack.c.bf16 %v1643, %v1640
        %v1756 = vsel %vm796, %v1749, 0
        %v1759 = vsel %vm796, %v1750, 0
        %v1762 = vsel %vm796, %v1751, 0
        %v1765 = vsel %vm796, %v1752, 0
        %v1768 = vsel %vm796, %v1753, 0
        %v1771 = vsel %vm796, %v1754, 0
        %1773 = vmatprep.subr.bf16.mxu0 0
        %1774 = vmatpush1.bf16.xpose.msra.mxu0 %v1762
        %1775 = vmatprep.subr.bf16.mxu0 0
        %1776 = vmatpush1.bf16.xpose.msra.mxu0 %v1765
        %1777 = vmatprep.subr.bf16.mxu0 0
        %1778 = vmatpush1.bf16.xpose.msra.mxu0 %v1768
        %1779 = vmatprep.subr.bf16.mxu0 0
        %1780 = vmatpush1.bf16.xpose.msra.mxu0 %v1771
        %1781 = vmatprep.subr.bf16.mxu0 0
        %1782 = vmatpush1.bf16.xpose.msra.mxu0 0
        %1783 = vmatprep.subr.bf16.mxu0 0
        %1784 = vmatpush1.bf16.xpose.msra.mxu0 0
        %1785 = vmatprep.subr.bf16.mxu0 0
        %1786 = vmatpush1.bf16.xpose.msra.mxu0 0
        %1787 = vmatprep.subr.bf16.mxu0 0
        %1788 = vmatpush1.bf16.xpose.msra.mxu0 0
        %1789 = vmatprep.subr.bf16.mxu0 0
        %1790 = vmatpush1.bf16.xpose.msra.mxu0 0
        %1791 = vmatprep.subr.bf16.mxu0 0
        %1792 = vmatpush1.bf16.xpose.msra.mxu0 0
        %1793 = vmatprep.subr.bf16.mxu0 0
        %1794 = vmatpush1.bf16.xpose.msra.mxu0 0
        %1795 = vmatprep.subr.bf16.mxu0 0
        %1796 = vmatpush1.bf16.xpose.msra.mxu0 0
        %1797 = vmatprep.subr.bf16.mxu0 0
        %1798 = vmatpush1.bf16.xpose.msra.mxu0 0
        %1799 = vmatprep.subr.bf16.mxu0 0
        %1800 = vmatpush1.bf16.xpose.msra.mxu0 0
        %1801 = vmatprep.subr.bf16.mxu0 0
        %1802 = vmatpush1.bf16.xpose.msra.mxu0 0
        %1803 = vmatprep.subr.bf16.mxu0 0
        %1804 = vmatpush1.bf16.xpose.msra.mxu0 0
        %1805 = vmatprep.mubr.bf16.mxu0 0
        %1806 = vmatmul.mubr.bf16.gmra.mrb[0].mxu0 %v1756
        %v1807 = vpop.f32.mrb[0].mxu0
        %v1808 = vadd.f32 0.0, %v1807
        %v1809 = vpop.f32.mrb[0].mxu0
        %v1810 = vpop.f32.mrb[0].mxu0
        %v1811 = vadd.f32 0.0, %v1810
        %v1812 = vpop.f32.mrb[0].mxu0
        %1813 = vmatprep.mubr.bf16.mxu0 0
        %1814 = vmatmul.mubr.bf16.gmra.mrb[0].mxu0 %v1759
        %v1815 = vpop.f32.mrb[0].mxu0
        %v1816 = vadd.f32 0.0, %v1815
        %v1817 = vpop.f32.mrb[0].mxu0
        %v1818 = vpop.f32.mrb[0].mxu0
        %v1819 = vpop.f32.mrb[0].mxu0
        %1820 = vdwg.mxu0
        %v1821 = vmul.f32 %v1808, 0.125
        %v1822 = vmul.f32 %v1811, 0.125
        %v1823 = vmul.f32 %v1816, 0.125
        %v1824 = vsel %vm796, %v1821, -inf
        %1825 = vmax.xlane.f32.xlu0 %v1824
        %v1826 = vpop.xlane.xlu0 %1825
        %v1827 = vsel %vm796, %v1822, -inf
        %1828 = vmax.xlane.f32.xlu0 %v1827
        %v1829 = vpop.xlane.xlu0 %1828
        %v1830 = vsel %vm796, %v1823, -inf
        %1831 = vmax.xlane.f32.xlu0 %v1830
        %v1832 = vpop.xlane.xlu0 %1831
        %v1833 = vsub.f32 %v1821, %v1826
        %v1834 = vsub.f32 %v1822, %v1829
        %v1835 = vsub.f32 %v1823, %v1832
        %v1836 = vmul.f32 %v1833, 1.442695
        %v1837 = vpow.pop %v1836
        %v1838 = vmul.f32 %v1834, 1.442695
        %v1839 = vpow.pop %v1838
        %v1840 = vmul.f32 %v1835, 1.442695
        %v1841 = vpow.pop %v1840
        %v1842 = vsel %vm796, %v1837, 0.0
        %1843 = vadd.xlane.f32.xlu0 %v1842
        %v1844 = vpop.xlane.xlu0 %1843
        %v1845 = vsel %vm796, %v1839, 0.0
        %1846 = vadd.xlane.f32.xlu0 %v1845
        %v1847 = vpop.xlane.xlu0 %1846
        %v1848 = vsel %vm796, %v1841, 0.0
        %1849 = vadd.xlane.f32.xlu0 %v1848
        %v1850 = vpop.xlane.xlu0 %1849
        %v1851 = vrcp.pop %v1844
        %v1852 = vrcp.pop %v1847
        %v1853 = vrcp.pop %v1850
        %v1854 = vmul.f32 %v1837, %v1851
        %v1855 = vmul.f32 %v1839, %v1852
        %v1856 = vmul.f32 %v1841, %v1853
        %v1857 = vpack.c.bf16 %v1855, %v1854
        %v1858 = vpack.c.bf16 %v1856, %v1856
        %v1859 = vpack.c.bf16 %v1722, %v1719
        %v1860 = vpack.c.bf16 %v1730, %v1727
        %v1861 = vpack.c.bf16 %v1738, %v1735
        %v1862 = vpack.c.bf16 %v1746, %v1743
        %v1864 = vsel %vm796, %v1857, 0
        %v1867 = vsel %vm796, %v1858, 0
        %1869 = vmatprep.subr.bf16.mxu0 0
        %1870 = vmatpush1.bf16.msra.mxu0 %v1859
        %1871 = vmatprep.subr.bf16.mxu0 0
        %1872 = vmatpush1.bf16.msra.mxu0 %v1860
        %1873 = vmatprep.subr.bf16.mxu0 0
        %1874 = vmatpush1.bf16.msra.mxu0 %v1861
        %1875 = vmatprep.subr.bf16.mxu0 0
        %1876 = vmatpush1.bf16.msra.mxu0 %v1862
        %1877 = vmatprep.subr.bf16.mxu0 0
        %1878 = vmatpush1.bf16.msra.mxu0 0
        %1879 = vmatprep.subr.bf16.mxu0 0
        %1880 = vmatpush1.bf16.msra.mxu0 0
        %1881 = vmatprep.subr.bf16.mxu0 0
        %1882 = vmatpush1.bf16.msra.mxu0 0
        %1883 = vmatprep.subr.bf16.mxu0 0
        %1884 = vmatpush1.bf16.msra.mxu0 0
        %1885 = vmatprep.subr.bf16.mxu0 0
        %1886 = vmatpush1.bf16.msra.mxu0 0
        %1887 = vmatprep.subr.bf16.mxu0 0
        %1888 = vmatpush1.bf16.msra.mxu0 0
        %1889 = vmatprep.subr.bf16.mxu0 0
        %1890 = vmatpush1.bf16.msra.mxu0 0
        %1891 = vmatprep.subr.bf16.mxu0 0
        %1892 = vmatpush1.bf16.msra.mxu0 0
        %1893 = vmatprep.subr.bf16.mxu0 0
        %1894 = vmatpush1.bf16.msra.mxu0 0
        %1895 = vmatprep.subr.bf16.mxu0 0
        %1896 = vmatpush1.bf16.msra.mxu0 0
        %1897 = vmatprep.subr.bf16.mxu0 0
        %1898 = vmatpush1.bf16.msra.mxu0 0
        %1899 = vmatprep.subr.bf16.mxu0 0
        %1900 = vmatpush1.bf16.msra.mxu0 0
        %1901 = vmatprep.mubr.bf16.mxu0 0
        %1902 = vmatmul.mubr.bf16.gmra.mrb[0].mxu0 %v1864
        %v1903 = vpop.f32.mrb[0].mxu0
        %v1904 = vadd.f32 0.0, %v1903
        %v1905 = vpop.f32.mrb[0].mxu0
        %v1906 = vpop.f32.mrb[0].mxu0
        %v1907 = vadd.f32 0.0, %v1906
        %v1908 = vpop.f32.mrb[0].mxu0
        %1909 = vmatprep.mubr.bf16.mxu0 0
        %1910 = vmatmul.mubr.bf16.gmra.mrb[0].mxu0 %v1867
        %v1911 = vpop.f32.mrb[0].mxu0
        %v1912 = vadd.f32 0.0, %v1911
        %v1913 = vpop.f32.mrb[0].mxu0
        %v1914 = vpop.f32.mrb[0].mxu0
        %v1915 = vpop.f32.mrb[0].mxu0
        %1916 = vdwg.mxu0
        %v1917 = vpack.c.bf16 %v1907, %v1904
        %v1918 = vpack.c.bf16 %v1912, %v1912
        %s1919 = scalar_lea.vmem [#allocation2], 32
        %v1920 = vld [vmem:[%s1919] sm:$0xf]
        %v1921 = vld [vmem:[%s1919 + $0x4] sm:$0xf]
        %v1922 = vld [vmem:[%s1919 + $0x8] sm:$0xf]
        %v1923 = vld [vmem:[%s1919 + $0xc] sm:$0xf]
        %v1924 = vld [vmem:[%s1919 + $0x10] sm:$0xf]
        %v1925 = vld [vmem:[%s1919 + $0x14] sm:$0xf]
        %v1926 = vld [vmem:[%s1919 + $0x18] sm:$0xf]
        %v1927 = vld [vmem:[%s1919 + $0x1c] sm:$0xf]
        %v1936 = vunpack.c.l.b16 %v1920
        %v1937 = vunpack.c.l.b16 %v1921
        %v1938 = vunpack.c.l.b16 %v1922
        %v1939 = vunpack.c.l.b16 %v1923
        %v1940 = vunpack.c.l.b16 %v1924
        %v1941 = vunpack.c.l.b16 %v1925
        %v1942 = vunpack.c.l.b16 %v1926
        %v1943 = vunpack.c.l.b16 %v1927
        %v1944 = vpack.c.b16 %v1937, %v1936
        %v1945 = vpack.c.b16 %v1939, %v1938
        %v1946 = vpack.c.b16 %v1941, %v1940
        %v1947 = vpack.c.b16 %v1943, %v1942
        %v1953 = vsel %vm796, %v1917, 0
        %v1956 = vsel %vm796, %v1918, 0
        %1958 = vmatprep.subr.bf16.mxu0 0
        %1959 = vmatpush1.bf16.msra.mxu0 %v1944
        %1960 = vmatprep.subr.bf16.mxu0 0
        %1961 = vmatpush1.bf16.msra.mxu0 %v1945
        %1962 = vmatprep.subr.bf16.mxu0 0
        %1963 = vmatpush1.bf16.msra.mxu0 %v1946
        %1964 = vmatprep.subr.bf16.mxu0 0
        %1965 = vmatpush1.bf16.msra.mxu0 %v1947
        %1966 = vmatprep.subr.bf16.mxu0 0
        %1967 = vmatpush1.bf16.msra.mxu0 0
        %1968 = vmatprep.subr.bf16.mxu0 0
        %1969 = vmatpush1.bf16.msra.mxu0 0
        %1970 = vmatprep.subr.bf16.mxu0 0
        %1971 = vmatpush1.bf16.msra.mxu0 0
        %1972 = vmatprep.subr.bf16.mxu0 0
        %1973 = vmatpush1.bf16.msra.mxu0 0
        %1974 = vmatprep.subr.bf16.mxu0 0
        %1975 = vmatpush1.bf16.msra.mxu0 0
        %1976 = vmatprep.subr.bf16.mxu0 0
        %1977 = vmatpush1.bf16.msra.mxu0 0
        %1978 = vmatprep.subr.bf16.mxu0 0
        %1979 = vmatpush1.bf16.msra.mxu0 0
        %1980 = vmatprep.subr.bf16.mxu0 0
        %1981 = vmatpush1.bf16.msra.mxu0 0
        %1982 = vmatprep.subr.bf16.mxu0 0
        %1983 = vmatpush1.bf16.msra.mxu0 0
        %1984 = vmatprep.subr.bf16.mxu0 0
        %1985 = vmatpush1.bf16.msra.mxu0 0
        %1986 = vmatprep.subr.bf16.mxu0 0
        %1987 = vmatpush1.bf16.msra.mxu0 0
        %1988 = vmatprep.subr.bf16.mxu0 0
        %1989 = vmatpush1.bf16.msra.mxu0 0
        %1990 = vmatprep.mubr.bf16.mxu0 0
        %1991 = vmatmul.mubr.bf16.gmra.mrb[0].mxu0 %v1953
        %v1992 = vpop.f32.mrb[0].mxu0
        %v1993 = vadd.f32 0.0, %v1992
        %v1994 = vpop.f32.mrb[0].mxu0
        %v1995 = vpop.f32.mrb[0].mxu0
        %v1996 = vadd.f32 0.0, %v1995
        %v1997 = vpop.f32.mrb[0].mxu0
        %1998 = vmatprep.mubr.bf16.mxu0 0
        %1999 = vmatmul.mubr.bf16.gmra.mrb[0].mxu0 %v1956
        %v2000 = vpop.f32.mrb[0].mxu0
        %v2001 = vadd.f32 0.0, %v2000
        %v2002 = vpop.f32.mrb[0].mxu0
        %v2003 = vpop.f32.mrb[0].mxu0
        %v2004 = vpop.f32.mrb[0].mxu0
        %2005 = vdwg.mxu0
        %v2006 = vadd.f32 %v1378, %v1993
        %v2007 = vadd.f32 %v1379, %v1996
        %v2008 = vadd.f32 %v1380, %v2001
        %v2009 = vld [vmem:[%s7 + $0x1] sm:$0x1]
        %v2010 = vlaneseq
        %v2011 = vshrl.u32 %v2010, 7
        %v2012 = vsub.s32 0, %v2011
        %v2013 = vrot.slane %v2009, %v2012
        %v2014 = vadd.f32 %v2006, %v2013
        %v2015 = vadd.f32 %v2007, %v2013
        %v2016 = vadd.f32 %v2008, %v2013
        %v2017 = vld [vmem:[%s8 + $0x2] sm:$0x1]
        %v2018 = vld [vmem:[%s9 + $0x2] sm:$0x1]
        %v2019 = vsel %vm796, %v2014, 0.0
        %2020 = vadd.xlane.f32.xlu0 %v2019
        %v2021 = vpop.xlane.xlu0 %2020
        %v2022 = vsel %vm796, %v2015, 0.0
        %2023 = vadd.xlane.f32.xlu0 %v2022
        %v2024 = vpop.xlane.xlu0 %2023
        %v2025 = vsel %vm796, %v2016, 0.0
        %2026 = vadd.xlane.f32.xlu0 %v2025
        %v2027 = vpop.xlane.xlu0 %2026
        %v2028 = vmul.f32 %v2021, %v806
        %v2029 = vmul.f32 %v2024, %v806
        %v2030 = vmul.f32 %v2027, %v806
        %v2031 = vsub.f32 %v2014, %v2028
        %v2032 = vsub.f32 %v2015, %v2029
        %v2033 = vsub.f32 %v2016, %v2030
        %v2034 = vmul.f32 %v2031, %v2031
        %v2035 = vmul.f32 %v2032, %v2032
        %v2036 = vmul.f32 %v2033, %v2033
        %v2037 = vsel %vm796, %v2034, 0.0
        %2038 = vadd.xlane.f32.xlu0 %v2037
        %v2039 = vpop.xlane.xlu0 %2038
        %v2040 = vsel %vm796, %v2035, 0.0
        %2041 = vadd.xlane.f32.xlu0 %v2040
        %v2042 = vpop.xlane.xlu0 %2041
        %v2043 = vsel %vm796, %v2036, 0.0
        %2044 = vadd.xlane.f32.xlu0 %v2043
        %v2045 = vpop.xlane.xlu0 %2044
        %v2046 = vmul.f32 %v2039, %v806
        %v2047 = vmul.f32 %v2042, %v806
        %v2048 = vmul.f32 %v2045, %v806
        %v2049 = vadd.f32 %v2046, 1e-05
        %v2050 = vadd.f32 %v2047, 1e-05
        %v2051 = vadd.f32 %v2048, 1e-05
        %v2052 = vrsqrt.pop %v2049
        %v2053 = vrsqrt.pop %v2050
        %v2054 = vrsqrt.pop %v2051
        %v2055 = vmul.f32 %v2031, %v2052
        %v2056 = vmul.f32 %v2032, %v2053
        %v2057 = vmul.f32 %v2033, %v2054
        %v2058 = vlaneseq
        %v2059 = vshrl.u32 %v2058, 7
        %v2060 = vsub.s32 0, %v2059
        %v2061 = vrot.slane %v2017, %v2060
        %v2062 = vmul.f32 %v2055, %v2061
        %v2063 = vmul.f32 %v2056, %v2061
        %v2064 = vmul.f32 %v2057, %v2061
        %v2065 = vlaneseq
        %v2066 = vshrl.u32 %v2065, 7
        %v2067 = vsub.s32 0, %v2066
        %v2068 = vrot.slane %v2018, %v2067
        %v2069 = vadd.f32 %v2062, %v2068
        %v2070 = vadd.f32 %v2063, %v2068
        %v2071 = vadd.f32 %v2064, %v2068
        %v2072 = vpack.c.bf16 %v2070, %v2069
        %v2073 = vpack.c.bf16 %v2071, %v2071
        %v2074 = vld [vmem:[#allocation5] sm:$0xff]
        %v2075 = vld [vmem:[#allocation5 + $0x8] sm:$0xff]
        %v2076 = vld [vmem:[#allocation5 + $0x10] sm:$0xff]
        %v2077 = vld [vmem:[#allocation5 + $0x18] sm:$0xff]
        %v2078 = vld [vmem:[#allocation5 + $0x20] sm:$0xff]
        %v2079 = vld [vmem:[#allocation5 + $0x28] sm:$0xff]
        %v2080 = vld [vmem:[#allocation5 + $0x30] sm:$0xff]
        %v2081 = vld [vmem:[#allocation5 + $0x38] sm:$0xff]
        %v2082 = vld [vmem:[%s11] ss:$2 sm:$0x3]
        %v2084 = vlaneseq
        %v2085 = vshrl.u32 %v2084, 7
        %v2086 = vsub.s32 0, %v2085
        %v2087 = vrot.slane %v2082, %v2086
        %v2088 = vlaneseq
        %v2089 = vshrl.u32 %v2088, 7
        %v2090 = vsub.s32 1, %v2089
        %v2091 = vrot.slane %v2082, %v2090
        %v2102 = vunpack.c.l.b16 %v2074
        %v2103 = vunpack.c.h.b16 %v2074
        %v2104 = vunpack.c.l.b16 %v2075
        %v2105 = vunpack.c.h.b16 %v2075
        %v2106 = vunpack.c.l.b16 %v2076
        %v2107 = vunpack.c.h.b16 %v2076
        %v2108 = vunpack.c.l.b16 %v2077
        %v2109 = vunpack.c.h.b16 %v2077
        %v2110 = vunpack.c.l.b16 %v2078
        %v2111 = vunpack.c.h.b16 %v2078
        %v2112 = vunpack.c.l.b16 %v2079
        %v2113 = vunpack.c.h.b16 %v2079
        %v2114 = vunpack.c.l.b16 %v2080
        %v2115 = vunpack.c.h.b16 %v2080
        %v2116 = vunpack.c.l.b16 %v2081
        %v2117 = vunpack.c.h.b16 %v2081
        %v2118 = vpack.c.b16 %v2104, %v2102
        %v2119 = vpack.c.b16 %v2105, %v2103
        %v2120 = vpack.c.b16 %v2108, %v2106
        %v2121 = vpack.c.b16 %v2109, %v2107
        %v2122 = vpack.c.b16 %v2112, %v2110
        %v2123 = vpack.c.b16 %v2113, %v2111
        %v2124 = vpack.c.b16 %v2116, %v2114
        %v2125 = vpack.c.b16 %v2117, %v2115
        %v2135 = vsel %vm796, %v2072, 0
        %v2138 = vsel %vm796, %v2073, 0
        %2140 = vmatprep.subr.bf16.mxu0 %v2119
        %2141 = vmatpush1.bf16.msra.mxu0 %v2118
        %2142 = vmatprep.subr.bf16.mxu0 %v2121
        %2143 = vmatpush1.bf16.msra.mxu0 %v2120
        %2144 = vmatprep.subr.bf16.mxu0 %v2123
        %2145 = vmatpush1.bf16.msra.mxu0 %v2122
        %2146 = vmatprep.subr.bf16.mxu0 %v2125
        %2147 = vmatpush1.bf16.msra.mxu0 %v2124
        %2148 = vmatprep.subr.bf16.mxu0 0
        %2149 = vmatpush1.bf16.msra.mxu0 0
        %2150 = vmatprep.subr.bf16.mxu0 0
        %2151 = vmatpush1.bf16.msra.mxu0 0
        %2152 = vmatprep.subr.bf16.mxu0 0
        %2153 = vmatpush1.bf16.msra.mxu0 0
        %2154 = vmatprep.subr.bf16.mxu0 0
        %2155 = vmatpush1.bf16.msra.mxu0 0
        %2156 = vmatprep.subr.bf16.mxu0 0
        %2157 = vmatpush1.bf16.msra.mxu0 0
        %2158 = vmatprep.subr.bf16.mxu0 0
        %2159 = vmatpush1.bf16.msra.mxu0 0
        %2160 = vmatprep.subr.bf16.mxu0 0
        %2161 = vmatpush1.bf16.msra.mxu0 0
        %2162 = vmatprep.subr.bf16.mxu0 0
        %2163 = vmatpush1.bf16.msra.mxu0 0
        %2164 = vmatprep.subr.bf16.mxu0 0
        %2165 = vmatpush1.bf16.msra.mxu0 0
        %2166 = vmatprep.subr.bf16.mxu0 0
        %2167 = vmatpush1.bf16.msra.mxu0 0
        %2168 = vmatprep.subr.bf16.mxu0 0
        %2169 = vmatpush1.bf16.msra.mxu0 0
        %2170 = vmatprep.subr.bf16.mxu0 0
        %2171 = vmatpush1.bf16.msra.mxu0 0
        %2172 = vmatprep.mubr.bf16.mxu0 0
        %2173 = vmatmul.mubr.bf16.gmra.mrb[0].mxu0 %v2135
        %v2174 = vpop.f32.mrb[0].mxu0
        %v2175 = vadd.f32 %v2087, %v2174
        %v2176 = vpop.f32.mrb[0].mxu0
        %v2177 = vadd.f32 %v2091, %v2176
        %v2178 = vpop.f32.mrb[0].mxu0
        %v2179 = vadd.f32 %v2087, %v2178
        %v2180 = vpop.f32.mrb[0].mxu0
        %v2181 = vadd.f32 %v2091, %v2180
        %2182 = vmatprep.mubr.bf16.mxu0 0
        %2183 = vmatmul.mubr.bf16.gmra.mrb[0].mxu0 %v2138
        %v2184 = vpop.f32.mrb[0].mxu0
        %v2185 = vadd.f32 %v2087, %v2184
        %v2186 = vpop.f32.mrb[0].mxu0
        %v2187 = vadd.f32 %v2091, %v2186
        %v2188 = vpop.f32.mrb[0].mxu0
        %v2189 = vpop.f32.mrb[0].mxu0
        %2190 = vdwg.mxu0
        %v2191 = vmax.f32 %v2175, 0.0
        %v2192 = vmax.f32 %v2177, 0.0
        %v2193 = vmax.f32 %v2179, 0.0
        %v2194 = vmax.f32 %v2181, 0.0
        %v2195 = vmax.f32 %v2185, 0.0
        %v2196 = vmax.f32 %v2187, 0.0
        %v2197 = vpack.c.bf16 %v2193, %v2191
        %v2198 = vpack.c.bf16 %v2194, %v2192
        %v2199 = vpack.c.bf16 %v2195, %v2195
        %v2200 = vpack.c.bf16 %v2196, %v2196
        %v2201 = vld [vmem:[%s12] sm:$0xf]
        %v2202 = vld [vmem:[%s12 + $0x4] sm:$0xf]
        %v2203 = vld [vmem:[%s12 + $0x8] sm:$0xf]
        %v2204 = vld [vmem:[%s12 + $0xc] sm:$0xf]
        %v2205 = vld [vmem:[%s12 + $0x10] sm:$0xf]
        %v2206 = vld [vmem:[%s12 + $0x14] sm:$0xf]
        %v2207 = vld [vmem:[%s12 + $0x18] sm:$0xf]
        %v2208 = vld [vmem:[%s12 + $0x1c] sm:$0xf]
        %v2209 = vld [vmem:[%s12 + $0x20] sm:$0xf]
        %v2210 = vld [vmem:[%s12 + $0x24] sm:$0xf]
        %v2211 = vld [vmem:[%s12 + $0x28] sm:$0xf]
        %v2212 = vld [vmem:[%s12 + $0x2c] sm:$0xf]
        %v2213 = vld [vmem:[%s12 + $0x30] sm:$0xf]
        %v2214 = vld [vmem:[%s12 + $0x34] sm:$0xf]
        %v2215 = vld [vmem:[%s12 + $0x38] sm:$0xf]
        %v2216 = vld [vmem:[%s12 + $0x3c] sm:$0xf]
        %v2217 = vld [vmem:[%s12 + $0x40] sm:$0xf]
        %v2218 = vld [vmem:[%s12 + $0x44] sm:$0xf]
        %v2219 = vld [vmem:[%s12 + $0x48] sm:$0xf]
        %v2220 = vld [vmem:[%s12 + $0x4c] sm:$0xf]
        %v2221 = vld [vmem:[%s12 + $0x50] sm:$0xf]
        %v2222 = vld [vmem:[%s12 + $0x54] sm:$0xf]
        %v2223 = vld [vmem:[%s12 + $0x58] sm:$0xf]
        %v2224 = vld [vmem:[%s12 + $0x5c] sm:$0xf]
        %v2225 = vld [vmem:[%s12 + $0x60] sm:$0xf]
        %v2226 = vld [vmem:[%s12 + $0x64] sm:$0xf]
        %v2227 = vld [vmem:[%s12 + $0x68] sm:$0xf]
        %v2228 = vld [vmem:[%s12 + $0x6c] sm:$0xf]
        %v2229 = vld [vmem:[%s12 + $0x70] sm:$0xf]
        %v2230 = vld [vmem:[%s12 + $0x74] sm:$0xf]
        %v2231 = vld [vmem:[%s12 + $0x78] sm:$0xf]
        %v2232 = vld [vmem:[%s12 + $0x7c] sm:$0xf]
        %v2265 = vunpack.c.l.b16 %v2201
        %v2266 = vunpack.c.l.b16 %v2202
        %v2267 = vunpack.c.l.b16 %v2203
        %v2268 = vunpack.c.l.b16 %v2204
        %v2269 = vunpack.c.l.b16 %v2205
        %v2270 = vunpack.c.l.b16 %v2206
        %v2271 = vunpack.c.l.b16 %v2207
        %v2272 = vunpack.c.l.b16 %v2208
        %v2273 = vunpack.c.l.b16 %v2209
        %v2274 = vunpack.c.l.b16 %v2210
        %v2275 = vunpack.c.l.b16 %v2211
        %v2276 = vunpack.c.l.b16 %v2212
        %v2277 = vunpack.c.l.b16 %v2213
        %v2278 = vunpack.c.l.b16 %v2214
        %v2279 = vunpack.c.l.b16 %v2215
        %v2280 = vunpack.c.l.b16 %v2216
        %v2281 = vunpack.c.l.b16 %v2217
        %v2282 = vunpack.c.l.b16 %v2218
        %v2283 = vunpack.c.l.b16 %v2219
        %v2284 = vunpack.c.l.b16 %v2220
        %v2285 = vunpack.c.l.b16 %v2221
        %v2286 = vunpack.c.l.b16 %v2222
        %v2287 = vunpack.c.l.b16 %v2223
        %v2288 = vunpack.c.l.b16 %v2224
        %v2289 = vunpack.c.l.b16 %v2225
        %v2290 = vunpack.c.l.b16 %v2226
        %v2291 = vunpack.c.l.b16 %v2227
        %v2292 = vunpack.c.l.b16 %v2228
        %v2293 = vunpack.c.l.b16 %v2229
        %v2294 = vunpack.c.l.b16 %v2230
        %v2295 = vunpack.c.l.b16 %v2231
        %v2296 = vunpack.c.l.b16 %v2232
        %v2297 = vpack.c.b16 %v2266, %v2265
        %v2298 = vpack.c.b16 %v2268, %v2267
        %v2299 = vpack.c.b16 %v2270, %v2269
        %v2300 = vpack.c.b16 %v2272, %v2271
        %v2301 = vpack.c.b16 %v2274, %v2273
        %v2302 = vpack.c.b16 %v2276, %v2275
        %v2303 = vpack.c.b16 %v2278, %v2277
        %v2304 = vpack.c.b16 %v2280, %v2279
        %v2305 = vpack.c.b16 %v2282, %v2281
        %v2306 = vpack.c.b16 %v2284, %v2283
        %v2307 = vpack.c.b16 %v2286, %v2285
        %v2308 = vpack.c.b16 %v2288, %v2287
        %v2309 = vpack.c.b16 %v2290, %v2289
        %v2310 = vpack.c.b16 %v2292, %v2291
        %v2311 = vpack.c.b16 %v2294, %v2293
        %v2312 = vpack.c.b16 %v2296, %v2295
        %2329 = vmatprep.subr.bf16.mxu0 0
        %2330 = vmatpush1.bf16.msra.mxu0 %v2297
        %2331 = vmatprep.subr.bf16.mxu0 0
        %2332 = vmatpush1.bf16.msra.mxu0 %v2298
        %2333 = vmatprep.subr.bf16.mxu0 0
        %2334 = vmatpush1.bf16.msra.mxu0 %v2299
        %2335 = vmatprep.subr.bf16.mxu0 0
        %2336 = vmatpush1.bf16.msra.mxu0 %v2300
        %2337 = vmatprep.subr.bf16.mxu0 0
        %2338 = vmatpush1.bf16.msra.mxu0 %v2301
        %2339 = vmatprep.subr.bf16.mxu0 0
        %2340 = vmatpush1.bf16.msra.mxu0 %v2302
        %2341 = vmatprep.subr.bf16.mxu0 0
        %2342 = vmatpush1.bf16.msra.mxu0 %v2303
        %2343 = vmatprep.subr.bf16.mxu0 0
        %2344 = vmatpush1.bf16.msra.mxu0 %v2304
        %2345 = vmatprep.subr.bf16.mxu0 0
        %2346 = vmatpush1.bf16.msra.mxu0 %v2305
        %2347 = vmatprep.subr.bf16.mxu0 0
        %2348 = vmatpush1.bf16.msra.mxu0 %v2306
        %2349 = vmatprep.subr.bf16.mxu0 0
        %2350 = vmatpush1.bf16.msra.mxu0 %v2307
        %2351 = vmatprep.subr.bf16.mxu0 0
        %2352 = vmatpush1.bf16.msra.mxu0 %v2308
        %2353 = vmatprep.subr.bf16.mxu0 0
        %2354 = vmatpush1.bf16.msra.mxu0 %v2309
        %2355 = vmatprep.subr.bf16.mxu0 0
        %2356 = vmatpush1.bf16.msra.mxu0 %v2310
        %2357 = vmatprep.subr.bf16.mxu0 0
        %2358 = vmatpush1.bf16.msra.mxu0 %v2311
        %2359 = vmatprep.subr.bf16.mxu0 0
        %2360 = vmatpush1.bf16.msra.mxu0 %v2312
        %2361 = vmatprep.mubr.bf16.mxu0 %v2198
        %2362 = vmatmul.mubr.bf16.gmra.mrb[0].mxu0 %v2197
        %v2363 = vpop.f32.mrb[0].mxu0
        %v2364 = vadd.f32 0.0, %v2363
        %v2365 = vpop.f32.mrb[0].mxu0
        %v2366 = vpop.f32.mrb[0].mxu0
        %v2367 = vadd.f32 0.0, %v2366
        %v2368 = vpop.f32.mrb[0].mxu0
        %2369 = vmatprep.mubr.bf16.mxu0 %v2200
        %2370 = vmatmul.mubr.bf16.gmra.mrb[0].mxu0 %v2199
        %v2371 = vpop.f32.mrb[0].mxu0
        %v2372 = vadd.f32 0.0, %v2371
        %v2373 = vpop.f32.mrb[0].mxu0
        %v2374 = vpop.f32.mrb[0].mxu0
        %v2375 = vpop.f32.mrb[0].mxu0
        %2376 = vdwg.mxu0
        %v2377 = vadd.f32 %v2014, %v2364
        %v2378 = vadd.f32 %v2015, %v2367
        %v2379 = vadd.f32 %v2016, %v2372
        %v2380 = vld [vmem:[%s13] sm:$0x1]
        %v2381 = vlaneseq
        %v2382 = vshrl.u32 %v2381, 7
        %v2383 = vsub.s32 0, %v2382
        %v2384 = vrot.slane %v2380, %v2383
        %v2385 = vadd.f32 %v2377, %v2384
        %v2386 = vadd.f32 %v2378, %v2384
        %v2387 = vadd.f32 %v2379, %v2384
        %s2388 = scalar_lea.vmem %s8, 4
        %v2389 = vld [vmem:[%s2388] sm:$0x1]
        %s2390 = scalar_lea.vmem %s9, 4
        %v2391 = vld [vmem:[%s2390] sm:$0x1]
        %v2392 = vsel %vm796, %v2385, 0.0
        %2393 = vadd.xlane.f32.xlu0 %v2392
        %v2394 = vpop.xlane.xlu0 %2393
        %v2395 = vsel %vm796, %v2386, 0.0
        %2396 = vadd.xlane.f32.xlu0 %v2395
        %v2397 = vpop.xlane.xlu0 %2396
        %v2398 = vsel %vm796, %v2387, 0.0
        %2399 = vadd.xlane.f32.xlu0 %v2398
        %v2400 = vpop.xlane.xlu0 %2399
        %v2401 = vmul.f32 %v2394, %v806
        %v2402 = vmul.f32 %v2397, %v806
        %v2403 = vmul.f32 %v2400, %v806
        %v2404 = vsub.f32 %v2385, %v2401
        %v2405 = vsub.f32 %v2386, %v2402
        %v2406 = vsub.f32 %v2387, %v2403
        %v2407 = vmul.f32 %v2404, %v2404
        %v2408 = vmul.f32 %v2405, %v2405
        %v2409 = vmul.f32 %v2406, %v2406
        %v2410 = vsel %vm796, %v2407, 0.0
        %2411 = vadd.xlane.f32.xlu0 %v2410
        %v2412 = vpop.xlane.xlu0 %2411
        %v2413 = vsel %vm796, %v2408, 0.0
        %2414 = vadd.xlane.f32.xlu0 %v2413
        %v2415 = vpop.xlane.xlu0 %2414
        %v2416 = vsel %vm796, %v2409, 0.0
        %2417 = vadd.xlane.f32.xlu0 %v2416
        %v2418 = vpop.xlane.xlu0 %2417
        %v2419 = vmul.f32 %v2412, %v806
        %v2420 = vmul.f32 %v2415, %v806
        %v2421 = vmul.f32 %v2418, %v806
        %v2422 = vadd.f32 %v2419, 1e-05
        %v2423 = vadd.f32 %v2420, 1e-05
        %v2424 = vadd.f32 %v2421, 1e-05
        %v2425 = vrsqrt.pop %v2422
        %v2426 = vrsqrt.pop %v2423
        %v2427 = vrsqrt.pop %v2424
        %v2428 = vmul.f32 %v2404, %v2425
        %v2429 = vmul.f32 %v2405, %v2426
        %v2430 = vmul.f32 %v2406, %v2427
        %v2431 = vlaneseq
        %v2432 = vshrl.u32 %v2431, 7
        %v2433 = vsub.s32 0, %v2432
        %v2434 = vrot.slane %v2389, %v2433
        %v2435 = vmul.f32 %v2428, %v2434
        %v2436 = vmul.f32 %v2429, %v2434
        %v2437 = vmul.f32 %v2430, %v2434
        %v2438 = vlaneseq
        %v2439 = vshrl.u32 %v2438, 7
        %v2440 = vsub.s32 0, %v2439
        %v2441 = vrot.slane %v2391, %v2440
        %v2442 = vadd.f32 %v2435, %v2441
        %v2443 = vadd.f32 %v2436, %v2441
        %v2444 = vadd.f32 %v2437, %v2441
        %v2445 = vpack.c.bf16 %v2443, %v2442
        %v2446 = vpack.c.bf16 %v2444, %v2444
        %s2447 = scalar_lea.vmem %s4, 192
        %v2448 = vld [vmem:[%s2447] sm:$0xf]
        %v2449 = vld [vmem:[%s2447 + $0x4] sm:$0xf]
        %v2450 = vld [vmem:[%s2447 + $0x8] sm:$0xf]
        %v2451 = vld [vmem:[%s2447 + $0xc] sm:$0xf]
        %v2452 = vld [vmem:[%s2447 + $0x10] sm:$0xf]
        %v2453 = vld [vmem:[%s2447 + $0x14] sm:$0xf]
        %v2454 = vld [vmem:[%s2447 + $0x18] sm:$0xf]
        %v2455 = vld [vmem:[%s2447 + $0x1c] sm:$0xf]
        %s2456 = scalar_lea.vmem %s5, 8
        %v2457 = vld [vmem:[%s2456] sm:$0x1]
        %v2458 = vlaneseq
        %v2459 = vshrl.u32 %v2458, 7
        %v2460 = vsub.s32 0, %v2459
        %v2461 = vrot.slane %v2457, %v2460
        %v2470 = vunpack.c.l.b16 %v2448
        %v2471 = vunpack.c.l.b16 %v2449
        %v2472 = vunpack.c.l.b16 %v2450
        %v2473 = vunpack.c.l.b16 %v2451
        %v2474 = vunpack.c.l.b16 %v2452
        %v2475 = vunpack.c.l.b16 %v2453
        %v2476 = vunpack.c.l.b16 %v2454
        %v2477 = vunpack.c.l.b16 %v2455
        %v2478 = vpack.c.b16 %v2471, %v2470
        %v2479 = vpack.c.b16 %v2473, %v2472
        %v2480 = vpack.c.b16 %v2475, %v2474
        %v2481 = vpack.c.b16 %v2477, %v2476
        %v2487 = vsel %vm796, %v2445, 0
        %v2490 = vsel %vm796, %v2446, 0
        %2492 = vmatprep.subr.bf16.mxu0 0
        %2493 = vmatpush1.bf16.msra.mxu0 %v2478
        %2494 = vmatprep.subr.bf16.mxu0 0
        %2495 = vmatpush1.bf16.msra.mxu0 %v2479
        %2496 = vmatprep.subr.bf16.mxu0 0
        %2497 = vmatpush1.bf16.msra.mxu0 %v2480
        %2498 = vmatprep.subr.bf16.mxu0 0
        %2499 = vmatpush1.bf16.msra.mxu0 %v2481
        %2500 = vmatprep.subr.bf16.mxu0 0
        %2501 = vmatpush1.bf16.msra.mxu0 0
        %2502 = vmatprep.subr.bf16.mxu0 0
        %2503 = vmatpush1.bf16.msra.mxu0 0
        %2504 = vmatprep.subr.bf16.mxu0 0
        %2505 = vmatpush1.bf16.msra.mxu0 0
        %2506 = vmatprep.subr.bf16.mxu0 0
        %2507 = vmatpush1.bf16.msra.mxu0 0
        %2508 = vmatprep.subr.bf16.mxu0 0
        %2509 = vmatpush1.bf16.msra.mxu0 0
        %2510 = vmatprep.subr.bf16.mxu0 0
        %2511 = vmatpush1.bf16.msra.mxu0 0
        %2512 = vmatprep.subr.bf16.mxu0 0
        %2513 = vmatpush1.bf16.msra.mxu0 0
        %2514 = vmatprep.subr.bf16.mxu0 0
        %2515 = vmatpush1.bf16.msra.mxu0 0
        %2516 = vmatprep.subr.bf16.mxu0 0
        %2517 = vmatpush1.bf16.msra.mxu0 0
        %2518 = vmatprep.subr.bf16.mxu0 0
        %2519 = vmatpush1.bf16.msra.mxu0 0
        %2520 = vmatprep.subr.bf16.mxu0 0
        %2521 = vmatpush1.bf16.msra.mxu0 0
        %2522 = vmatprep.subr.bf16.mxu0 0
        %2523 = vmatpush1.bf16.msra.mxu0 0
        %2524 = vmatprep.mubr.bf16.mxu0 0
        %2525 = vmatmul.mubr.bf16.gmra.mrb[0].mxu0 %v2487
        %v2526 = vpop.f32.mrb[0].mxu0
        %v2527 = vadd.f32 %v2461, %v2526
        %v2528 = vpop.f32.mrb[0].mxu0
        %v2529 = vpop.f32.mrb[0].mxu0
        %v2530 = vadd.f32 %v2461, %v2529
        %v2531 = vpop.f32.mrb[0].mxu0
        %2532 = vmatprep.mubr.bf16.mxu0 0
        %2533 = vmatmul.mubr.bf16.gmra.mrb[0].mxu0 %v2490
        %v2534 = vpop.f32.mrb[0].mxu0
        %v2535 = vadd.f32 %v2461, %v2534
        %v2536 = vpop.f32.mrb[0].mxu0
        %v2537 = vpop.f32.mrb[0].mxu0
        %v2538 = vpop.f32.mrb[0].mxu0
        %2539 = vdwg.mxu0
        %s2540 = scalar_lea.vmem %s4, 224
        %v2541 = vld [vmem:[%s2540] sm:$0xf]
        %v2542 = vld [vmem:[%s2540 + $0x4] sm:$0xf]
        %v2543 = vld [vmem:[%s2540 + $0x8] sm:$0xf]
        %v2544 = vld [vmem:[%s2540 + $0xc] sm:$0xf]
        %v2545 = vld [vmem:[%s2540 + $0x10] sm:$0xf]
        %v2546 = vld [vmem:[%s2540 + $0x14] sm:$0xf]
        %v2547 = vld [vmem:[%s2540 + $0x18] sm:$0xf]
        %v2548 = vld [vmem:[%s2540 + $0x1c] sm:$0xf]
        %v2549 = vld [vmem:[%s2456 + $0x1] sm:$0x1]
        %v2550 = vlaneseq
        %v2551 = vshrl.u32 %v2550, 7
        %v2552 = vsub.s32 0, %v2551
        %v2553 = vrot.slane %v2549, %v2552
        %v2562 = vunpack.c.l.b16 %v2541
        %v2563 = vunpack.c.l.b16 %v2542
        %v2564 = vunpack.c.l.b16 %v2543
        %v2565 = vunpack.c.l.b16 %v2544
        %v2566 = vunpack.c.l.b16 %v2545
        %v2567 = vunpack.c.l.b16 %v2546
        %v2568 = vunpack.c.l.b16 %v2547
        %v2569 = vunpack.c.l.b16 %v2548
        %v2570 = vpack.c.b16 %v2563, %v2562
        %v2571 = vpack.c.b16 %v2565, %v2564
        %v2572 = vpack.c.b16 %v2567, %v2566
        %v2573 = vpack.c.b16 %v2569, %v2568
        %2578 = vmatprep.subr.bf16.mxu0 0
        %2579 = vmatpush1.bf16.msra.mxu0 %v2570
        %2580 = vmatprep.subr.bf16.mxu0 0
        %2581 = vmatpush1.bf16.msra.mxu0 %v2571
        %2582 = vmatprep.subr.bf16.mxu0 0
        %2583 = vmatpush1.bf16.msra.mxu0 %v2572
        %2584 = vmatprep.subr.bf16.mxu0 0
        %2585 = vmatpush1.bf16.msra.mxu0 %v2573
        %2586 = vmatprep.subr.bf16.mxu0 0
        %2587 = vmatpush1.bf16.msra.mxu0 0
        %2588 = vmatprep.subr.bf16.mxu0 0
        %2589 = vmatpush1.bf16.msra.mxu0 0
        %2590 = vmatprep.subr.bf16.mxu0 0
        %2591 = vmatpush1.bf16.msra.mxu0 0
        %2592 = vmatprep.subr.bf16.mxu0 0
        %2593 = vmatpush1.bf16.msra.mxu0 0
        %2594 = vmatprep.subr.bf16.mxu0 0
        %2595 = vmatpush1.bf16.msra.mxu0 0
        %2596 = vmatprep.subr.bf16.mxu0 0
        %2597 = vmatpush1.bf16.msra.mxu0 0
        %2598 = vmatprep.subr.bf16.mxu0 0
        %2599 = vmatpush1.bf16.msra.mxu0 0
        %2600 = vmatprep.subr.bf16.mxu0 0
        %2601 = vmatpush1.bf16.msra.mxu0 0
        %2602 = vmatprep.subr.bf16.mxu0 0
        %2603 = vmatpush1.bf16.msra.mxu0 0
        %2604 = vmatprep.subr.bf16.mxu0 0
        %2605 = vmatpush1.bf16.msra.mxu0 0
        %2606 = vmatprep.subr.bf16.mxu0 0
        %2607 = vmatpush1.bf16.msra.mxu0 0
        %2608 = vmatprep.subr.bf16.mxu0 0
        %2609 = vmatpush1.bf16.msra.mxu0 0
        %2610 = vmatprep.mubr.bf16.mxu0 0
        %2611 = vmatmul.mubr.bf16.gmra.mrb[0].mxu0 %v2487
        %v2612 = vpop.f32.mrb[0].mxu0
        %v2613 = vadd.f32 %v2553, %v2612
        %v2614 = vpop.f32.mrb[0].mxu0
        %v2615 = vpop.f32.mrb[0].mxu0
        %v2616 = vadd.f32 %v2553, %v2615
        %v2617 = vpop.f32.mrb[0].mxu0
        %2618 = vmatprep.mubr.bf16.mxu0 0
        %2619 = vmatmul.mubr.bf16.gmra.mrb[0].mxu0 %v2490
        %v2620 = vpop.f32.mrb[0].mxu0
        %v2621 = vadd.f32 %v2553, %v2620
        %v2622 = vpop.f32.mrb[0].mxu0
        %v2623 = vpop.f32.mrb[0].mxu0
        %v2624 = vpop.f32.mrb[0].mxu0
        %2625 = vdwg.mxu0
        %s2626 = scalar_lea.vmem %s4, 256
        %v2627 = vld [vmem:[%s2626] sm:$0xf]
        %v2628 = vld [vmem:[%s2626 + $0x4] sm:$0xf]
        %v2629 = vld [vmem:[%s2626 + $0x8] sm:$0xf]
        %v2630 = vld [vmem:[%s2626 + $0xc] sm:$0xf]
        %v2631 = vld [vmem:[%s2626 + $0x10] sm:$0xf]
        %v2632 = vld [vmem:[%s2626 + $0x14] sm:$0xf]
        %v2633 = vld [vmem:[%s2626 + $0x18] sm:$0xf]
        %v2634 = vld [vmem:[%s2626 + $0x1c] sm:$0xf]
        %v2635 = vld [vmem:[%s2456 + $0x2] sm:$0x1]
        %v2636 = vlaneseq
        %v2637 = vshrl.u32 %v2636, 7
        %v2638 = vsub.s32 0, %v2637
        %v2639 = vrot.slane %v2635, %v2638
        %v2648 = vunpack.c.l.b16 %v2627
        %v2649 = vunpack.c.l.b16 %v2628
        %v2650 = vunpack.c.l.b16 %v2629
        %v2651 = vunpack.c.l.b16 %v2630
        %v2652 = vunpack.c.l.b16 %v2631
        %v2653 = vunpack.c.l.b16 %v2632
        %v2654 = vunpack.c.l.b16 %v2633
        %v2655 = vunpack.c.l.b16 %v2634
        %v2656 = vpack.c.b16 %v2649, %v2648
        %v2657 = vpack.c.b16 %v2651, %v2650
        %v2658 = vpack.c.b16 %v2653, %v2652
        %v2659 = vpack.c.b16 %v2655, %v2654
        %2664 = vmatprep.subr.bf16.mxu0 0
        %2665 = vmatpush1.bf16.msra.mxu0 %v2656
        %2666 = vmatprep.subr.bf16.mxu0 0
        %2667 = vmatpush1.bf16.msra.mxu0 %v2657
        %2668 = vmatprep.subr.bf16.mxu0 0
        %2669 = vmatpush1.bf16.msra.mxu0 %v2658
        %2670 = vmatprep.subr.bf16.mxu0 0
        %2671 = vmatpush1.bf16.msra.mxu0 %v2659
        %2672 = vmatprep.subr.bf16.mxu0 0
        %2673 = vmatpush1.bf16.msra.mxu0 0
        %2674 = vmatprep.subr.bf16.mxu0 0
        %2675 = vmatpush1.bf16.msra.mxu0 0
        %2676 = vmatprep.subr.bf16.mxu0 0
        %2677 = vmatpush1.bf16.msra.mxu0 0
        %2678 = vmatprep.subr.bf16.mxu0 0
        %2679 = vmatpush1.bf16.msra.mxu0 0
        %2680 = vmatprep.subr.bf16.mxu0 0
        %2681 = vmatpush1.bf16.msra.mxu0 0
        %2682 = vmatprep.subr.bf16.mxu0 0
        %2683 = vmatpush1.bf16.msra.mxu0 0
        %2684 = vmatprep.subr.bf16.mxu0 0
        %2685 = vmatpush1.bf16.msra.mxu0 0
        %2686 = vmatprep.subr.bf16.mxu0 0
        %2687 = vmatpush1.bf16.msra.mxu0 0
        %2688 = vmatprep.subr.bf16.mxu0 0
        %2689 = vmatpush1.bf16.msra.mxu0 0
        %2690 = vmatprep.subr.bf16.mxu0 0
        %2691 = vmatpush1.bf16.msra.mxu0 0
        %2692 = vmatprep.subr.bf16.mxu0 0
        %2693 = vmatpush1.bf16.msra.mxu0 0
        %2694 = vmatprep.subr.bf16.mxu0 0
        %2695 = vmatpush1.bf16.msra.mxu0 0
        %2696 = vmatprep.mubr.bf16.mxu0 0
        %2697 = vmatmul.mubr.bf16.gmra.mrb[0].mxu0 %v2487
        %v2698 = vpop.f32.mrb[0].mxu0
        %v2699 = vadd.f32 %v2639, %v2698
        %v2700 = vpop.f32.mrb[0].mxu0
        %v2701 = vpop.f32.mrb[0].mxu0
        %v2702 = vadd.f32 %v2639, %v2701
        %v2703 = vpop.f32.mrb[0].mxu0
        %2704 = vmatprep.mubr.bf16.mxu0 0
        %2705 = vmatmul.mubr.bf16.gmra.mrb[0].mxu0 %v2490
        %v2706 = vpop.f32.mrb[0].mxu0
        %v2707 = vadd.f32 %v2639, %v2706
        %v2708 = vpop.f32.mrb[0].mxu0
        %v2709 = vpop.f32.mrb[0].mxu0
        %v2710 = vpop.f32.mrb[0].mxu0
        %2711 = vdwg.mxu0
        %v2712 = vpack.c.bf16 %v2530, %v2527
        %v2713 = vpack.c.bf16 %v2535, %v2535
        %v2714 = vpack.c.bf16 %v2616, %v2613
        %v2715 = vpack.c.bf16 %v2621, %v2621
        %v2717 = vsel %vm796, %v2712, 0
        %v2720 = vsel %vm796, %v2713, 0
        %v2723 = vsel %vm796, %v2714, 0
        %v2726 = vsel %vm796, %v2715, 0
        %2728 = vmatprep.subr.bf16.mxu0 0
        %2729 = vmatpush1.bf16.xpose.msra.mxu0 %v2723
        %2730 = vmatprep.subr.bf16.mxu0 0
        %2731 = vmatpush1.bf16.xpose.msra.mxu0 %v2726
        %2732 = vmatprep.subr.bf16.mxu0 0
        %2733 = vmatpush1.bf16.xpose.msra.mxu0 0
        %2734 = vmatprep.subr.bf16.mxu0 0
        %2735 = vmatpush1.bf16.xpose.msra.mxu0 0
        %2736 = vmatprep.subr.bf16.mxu0 0
        %2737 = vmatpush1.bf16.xpose.msra.mxu0 0
        %2738 = vmatprep.subr.bf16.mxu0 0
        %2739 = vmatpush1.bf16.xpose.msra.mxu0 0
        %2740 = vmatprep.subr.bf16.mxu0 0
        %2741 = vmatpush1.bf16.xpose.msra.mxu0 0
        %2742 = vmatprep.subr.bf16.mxu0 0
        %2743 = vmatpush1.bf16.xpose.msra.mxu0 0
        %2744 = vmatprep.subr.bf16.mxu0 0
        %2745 = vmatpush1.bf16.xpose.msra.mxu0 0
        %2746 = vmatprep.subr.bf16.mxu0 0
        %2747 = vmatpush1.bf16.xpose.msra.mxu0 0
        %2748 = vmatprep.subr.bf16.mxu0 0
        %2749 = vmatpush1.bf16.xpose.msra.mxu0 0
        %2750 = vmatprep.subr.bf16.mxu0 0
        %2751 = vmatpush1.bf16.xpose.msra.mxu0 0
        %2752 = vmatprep.subr.bf16.mxu0 0
        %2753 = vmatpush1.bf16.xpose.msra.mxu0 0
        %2754 = vmatprep.subr.bf16.mxu0 0
        %2755 = vmatpush1.bf16.xpose.msra.mxu0 0
        %2756 = vmatprep.subr.bf16.mxu0 0
        %2757 = vmatpush1.bf16.xpose.msra.mxu0 0
        %2758 = vmatprep.subr.bf16.mxu0 0
        %2759 = vmatpush1.bf16.xpose.msra.mxu0 0
        %2760 = vmatprep.mubr.bf16.mxu0 0
        %2761 = vmatmul.mubr.bf16.gmra.mrb[0].mxu0 %v2717
        %v2762 = vpop.f32.mrb[0].mxu0
        %v2763 = vadd.f32 0.0, %v2762
        %v2764 = vpop.f32.mrb[0].mxu0
        %v2765 = vpop.f32.mrb[0].mxu0
        %v2766 = vadd.f32 0.0, %v2765
        %v2767 = vpop.f32.mrb[0].mxu0
        %2768 = vmatprep.mubr.bf16.mxu0 0
        %2769 = vmatmul.mubr.bf16.gmra.mrb[0].mxu0 %v2720
        %v2770 = vpop.f32.mrb[0].mxu0
        %v2771 = vadd.f32 0.0, %v2770
        %v2772 = vpop.f32.mrb[0].mxu0
        %v2773 = vpop.f32.mrb[0].mxu0
        %v2774 = vpop.f32.mrb[0].mxu0
        %2775 = vdwg.mxu0
        %v2776 = vmul.f32 %v2763, 0.125
        %v2777 = vmul.f32 %v2766, 0.125
        %v2778 = vmul.f32 %v2771, 0.125
        %v2779 = vadd.f32 %v2776, %v790
        %v2780 = vadd.f32 %v2777, %v790
        %v2781 = vadd.f32 %v2778, %v790
        %v2782 = vsel %vm1186, %v2779, -inf
        %2783 = vmax.xlane.f32.xlu0 %v2782
        %v2784 = vpop.xlane.xlu0 %2783
        %v2785 = vsel %vm1186, %v2780, -inf
        %2786 = vmax.xlane.f32.xlu0 %v2785
        %v2787 = vpop.xlane.xlu0 %2786
        %v2788 = vsel %vm1186, %v2781, -inf
        %2789 = vmax.xlane.f32.xlu0 %v2788
        %v2790 = vpop.xlane.xlu0 %2789
        %v2791 = vsub.f32 %v2779, %v2784
        %v2792 = vsub.f32 %v2780, %v2787
        %v2793 = vsub.f32 %v2781, %v2790
        %v2794 = vmul.f32 %v2791, 1.442695
        %v2795 = vpow.pop %v2794
        %v2796 = vmul.f32 %v2792, 1.442695
        %v2797 = vpow.pop %v2796
        %v2798 = vmul.f32 %v2793, 1.442695
        %v2799 = vpow.pop %v2798
        %v2800 = vsel %vm1186, %v2795, 0.0
        %2801 = vadd.xlane.f32.xlu0 %v2800
        %v2802 = vpop.xlane.xlu0 %2801
        %v2803 = vsel %vm1186, %v2797, 0.0
        %2804 = vadd.xlane.f32.xlu0 %v2803
        %v2805 = vpop.xlane.xlu0 %2804
        %v2806 = vsel %vm1186, %v2799, 0.0
        %2807 = vadd.xlane.f32.xlu0 %v2806
        %v2808 = vpop.xlane.xlu0 %2807
        %v2809 = vrcp.pop %v2802
        %v2810 = vrcp.pop %v2805
        %v2811 = vrcp.pop %v2808
        %v2812 = vmul.f32 %v2795, %v2809
        %v2813 = vmul.f32 %v2797, %v2810
        %v2814 = vmul.f32 %v2799, %v2811
        %v2815 = vpack.c.bf16 %v2813, %v2812
        %v2816 = vpack.c.bf16 %v2814, %v2814
        %v2817 = vpack.c.bf16 %v2702, %v2699
        %v2818 = vpack.c.bf16 %v2707, %v2707
        %v2820 = vsel %vm1186, %v2815, 0
        %v2823 = vsel %vm1186, %v2816, 0
        %v2826 = vsel %vm1230, %v2818, 0
        %2828 = vmatprep.subr.bf16.mxu0 0
        %2829 = vmatpush1.bf16.msra.mxu0 %v2817
        %2830 = vmatprep.subr.bf16.mxu0 0
        %2831 = vmatpush1.bf16.msra.mxu0 %v2826
        %2832 = vmatprep.subr.bf16.mxu0 0
        %2833 = vmatpush1.bf16.msra.mxu0 0
        %2834 = vmatprep.subr.bf16.mxu0 0
        %2835 = vmatpush1.bf16.msra.mxu0 0
        %2836 = vmatprep.subr.bf16.mxu0 0
        %2837 = vmatpush1.bf16.msra.mxu0 0
        %2838 = vmatprep.subr.bf16.mxu0 0
        %2839 = vmatpush1.bf16.msra.mxu0 0
        %2840 = vmatprep.subr.bf16.mxu0 0
        %2841 = vmatpush1.bf16.msra.mxu0 0
        %2842 = vmatprep.subr.bf16.mxu0 0
        %2843 = vmatpush1.bf16.msra.mxu0 0
        %2844 = vmatprep.subr.bf16.mxu0 0
        %2845 = vmatpush1.bf16.msra.mxu0 0
        %2846 = vmatprep.subr.bf16.mxu0 0
        %2847 = vmatpush1.bf16.msra.mxu0 0
        %2848 = vmatprep.subr.bf16.mxu0 0
        %2849 = vmatpush1.bf16.msra.mxu0 0
        %2850 = vmatprep.subr.bf16.mxu0 0
        %2851 = vmatpush1.bf16.msra.mxu0 0
        %2852 = vmatprep.subr.bf16.mxu0 0
        %2853 = vmatpush1.bf16.msra.mxu0 0
        %2854 = vmatprep.subr.bf16.mxu0 0
        %2855 = vmatpush1.bf16.msra.mxu0 0
        %2856 = vmatprep.subr.bf16.mxu0 0
        %2857 = vmatpush1.bf16.msra.mxu0 0
        %2858 = vmatprep.subr.bf16.mxu0 0
        %2859 = vmatpush1.bf16.msra.mxu0 0
        %2860 = vmatprep.mubr.bf16.mxu0 0
        %2861 = vmatmul.mubr.bf16.gmra.mrb[0].mxu0 %v2820
        %v2862 = vpop.f32.mrb[0].mxu0
        %v2863 = vadd.f32 0.0, %v2862
        %v2864 = vpop.f32.mrb[0].mxu0
        %v2865 = vpop.f32.mrb[0].mxu0
        %v2866 = vadd.f32 0.0, %v2865
        %v2867 = vpop.f32.mrb[0].mxu0
        %2868 = vmatprep.mubr.bf16.mxu0 0
        %2869 = vmatmul.mubr.bf16.gmra.mrb[0].mxu0 %v2823
        %v2870 = vpop.f32.mrb[0].mxu0
        %v2871 = vadd.f32 0.0, %v2870
        %v2872 = vpop.f32.mrb[0].mxu0
        %v2873 = vpop.f32.mrb[0].mxu0
        %v2874 = vpop.f32.mrb[0].mxu0
        %2875 = vdwg.mxu0
        %v2876 = vpack.c.bf16 %v2866, %v2863
        %v2877 = vpack.c.bf16 %v2871, %v2871
        %s2878 = scalar_lea.vmem [#allocation2], 64
        %v2879 = vld [vmem:[%s2878] sm:$0xf]
        %v2880 = vld [vmem:[%s2878 + $0x4] sm:$0xf]
        %v2881 = vld [vmem:[%s2878 + $0x8] sm:$0xf]
        %v2882 = vld [vmem:[%s2878 + $0xc] sm:$0xf]
        %v2883 = vld [vmem:[%s2878 + $0x10] sm:$0xf]
        %v2884 = vld [vmem:[%s2878 + $0x14] sm:$0xf]
        %v2885 = vld [vmem:[%s2878 + $0x18] sm:$0xf]
        %v2886 = vld [vmem:[%s2878 + $0x1c] sm:$0xf]
        %v2895 = vunpack.c.l.b16 %v2879
        %v2896 = vunpack.c.l.b16 %v2880
        %v2897 = vunpack.c.l.b16 %v2881
        %v2898 = vunpack.c.l.b16 %v2882
        %v2899 = vunpack.c.l.b16 %v2883
        %v2900 = vunpack.c.l.b16 %v2884
        %v2901 = vunpack.c.l.b16 %v2885
        %v2902 = vunpack.c.l.b16 %v2886
        %v2903 = vpack.c.b16 %v2896, %v2895
        %v2904 = vpack.c.b16 %v2898, %v2897
        %v2905 = vpack.c.b16 %v2900, %v2899
        %v2906 = vpack.c.b16 %v2902, %v2901
        %v2912 = vsel %vm796, %v2876, 0
        %v2915 = vsel %vm796, %v2877, 0
        %2917 = vmatprep.subr.bf16.mxu0 0
        %2918 = vmatpush1.bf16.msra.mxu0 %v2903
        %2919 = vmatprep.subr.bf16.mxu0 0
        %2920 = vmatpush1.bf16.msra.mxu0 %v2904
        %2921 = vmatprep.subr.bf16.mxu0 0
        %2922 = vmatpush1.bf16.msra.mxu0 %v2905
        %2923 = vmatprep.subr.bf16.mxu0 0
        %2924 = vmatpush1.bf16.msra.mxu0 %v2906
        %2925 = vmatprep.subr.bf16.mxu0 0
        %2926 = vmatpush1.bf16.msra.mxu0 0
        %2927 = vmatprep.subr.bf16.mxu0 0
        %2928 = vmatpush1.bf16.msra.mxu0 0
        %2929 = vmatprep.subr.bf16.mxu0 0
        %2930 = vmatpush1.bf16.msra.mxu0 0
        %2931 = vmatprep.subr.bf16.mxu0 0
        %2932 = vmatpush1.bf16.msra.mxu0 0
        %2933 = vmatprep.subr.bf16.mxu0 0
        %2934 = vmatpush1.bf16.msra.mxu0 0
        %2935 = vmatprep.subr.bf16.mxu0 0
        %2936 = vmatpush1.bf16.msra.mxu0 0
        %2937 = vmatprep.subr.bf16.mxu0 0
        %2938 = vmatpush1.bf16.msra.mxu0 0
        %2939 = vmatprep.subr.bf16.mxu0 0
        %2940 = vmatpush1.bf16.msra.mxu0 0
        %2941 = vmatprep.subr.bf16.mxu0 0
        %2942 = vmatpush1.bf16.msra.mxu0 0
        %2943 = vmatprep.subr.bf16.mxu0 0
        %2944 = vmatpush1.bf16.msra.mxu0 0
        %2945 = vmatprep.subr.bf16.mxu0 0
        %2946 = vmatpush1.bf16.msra.mxu0 0
        %2947 = vmatprep.subr.bf16.mxu0 0
        %2948 = vmatpush1.bf16.msra.mxu0 0
        %2949 = vmatprep.mubr.bf16.mxu0 0
        %2950 = vmatmul.mubr.bf16.gmra.mrb[0].mxu0 %v2912
        %v2951 = vpop.f32.mrb[0].mxu0
        %v2952 = vadd.f32 0.0, %v2951
        %v2953 = vpop.f32.mrb[0].mxu0
        %v2954 = vpop.f32.mrb[0].mxu0
        %v2955 = vadd.f32 0.0, %v2954
        %v2956 = vpop.f32.mrb[0].mxu0
        %2957 = vmatprep.mubr.bf16.mxu0 0
        %2958 = vmatmul.mubr.bf16.gmra.mrb[0].mxu0 %v2915
        %v2959 = vpop.f32.mrb[0].mxu0
        %v2960 = vadd.f32 0.0, %v2959
        %v2961 = vpop.f32.mrb[0].mxu0
        %v2962 = vpop.f32.mrb[0].mxu0
        %v2963 = vpop.f32.mrb[0].mxu0
        %2964 = vdwg.mxu0
        %v2965 = vadd.f32 %v2385, %v2952
        %v2966 = vadd.f32 %v2386, %v2955
        %v2967 = vadd.f32 %v2387, %v2960
        %s2968 = scalar_lea.vmem %s7, 2
        %v2969 = vld [vmem:[%s2968] sm:$0x1]
        %v2970 = vlaneseq
        %v2971 = vshrl.u32 %v2970, 7
        %v2972 = vsub.s32 0, %v2971
        %v2973 = vrot.slane %v2969, %v2972
        %v2974 = vadd.f32 %v2965, %v2973
        %v2975 = vadd.f32 %v2966, %v2973
        %v2976 = vadd.f32 %v2967, %v2973
        %v2977 = vld [vmem:[%s2388 + $0x1] sm:$0x1]
        %v2978 = vld [vmem:[%s2390 + $0x1] sm:$0x1]
        %v2979 = vsel %vm796, %v2974, 0.0
        %2980 = vadd.xlane.f32.xlu0 %v2979
        %v2981 = vpop.xlane.xlu0 %2980
        %v2982 = vsel %vm796, %v2975, 0.0
        %2983 = vadd.xlane.f32.xlu0 %v2982
        %v2984 = vpop.xlane.xlu0 %2983
        %v2985 = vsel %vm796, %v2976, 0.0
        %2986 = vadd.xlane.f32.xlu0 %v2985
        %v2987 = vpop.xlane.xlu0 %2986
        %v2988 = vmul.f32 %v2981, %v806
        %v2989 = vmul.f32 %v2984, %v806
        %v2990 = vmul.f32 %v2987, %v806
        %v2991 = vsub.f32 %v2974, %v2988
        %v2992 = vsub.f32 %v2975, %v2989
        %v2993 = vsub.f32 %v2976, %v2990
        %v2994 = vmul.f32 %v2991, %v2991
        %v2995 = vmul.f32 %v2992, %v2992
        %v2996 = vmul.f32 %v2993, %v2993
        %v2997 = vsel %vm796, %v2994, 0.0
        %2998 = vadd.xlane.f32.xlu0 %v2997
        %v2999 = vpop.xlane.xlu0 %2998
        %v3000 = vsel %vm796, %v2995, 0.0
        %3001 = vadd.xlane.f32.xlu0 %v3000
        %v3002 = vpop.xlane.xlu0 %3001
        %v3003 = vsel %vm796, %v2996, 0.0
        %3004 = vadd.xlane.f32.xlu0 %v3003
        %v3005 = vpop.xlane.xlu0 %3004
        %v3006 = vmul.f32 %v2999, %v806
        %v3007 = vmul.f32 %v3002, %v806
        %v3008 = vmul.f32 %v3005, %v806
        %v3009 = vadd.f32 %v3006, 1e-05
        %v3010 = vadd.f32 %v3007, 1e-05
        %v3011 = vadd.f32 %v3008, 1e-05
        %v3012 = vrsqrt.pop %v3009
        %v3013 = vrsqrt.pop %v3010
        %v3014 = vrsqrt.pop %v3011
        %v3015 = vmul.f32 %v2991, %v3012
        %v3016 = vmul.f32 %v2992, %v3013
        %v3017 = vmul.f32 %v2993, %v3014
        %v3018 = vlaneseq
        %v3019 = vshrl.u32 %v3018, 7
        %v3020 = vsub.s32 0, %v3019
        %v3021 = vrot.slane %v2977, %v3020
        %v3022 = vmul.f32 %v3015, %v3021
        %v3023 = vmul.f32 %v3016, %v3021
        %v3024 = vmul.f32 %v3017, %v3021
        %v3025 = vlaneseq
        %v3026 = vshrl.u32 %v3025, 7
        %v3027 = vsub.s32 0, %v3026
        %v3028 = vrot.slane %v2978, %v3027
        %v3029 = vadd.f32 %v3022, %v3028
        %v3030 = vadd.f32 %v3023, %v3028
        %v3031 = vadd.f32 %v3024, %v3028
        %v3032 = vpack.c.bf16 %v3030, %v3029
        %v3033 = vpack.c.bf16 %v3031, %v3031
        %s3034 = scalar_lea.vmem %s4, 288
        %v3035 = vld [vmem:[%s3034] sm:$0xf]
        %v3036 = vld [vmem:[%s3034 + $0x4] sm:$0xf]
        %v3037 = vld [vmem:[%s3034 + $0x8] sm:$0xf]
        %v3038 = vld [vmem:[%s3034 + $0xc] sm:$0xf]
        %v3039 = vld [vmem:[%s3034 + $0x10] sm:$0xf]
        %v3040 = vld [vmem:[%s3034 + $0x14] sm:$0xf]
        %v3041 = vld [vmem:[%s3034 + $0x18] sm:$0xf]
        %v3042 = vld [vmem:[%s3034 + $0x1c] sm:$0xf]
        %s3043 = scalar_lea.vmem %s5, 12
        %v3044 = vld [vmem:[%s3043] sm:$0x1]
        %v3045 = vlaneseq
        %v3046 = vshrl.u32 %v3045, 7
        %v3047 = vsub.s32 0, %v3046
        %v3048 = vrot.slane %v3044, %v3047
        %v3057 = vunpack.c.l.b16 %v3035
        %v3058 = vunpack.c.l.b16 %v3036
        %v3059 = vunpack.c.l.b16 %v3037
        %v3060 = vunpack.c.l.b16 %v3038
        %v3061 = vunpack.c.l.b16 %v3039
        %v3062 = vunpack.c.l.b16 %v3040
        %v3063 = vunpack.c.l.b16 %v3041
        %v3064 = vunpack.c.l.b16 %v3042
        %v3065 = vpack.c.b16 %v3058, %v3057
        %v3066 = vpack.c.b16 %v3060, %v3059
        %v3067 = vpack.c.b16 %v3062, %v3061
        %v3068 = vpack.c.b16 %v3064, %v3063
        %v3074 = vsel %vm796, %v3032, 0
        %v3077 = vsel %vm796, %v3033, 0
        %3079 = vmatprep.subr.bf16.mxu0 0
        %3080 = vmatpush1.bf16.msra.mxu0 %v3065
        %3081 = vmatprep.subr.bf16.mxu0 0
        %3082 = vmatpush1.bf16.msra.mxu0 %v3066
        %3083 = vmatprep.subr.bf16.mxu0 0
        %3084 = vmatpush1.bf16.msra.mxu0 %v3067
        %3085 = vmatprep.subr.bf16.mxu0 0
        %3086 = vmatpush1.bf16.msra.mxu0 %v3068
        %3087 = vmatprep.subr.bf16.mxu0 0
        %3088 = vmatpush1.bf16.msra.mxu0 0
        %3089 = vmatprep.subr.bf16.mxu0 0
        %3090 = vmatpush1.bf16.msra.mxu0 0
        %3091 = vmatprep.subr.bf16.mxu0 0
        %3092 = vmatpush1.bf16.msra.mxu0 0
        %3093 = vmatprep.subr.bf16.mxu0 0
        %3094 = vmatpush1.bf16.msra.mxu0 0
        %3095 = vmatprep.subr.bf16.mxu0 0
        %3096 = vmatpush1.bf16.msra.mxu0 0
        %3097 = vmatprep.subr.bf16.mxu0 0
        %3098 = vmatpush1.bf16.msra.mxu0 0
        %3099 = vmatprep.subr.bf16.mxu0 0
        %3100 = vmatpush1.bf16.msra.mxu0 0
        %3101 = vmatprep.subr.bf16.mxu0 0
        %3102 = vmatpush1.bf16.msra.mxu0 0
        %3103 = vmatprep.subr.bf16.mxu0 0
        %3104 = vmatpush1.bf16.msra.mxu0 0
        %3105 = vmatprep.subr.bf16.mxu0 0
        %3106 = vmatpush1.bf16.msra.mxu0 0
        %3107 = vmatprep.subr.bf16.mxu0 0
        %3108 = vmatpush1.bf16.msra.mxu0 0
        %3109 = vmatprep.subr.bf16.mxu0 0
        %3110 = vmatpush1.bf16.msra.mxu0 0
        %3111 = vmatprep.mubr.bf16.mxu0 0
        %3112 = vmatmul.mubr.bf16.gmra.mrb[0].mxu0 %v3074
        %v3113 = vpop.f32.mrb[0].mxu0
        %v3114 = vadd.f32 %v3048, %v3113
        %v3115 = vpop.f32.mrb[0].mxu0
        %v3116 = vpop.f32.mrb[0].mxu0
        %v3117 = vadd.f32 %v3048, %v3116
        %v3118 = vpop.f32.mrb[0].mxu0
        %3119 = vmatprep.mubr.bf16.mxu0 0
        %3120 = vmatmul.mubr.bf16.gmra.mrb[0].mxu0 %v3077
        %v3121 = vpop.f32.mrb[0].mxu0
        %v3122 = vadd.f32 %v3048, %v3121
        %v3123 = vpop.f32.mrb[0].mxu0
        %v3124 = vpop.f32.mrb[0].mxu0
        %v3125 = vpop.f32.mrb[0].mxu0
        %3126 = vdwg.mxu0
        %s3127 = scalar_lea.vmem %s4, 320
        %v3128 = vld [vmem:[%s3127] sm:$0xf]
        %v3129 = vld [vmem:[%s3127 + $0x4] sm:$0xf]
        %v3130 = vld [vmem:[%s3127 + $0x8] sm:$0xf]
        %v3131 = vld [vmem:[%s3127 + $0xc] sm:$0xf]
        %v3132 = vld [vmem:[%s3127 + $0x10] sm:$0xf]
        %v3133 = vld [vmem:[%s3127 + $0x14] sm:$0xf]
        %v3134 = vld [vmem:[%s3127 + $0x18] sm:$0xf]
        %v3135 = vld [vmem:[%s3127 + $0x1c] sm:$0xf]
        %v3136 = vld [vmem:[%s3043 + $0x1] sm:$0x1]
        %v3137 = vlaneseq
        %v3138 = vshrl.u32 %v3137, 7
        %v3139 = vsub.s32 0, %v3138
        %v3140 = vrot.slane %v3136, %v3139
        %v3149 = vunpack.c.l.b16 %v3128
        %v3150 = vunpack.c.l.b16 %v3129
        %v3151 = vunpack.c.l.b16 %v3130
        %v3152 = vunpack.c.l.b16 %v3131
        %v3153 = vunpack.c.l.b16 %v3132
        %v3154 = vunpack.c.l.b16 %v3133
        %v3155 = vunpack.c.l.b16 %v3134
        %v3156 = vunpack.c.l.b16 %v3135
        %v3157 = vpack.c.b16 %v3150, %v3149
        %v3158 = vpack.c.b16 %v3152, %v3151
        %v3159 = vpack.c.b16 %v3154, %v3153
        %v3160 = vpack.c.b16 %v3156, %v3155
        %3165 = vmatprep.subr.bf16.mxu0 0
        %3166 = vmatpush1.bf16.msra.mxu0 %v3157
        %3167 = vmatprep.subr.bf16.mxu0 0
        %3168 = vmatpush1.bf16.msra.mxu0 %v3158
        %3169 = vmatprep.subr.bf16.mxu0 0
        %3170 = vmatpush1.bf16.msra.mxu0 %v3159
        %3171 = vmatprep.subr.bf16.mxu0 0
        %3172 = vmatpush1.bf16.msra.mxu0 %v3160
        %3173 = vmatprep.subr.bf16.mxu0 0
        %3174 = vmatpush1.bf16.msra.mxu0 0
        %3175 = vmatprep.subr.bf16.mxu0 0
        %3176 = vmatpush1.bf16.msra.mxu0 0
        %3177 = vmatprep.subr.bf16.mxu0 0
        %3178 = vmatpush1.bf16.msra.mxu0 0
        %3179 = vmatprep.subr.bf16.mxu0 0
        %3180 = vmatpush1.bf16.msra.mxu0 0
        %3181 = vmatprep.subr.bf16.mxu0 0
        %3182 = vmatpush1.bf16.msra.mxu0 0
        %3183 = vmatprep.subr.bf16.mxu0 0
        %3184 = vmatpush1.bf16.msra.mxu0 0
        %3185 = vmatprep.subr.bf16.mxu0 0
        %3186 = vmatpush1.bf16.msra.mxu0 0
        %3187 = vmatprep.subr.bf16.mxu0 0
        %3188 = vmatpush1.bf16.msra.mxu0 0
        %3189 = vmatprep.subr.bf16.mxu0 0
        %3190 = vmatpush1.bf16.msra.mxu0 0
        %3191 = vmatprep.subr.bf16.mxu0 0
        %3192 = vmatpush1.bf16.msra.mxu0 0
        %3193 = vmatprep.subr.bf16.mxu0 0
        %3194 = vmatpush1.bf16.msra.mxu0 0
        %3195 = vmatprep.subr.bf16.mxu0 0
        %3196 = vmatpush1.bf16.msra.mxu0 0
        %3197 = vmatprep.mubr.bf16.mxu0 0
        %3198 = vmatmul.mubr.bf16.gmra.mrb[0].mxu0 %v1570
        %v3199 = vpop.f32.mrb[0].mxu0
        %v3200 = vadd.f32 %v3140, %v3199
        %v3201 = vpop.f32.mrb[0].mxu0
        %v3202 = vpop.f32.mrb[0].mxu0
        %v3203 = vadd.f32 %v3140, %v3202
        %v3204 = vpop.f32.mrb[0].mxu0
        %3205 = vmatprep.mubr.bf16.mxu0 0
        %3206 = vmatmul.mubr.bf16.gmra.mrb[0].mxu0 %v1573
        %v3207 = vpop.f32.mrb[0].mxu0
        %v3208 = vadd.f32 %v3140, %v3207
        %v3209 = vpop.f32.mrb[0].mxu0
        %v3210 = vpop.f32.mrb[0].mxu0
        %v3211 = vadd.f32 %v3140, %v3210
        %v3212 = vpop.f32.mrb[0].mxu0
        %3213 = vmatprep.mubr.bf16.mxu0 0
        %3214 = vmatmul.mubr.bf16.gmra.mrb[0].mxu0 %v1576
        %v3215 = vpop.f32.mrb[0].mxu0
        %v3216 = vadd.f32 %v3140, %v3215
        %v3217 = vpop.f32.mrb[0].mxu0
        %v3218 = vpop.f32.mrb[0].mxu0
        %v3219 = vadd.f32 %v3140, %v3218
        %v3220 = vpop.f32.mrb[0].mxu0
        %3221 = vmatprep.mubr.bf16.mxu0 0
        %3222 = vmatmul.mubr.bf16.gmra.mrb[0].mxu0 %v1579
        %v3223 = vpop.f32.mrb[0].mxu0
        %v3224 = vadd.f32 %v3140, %v3223
        %v3225 = vpop.f32.mrb[0].mxu0
        %v3226 = vpop.f32.mrb[0].mxu0
        %v3227 = vadd.f32 %v3140, %v3226
        %v3228 = vpop.f32.mrb[0].mxu0
        %3229 = vdwg.mxu0
        %s3230 = scalar_lea.vmem %s4, 352
        %v3231 = vld [vmem:[%s3230] sm:$0xf]
        %v3232 = vld [vmem:[%s3230 + $0x4] sm:$0xf]
        %v3233 = vld [vmem:[%s3230 + $0x8] sm:$0xf]
        %v3234 = vld [vmem:[%s3230 + $0xc] sm:$0xf]
        %v3235 = vld [vmem:[%s3230 + $0x10] sm:$0xf]
        %v3236 = vld [vmem:[%s3230 + $0x14] sm:$0xf]
        %v3237 = vld [vmem:[%s3230 + $0x18] sm:$0xf]
        %v3238 = vld [vmem:[%s3230 + $0x1c] sm:$0xf]
        %v3239 = vld [vmem:[%s3043 + $0x2] sm:$0x1]
        %v3240 = vlaneseq
        %v3241 = vshrl.u32 %v3240, 7
        %v3242 = vsub.s32 0, %v3241
        %v3243 = vrot.slane %v3239, %v3242
        %v3252 = vunpack.c.l.b16 %v3231
        %v3253 = vunpack.c.l.b16 %v3232
        %v3254 = vunpack.c.l.b16 %v3233
        %v3255 = vunpack.c.l.b16 %v3234
        %v3256 = vunpack.c.l.b16 %v3235
        %v3257 = vunpack.c.l.b16 %v3236
        %v3258 = vunpack.c.l.b16 %v3237
        %v3259 = vunpack.c.l.b16 %v3238
        %v3260 = vpack.c.b16 %v3253, %v3252
        %v3261 = vpack.c.b16 %v3255, %v3254
        %v3262 = vpack.c.b16 %v3257, %v3256
        %v3263 = vpack.c.b16 %v3259, %v3258
        %3268 = vmatprep.subr.bf16.mxu0 0
        %3269 = vmatpush1.bf16.msra.mxu0 %v3260
        %3270 = vmatprep.subr.bf16.mxu0 0
        %3271 = vmatpush1.bf16.msra.mxu0 %v3261
        %3272 = vmatprep.subr.bf16.mxu0 0
        %3273 = vmatpush1.bf16.msra.mxu0 %v3262
        %3274 = vmatprep.subr.bf16.mxu0 0
        %3275 = vmatpush1.bf16.msra.mxu0 %v3263
        %3276 = vmatprep.subr.bf16.mxu0 0
        %3277 = vmatpush1.bf16.msra.mxu0 0
        %3278 = vmatprep.subr.bf16.mxu0 0
        %3279 = vmatpush1.bf16.msra.mxu0 0
        %3280 = vmatprep.subr.bf16.mxu0 0
        %3281 = vmatpush1.bf16.msra.mxu0 0
        %3282 = vmatprep.subr.bf16.mxu0 0
        %3283 = vmatpush1.bf16.msra.mxu0 0
        %3284 = vmatprep.subr.bf16.mxu0 0
        %3285 = vmatpush1.bf16.msra.mxu0 0
        %3286 = vmatprep.subr.bf16.mxu0 0
        %3287 = vmatpush1.bf16.msra.mxu0 0
        %3288 = vmatprep.subr.bf16.mxu0 0
        %3289 = vmatpush1.bf16.msra.mxu0 0
        %3290 = vmatprep.subr.bf16.mxu0 0
        %3291 = vmatpush1.bf16.msra.mxu0 0
        %3292 = vmatprep.subr.bf16.mxu0 0
        %3293 = vmatpush1.bf16.msra.mxu0 0
        %3294 = vmatprep.subr.bf16.mxu0 0
        %3295 = vmatpush1.bf16.msra.mxu0 0
        %3296 = vmatprep.subr.bf16.mxu0 0
        %3297 = vmatpush1.bf16.msra.mxu0 0
        %3298 = vmatprep.subr.bf16.mxu0 0
        %3299 = vmatpush1.bf16.msra.mxu0 0
        %3300 = vmatprep.mubr.bf16.mxu0 0
        %3301 = vmatmul.mubr.bf16.gmra.mrb[0].mxu0 %v1570
        %v3302 = vpop.f32.mrb[0].mxu0
        %v3303 = vadd.f32 %v3243, %v3302
        %v3304 = vpop.f32.mrb[0].mxu0
        %v3305 = vpop.f32.mrb[0].mxu0
        %v3306 = vadd.f32 %v3243, %v3305
        %v3307 = vpop.f32.mrb[0].mxu0
        %3308 = vmatprep.mubr.bf16.mxu0 0
        %3309 = vmatmul.mubr.bf16.gmra.mrb[0].mxu0 %v1573
        %v3310 = vpop.f32.mrb[0].mxu0
        %v3311 = vadd.f32 %v3243, %v3310
        %v3312 = vpop.f32.mrb[0].mxu0
        %v3313 = vpop.f32.mrb[0].mxu0
        %v3314 = vadd.f32 %v3243, %v3313
        %v3315 = vpop.f32.mrb[0].mxu0
        %3316 = vmatprep.mubr.bf16.mxu0 0
        %3317 = vmatmul.mubr.bf16.gmra.mrb[0].mxu0 %v1576
        %v3318 = vpop.f32.mrb[0].mxu0
        %v3319 = vadd.f32 %v3243, %v3318
        %v3320 = vpop.f32.mrb[0].mxu0
        %v3321 = vpop.f32.mrb[0].mxu0
        %v3322 = vadd.f32 %v3243, %v3321
        %v3323 = vpop.f32.mrb[0].mxu0
        %3324 = vmatprep.mubr.bf16.mxu0 0
        %3325 = vmatmul.mubr.bf16.gmra.mrb[0].mxu0 %v1579
        %v3326 = vpop.f32.mrb[0].mxu0
        %v3327 = vadd.f32 %v3243, %v3326
        %v3328 = vpop.f32.mrb[0].mxu0
        %v3329 = vpop.f32.mrb[0].mxu0
        %v3330 = vadd.f32 %v3243, %v3329
        %v3331 = vpop.f32.mrb[0].mxu0
        %3332 = vdwg.mxu0
        %v3333 = vpack.c.bf16 %v3117, %v3114
        %v3334 = vpack.c.bf16 %v3122, %v3122
        %v3335 = vpack.c.bf16 %v3203, %v3200
        %v3336 = vpack.c.bf16 %v3211, %v3208
        %v3337 = vpack.c.bf16 %v3219, %v3216
        %v3338 = vpack.c.bf16 %v3227, %v3224
        %v3340 = vsel %vm796, %v3333, 0
        %v3343 = vsel %vm796, %v3334, 0
        %v3346 = vsel %vm796, %v3335, 0
        %v3349 = vsel %vm796, %v3336, 0
        %v3352 = vsel %vm796, %v3337, 0
        %v3355 = vsel %vm796, %v3338, 0
        %3357 = vmatprep.subr.bf16.mxu0 0
        %3358 = vmatpush1.bf16.xpose.msra.mxu0 %v3346
        %3359 = vmatprep.subr.bf16.mxu0 0
        %3360 = vmatpush1.bf16.xpose.msra.mxu0 %v3349
        %3361 = vmatprep.subr.bf16.mxu0 0
        %3362 = vmatpush1.bf16.xpose.msra.mxu0 %v3352
        %3363 = vmatprep.subr.bf16.mxu0 0
        %3364 = vmatpush1.bf16.xpose.msra.mxu0 %v3355
        %3365 = vmatprep.subr.bf16.mxu0 0
        %3366 = vmatpush1.bf16.xpose.msra.mxu0 0
        %3367 = vmatprep.subr.bf16.mxu0 0
        %3368 = vmatpush1.bf16.xpose.msra.mxu0 0
        %3369 = vmatprep.subr.bf16.mxu0 0
        %3370 = vmatpush1.bf16.xpose.msra.mxu0 0
        %3371 = vmatprep.subr.bf16.mxu0 0
        %3372 = vmatpush1.bf16.xpose.msra.mxu0 0
        %3373 = vmatprep.subr.bf16.mxu0 0
        %3374 = vmatpush1.bf16.xpose.msra.mxu0 0
        %3375 = vmatprep.subr.bf16.mxu0 0
        %3376 = vmatpush1.bf16.xpose.msra.mxu0 0
        %3377 = vmatprep.subr.bf16.mxu0 0
        %3378 = vmatpush1.bf16.xpose.msra.mxu0 0
        %3379 = vmatprep.subr.bf16.mxu0 0
        %3380 = vmatpush1.bf16.xpose.msra.mxu0 0
        %3381 = vmatprep.subr.bf16.mxu0 0
        %3382 = vmatpush1.bf16.xpose.msra.mxu0 0
        %3383 = vmatprep.subr.bf16.mxu0 0
        %3384 = vmatpush1.bf16.xpose.msra.mxu0 0
        %3385 = vmatprep.subr.bf16.mxu0 0
        %3386 = vmatpush1.bf16.xpose.msra.mxu0 0
        %3387 = vmatprep.subr.bf16.mxu0 0
        %3388 = vmatpush1.bf16.xpose.msra.mxu0 0
        %3389 = vmatprep.mubr.bf16.mxu0 0
        %3390 = vmatmul.mubr.bf16.gmra.mrb[0].mxu0 %v3340
        %v3391 = vpop.f32.mrb[0].mxu0
        %v3392 = vadd.f32 0.0, %v3391
        %v3393 = vpop.f32.mrb[0].mxu0
        %v3394 = vpop.f32.mrb[0].mxu0
        %v3395 = vadd.f32 0.0, %v3394
        %v3396 = vpop.f32.mrb[0].mxu0
        %3397 = vmatprep.mubr.bf16.mxu0 0
        %3398 = vmatmul.mubr.bf16.gmra.mrb[0].mxu0 %v3343
        %v3399 = vpop.f32.mrb[0].mxu0
        %v3400 = vadd.f32 0.0, %v3399
        %v3401 = vpop.f32.mrb[0].mxu0
        %v3402 = vpop.f32.mrb[0].mxu0
        %v3403 = vpop.f32.mrb[0].mxu0
        %3404 = vdwg.mxu0
        %v3405 = vmul.f32 %v3392, 0.125
        %v3406 = vmul.f32 %v3395, 0.125
        %v3407 = vmul.f32 %v3400, 0.125
        %v3408 = vsel %vm796, %v3405, -inf
        %3409 = vmax.xlane.f32.xlu0 %v3408
        %v3410 = vpop.xlane.xlu0 %3409
        %v3411 = vsel %vm796, %v3406, -inf
        %3412 = vmax.xlane.f32.xlu0 %v3411
        %v3413 = vpop.xlane.xlu0 %3412
        %v3414 = vsel %vm796, %v3407, -inf
        %3415 = vmax.xlane.f32.xlu0 %v3414
        %v3416 = vpop.xlane.xlu0 %3415
        %v3417 = vsub.f32 %v3405, %v3410
        %v3418 = vsub.f32 %v3406, %v3413
        %v3419 = vsub.f32 %v3407, %v3416
        %v3420 = vmul.f32 %v3417, 1.442695
        %v3421 = vpow.pop %v3420
        %v3422 = vmul.f32 %v3418, 1.442695
        %v3423 = vpow.pop %v3422
        %v3424 = vmul.f32 %v3419, 1.442695
        %v3425 = vpow.pop %v3424
        %v3426 = vsel %vm796, %v3421, 0.0
        %3427 = vadd.xlane.f32.xlu0 %v3426
        %v3428 = vpop.xlane.xlu0 %3427
        %v3429 = vsel %vm796, %v3423, 0.0
        %3430 = vadd.xlane.f32.xlu0 %v3429
        %v3431 = vpop.xlane.xlu0 %3430
        %v3432 = vsel %vm796, %v3425, 0.0
        %3433 = vadd.xlane.f32.xlu0 %v3432
        %v3434 = vpop.xlane.xlu0 %3433
        %v3435 = vrcp.pop %v3428
        %v3436 = vrcp.pop %v3431
        %v3437 = vrcp.pop %v3434
        %v3438 = vmul.f32 %v3421, %v3435
        %v3439 = vmul.f32 %v3423, %v3436
        %v3440 = vmul.f32 %v3425, %v3437
        %v3441 = vpack.c.bf16 %v3439, %v3438
        %v3442 = vpack.c.bf16 %v3440, %v3440
        %v3443 = vpack.c.bf16 %v3306, %v3303
        %v3444 = vpack.c.bf16 %v3314, %v3311
        %v3445 = vpack.c.bf16 %v3322, %v3319
        %v3446 = vpack.c.bf16 %v3330, %v3327
        %v3448 = vsel %vm796, %v3441, 0
        %v3451 = vsel %vm796, %v3442, 0
        %3453 = vmatprep.subr.bf16.mxu0 0
        %3454 = vmatpush1.bf16.msra.mxu0 %v3443
        %3455 = vmatprep.subr.bf16.mxu0 0
        %3456 = vmatpush1.bf16.msra.mxu0 %v3444
        %3457 = vmatprep.subr.bf16.mxu0 0
        %3458 = vmatpush1.bf16.msra.mxu0 %v3445
        %3459 = vmatprep.subr.bf16.mxu0 0
        %3460 = vmatpush1.bf16.msra.mxu0 %v3446
        %3461 = vmatprep.subr.bf16.mxu0 0
        %3462 = vmatpush1.bf16.msra.mxu0 0
        %3463 = vmatprep.subr.bf16.mxu0 0
        %3464 = vmatpush1.bf16.msra.mxu0 0
        %3465 = vmatprep.subr.bf16.mxu0 0
        %3466 = vmatpush1.bf16.msra.mxu0 0
        %3467 = vmatprep.subr.bf16.mxu0 0
        %3468 = vmatpush1.bf16.msra.mxu0 0
        %3469 = vmatprep.subr.bf16.mxu0 0
        %3470 = vmatpush1.bf16.msra.mxu0 0
        %3471 = vmatprep.subr.bf16.mxu0 0
        %3472 = vmatpush1.bf16.msra.mxu0 0
        %3473 = vmatprep.subr.bf16.mxu0 0
        %3474 = vmatpush1.bf16.msra.mxu0 0
        %3475 = vmatprep.subr.bf16.mxu0 0
        %3476 = vmatpush1.bf16.msra.mxu0 0
        %3477 = vmatprep.subr.bf16.mxu0 0
        %3478 = vmatpush1.bf16.msra.mxu0 0
        %3479 = vmatprep.subr.bf16.mxu0 0
        %3480 = vmatpush1.bf16.msra.mxu0 0
        %3481 = vmatprep.subr.bf16.mxu0 0
        %3482 = vmatpush1.bf16.msra.mxu0 0
        %3483 = vmatprep.subr.bf16.mxu0 0
        %3484 = vmatpush1.bf16.msra.mxu0 0
        %3485 = vmatprep.mubr.bf16.mxu0 0
        %3486 = vmatmul.mubr.bf16.gmra.mrb[0].mxu0 %v3448
        %v3487 = vpop.f32.mrb[0].mxu0
        %v3488 = vadd.f32 0.0, %v3487
        %v3489 = vpop.f32.mrb[0].mxu0
        %v3490 = vpop.f32.mrb[0].mxu0
        %v3491 = vadd.f32 0.0, %v3490
        %v3492 = vpop.f32.mrb[0].mxu0
        %3493 = vmatprep.mubr.bf16.mxu0 0
        %3494 = vmatmul.mubr.bf16.gmra.mrb[0].mxu0 %v3451
        %v3495 = vpop.f32.mrb[0].mxu0
        %v3496 = vadd.f32 0.0, %v3495
        %v3497 = vpop.f32.mrb[0].mxu0
        %v3498 = vpop.f32.mrb[0].mxu0
        %v3499 = vpop.f32.mrb[0].mxu0
        %3500 = vdwg.mxu0
        %v3501 = vpack.c.bf16 %v3491, %v3488
        %v3502 = vpack.c.bf16 %v3496, %v3496
        %s3503 = scalar_lea.vmem [#allocation2], 96
        %v3504 = vld [vmem:[%s3503] sm:$0xf]
        %v3505 = vld [vmem:[%s3503 + $0x4] sm:$0xf]
        %v3506 = vld [vmem:[%s3503 + $0x8] sm:$0xf]
        %v3507 = vld [vmem:[%s3503 + $0xc] sm:$0xf]
        %v3508 = vld [vmem:[%s3503 + $0x10] sm:$0xf]
        %v3509 = vld [vmem:[%s3503 + $0x14] sm:$0xf]
        %v3510 = vld [vmem:[%s3503 + $0x18] sm:$0xf]
        %v3511 = vld [vmem:[%s3503 + $0x1c] sm:$0xf]
        %v3520 = vunpack.c.l.b16 %v3504
        %v3521 = vunpack.c.l.b16 %v3505
        %v3522 = vunpack.c.l.b16 %v3506
        %v3523 = vunpack.c.l.b16 %v3507
        %v3524 = vunpack.c.l.b16 %v3508
        %v3525 = vunpack.c.l.b16 %v3509
        %v3526 = vunpack.c.l.b16 %v3510
        %v3527 = vunpack.c.l.b16 %v3511
        %v3528 = vpack.c.b16 %v3521, %v3520
        %v3529 = vpack.c.b16 %v3523, %v3522
        %v3530 = vpack.c.b16 %v3525, %v3524
        %v3531 = vpack.c.b16 %v3527, %v3526
        %v3537 = vsel %vm796, %v3501, 0
        %v3540 = vsel %vm796, %v3502, 0
        %3542 = vmatprep.subr.bf16.mxu0 0
        %3543 = vmatpush1.bf16.msra.mxu0 %v3528
        %3544 = vmatprep.subr.bf16.mxu0 0
        %3545 = vmatpush1.bf16.msra.mxu0 %v3529
        %3546 = vmatprep.subr.bf16.mxu0 0
        %3547 = vmatpush1.bf16.msra.mxu0 %v3530
        %3548 = vmatprep.subr.bf16.mxu0 0
        %3549 = vmatpush1.bf16.msra.mxu0 %v3531
        %3550 = vmatprep.subr.bf16.mxu0 0
        %3551 = vmatpush1.bf16.msra.mxu0 0
        %3552 = vmatprep.subr.bf16.mxu0 0
        %3553 = vmatpush1.bf16.msra.mxu0 0
        %3554 = vmatprep.subr.bf16.mxu0 0
        %3555 = vmatpush1.bf16.msra.mxu0 0
        %3556 = vmatprep.subr.bf16.mxu0 0
        %3557 = vmatpush1.bf16.msra.mxu0 0
        %3558 = vmatprep.subr.bf16.mxu0 0
        %3559 = vmatpush1.bf16.msra.mxu0 0
        %3560 = vmatprep.subr.bf16.mxu0 0
        %3561 = vmatpush1.bf16.msra.mxu0 0
        %3562 = vmatprep.subr.bf16.mxu0 0
        %3563 = vmatpush1.bf16.msra.mxu0 0
        %3564 = vmatprep.subr.bf16.mxu0 0
        %3565 = vmatpush1.bf16.msra.mxu0 0
        %3566 = vmatprep.subr.bf16.mxu0 0
        %3567 = vmatpush1.bf16.msra.mxu0 0
        %3568 = vmatprep.subr.bf16.mxu0 0
        %3569 = vmatpush1.bf16.msra.mxu0 0
        %3570 = vmatprep.subr.bf16.mxu0 0
        %3571 = vmatpush1.bf16.msra.mxu0 0
        %3572 = vmatprep.subr.bf16.mxu0 0
        %3573 = vmatpush1.bf16.msra.mxu0 0
        %3574 = vmatprep.mubr.bf16.mxu0 0
        %3575 = vmatmul.mubr.bf16.gmra.mrb[0].mxu0 %v3537
        %v3576 = vpop.f32.mrb[0].mxu0
        %v3577 = vadd.f32 0.0, %v3576
        %v3578 = vpop.f32.mrb[0].mxu0
        %v3579 = vpop.f32.mrb[0].mxu0
        %v3580 = vadd.f32 0.0, %v3579
        %v3581 = vpop.f32.mrb[0].mxu0
        %3582 = vmatprep.mubr.bf16.mxu0 0
        %3583 = vmatmul.mubr.bf16.gmra.mrb[0].mxu0 %v3540
        %v3584 = vpop.f32.mrb[0].mxu0
        %v3585 = vadd.f32 0.0, %v3584
        %v3586 = vpop.f32.mrb[0].mxu0
        %v3587 = vpop.f32.mrb[0].mxu0
        %v3588 = vpop.f32.mrb[0].mxu0
        %3589 = vdwg.mxu0
        %v3590 = vadd.f32 %v2974, %v3577
        %v3591 = vadd.f32 %v2975, %v3580
        %v3592 = vadd.f32 %v2976, %v3585
        %v3593 = vld [vmem:[%s2968 + $0x1] sm:$0x1]
        %v3594 = vlaneseq
        %v3595 = vshrl.u32 %v3594, 7
        %v3596 = vsub.s32 0, %v3595
        %v3597 = vrot.slane %v3593, %v3596
        %v3598 = vadd.f32 %v3590, %v3597
        %v3599 = vadd.f32 %v3591, %v3597
        %v3600 = vadd.f32 %v3592, %v3597
        %v3601 = vld [vmem:[%s2388 + $0x2] sm:$0x1]
        %v3602 = vld [vmem:[%s2390 + $0x2] sm:$0x1]
        %v3603 = vsel %vm796, %v3598, 0.0
        %3604 = vadd.xlane.f32.xlu0 %v3603
        %v3605 = vpop.xlane.xlu0 %3604
        %v3606 = vsel %vm796, %v3599, 0.0
        %3607 = vadd.xlane.f32.xlu0 %v3606
        %v3608 = vpop.xlane.xlu0 %3607
        %v3609 = vsel %vm796, %v3600, 0.0
        %3610 = vadd.xlane.f32.xlu0 %v3609
        %v3611 = vpop.xlane.xlu0 %3610
        %v3612 = vmul.f32 %v3605, %v806
        %v3613 = vmul.f32 %v3608, %v806
        %v3614 = vmul.f32 %v3611, %v806
        %v3615 = vsub.f32 %v3598, %v3612
        %v3616 = vsub.f32 %v3599, %v3613
        %v3617 = vsub.f32 %v3600, %v3614
        %v3618 = vmul.f32 %v3615, %v3615
        %v3619 = vmul.f32 %v3616, %v3616
        %v3620 = vmul.f32 %v3617, %v3617
        %v3621 = vsel %vm796, %v3618, 0.0
        %3622 = vadd.xlane.f32.xlu0 %v3621
        %v3623 = vpop.xlane.xlu0 %3622
        %v3624 = vsel %vm796, %v3619, 0.0
        %3625 = vadd.xlane.f32.xlu0 %v3624
        %v3626 = vpop.xlane.xlu0 %3625
        %v3627 = vsel %vm796, %v3620, 0.0
        %3628 = vadd.xlane.f32.xlu0 %v3627
        %v3629 = vpop.xlane.xlu0 %3628
        %v3630 = vmul.f32 %v3623, %v806
        %v3631 = vmul.f32 %v3626, %v806
        %v3632 = vmul.f32 %v3629, %v806
        %v3633 = vadd.f32 %v3630, 1e-05
        %v3634 = vadd.f32 %v3631, 1e-05
        %v3635 = vadd.f32 %v3632, 1e-05
        %v3636 = vrsqrt.pop %v3633
        %v3637 = vrsqrt.pop %v3634
        %v3638 = vrsqrt.pop %v3635
        %v3639 = vmul.f32 %v3615, %v3636
        %v3640 = vmul.f32 %v3616, %v3637
        %v3641 = vmul.f32 %v3617, %v3638
        %v3642 = vlaneseq
        %v3643 = vshrl.u32 %v3642, 7
        %v3644 = vsub.s32 0, %v3643
        %v3645 = vrot.slane %v3601, %v3644
        %v3646 = vmul.f32 %v3639, %v3645
        %v3647 = vmul.f32 %v3640, %v3645
        %v3648 = vmul.f32 %v3641, %v3645
        %v3649 = vlaneseq
        %v3650 = vshrl.u32 %v3649, 7
        %v3651 = vsub.s32 0, %v3650
        %v3652 = vrot.slane %v3602, %v3651
        %v3653 = vadd.f32 %v3646, %v3652
        %v3654 = vadd.f32 %v3647, %v3652
        %v3655 = vadd.f32 %v3648, %v3652
        %v3656 = vpack.c.bf16 %v3654, %v3653
        %v3657 = vpack.c.bf16 %v3655, %v3655
        %s3658 = scalar_lea.vmem [#allocation5], 64
        %v3659 = vld [vmem:[%s3658] sm:$0xff]
        %v3660 = vld [vmem:[%s3658 + $0x8] sm:$0xff]
        %v3661 = vld [vmem:[%s3658 + $0x10] sm:$0xff]
        %v3662 = vld [vmem:[%s3658 + $0x18] sm:$0xff]
        %v3663 = vld [vmem:[%s3658 + $0x20] sm:$0xff]
        %v3664 = vld [vmem:[%s3658 + $0x28] sm:$0xff]
        %v3665 = vld [vmem:[%s3658 + $0x30] sm:$0xff]
        %v3666 = vld [vmem:[%s3658 + $0x38] sm:$0xff]
        %s3667 = scalar_lea.vmem %s11, 1
        %v3668 = vld [vmem:[%s3667] ss:$2 sm:$0x3]
        %v3670 = vlaneseq
        %v3671 = vshrl.u32 %v3670, 7
        %v3672 = vsub.s32 0, %v3671
        %v3673 = vrot.slane %v3668, %v3672
        %v3674 = vlaneseq
        %v3675 = vshrl.u32 %v3674, 7
        %v3676 = vsub.s32 1, %v3675
        %v3677 = vrot.slane %v3668, %v3676
        %v3688 = vunpack.c.l.b16 %v3659
        %v3689 = vunpack.c.h.b16 %v3659
        %v3690 = vunpack.c.l.b16 %v3660
        %v3691 = vunpack.c.h.b16 %v3660
        %v3692 = vunpack.c.l.b16 %v3661
        %v3693 = vunpack.c.h.b16 %v3661
        %v3694 = vunpack.c.l.b16 %v3662
        %v3695 = vunpack.c.h.b16 %v3662
        %v3696 = vunpack.c.l.b16 %v3663
        %v3697 = vunpack.c.h.b16 %v3663
        %v3698 = vunpack.c.l.b16 %v3664
        %v3699 = vunpack.c.h.b16 %v3664
        %v3700 = vunpack.c.l.b16 %v3665
        %v3701 = vunpack.c.h.b16 %v3665
        %v3702 = vunpack.c.l.b16 %v3666
        %v3703 = vunpack.c.h.b16 %v3666
        %v3704 = vpack.c.b16 %v3690, %v3688
        %v3705 = vpack.c.b16 %v3691, %v3689
        %v3706 = vpack.c.b16 %v3694, %v3692
        %v3707 = vpack.c.b16 %v3695, %v3693
        %v3708 = vpack.c.b16 %v3698, %v3696
        %v3709 = vpack.c.b16 %v3699, %v3697
        %v3710 = vpack.c.b16 %v3702, %v3700
        %v3711 = vpack.c.b16 %v3703, %v3701
        %v3721 = vsel %vm796, %v3656, 0
        %v3724 = vsel %vm796, %v3657, 0
        %3726 = vmatprep.subr.bf16.mxu0 %v3705
        %3727 = vmatpush1.bf16.msra.mxu0 %v3704
        %3728 = vmatprep.subr.bf16.mxu0 %v3707
        %3729 = vmatpush1.bf16.msra.mxu0 %v3706
        %3730 = vmatprep.subr.bf16.mxu0 %v3709
        %3731 = vmatpush1.bf16.msra.mxu0 %v3708
        %3732 = vmatprep.subr.bf16.mxu0 %v3711
        %3733 = vmatpush1.bf16.msra.mxu0 %v3710
        %3734 = vmatprep.subr.bf16.mxu0 0
        %3735 = vmatpush1.bf16.msra.mxu0 0
        %3736 = vmatprep.subr.bf16.mxu0 0
        %3737 = vmatpush1.bf16.msra.mxu0 0
        %3738 = vmatprep.subr.bf16.mxu0 0
        %3739 = vmatpush1.bf16.msra.mxu0 0
        %3740 = vmatprep.subr.bf16.mxu0 0
        %3741 = vmatpush1.bf16.msra.mxu0 0
        %3742 = vmatprep.subr.bf16.mxu0 0
        %3743 = vmatpush1.bf16.msra.mxu0 0
        %3744 = vmatprep.subr.bf16.mxu0 0
        %3745 = vmatpush1.bf16.msra.mxu0 0
        %3746 = vmatprep.subr.bf16.mxu0 0
        %3747 = vmatpush1.bf16.msra.mxu0 0
        %3748 = vmatprep.subr.bf16.mxu0 0
        %3749 = vmatpush1.bf16.msra.mxu0 0
        %3750 = vmatprep.subr.bf16.mxu0 0
        %3751 = vmatpush1.bf16.msra.mxu0 0
        %3752 = vmatprep.subr.bf16.mxu0 0
        %3753 = vmatpush1.bf16.msra.mxu0 0
        %3754 = vmatprep.subr.bf16.mxu0 0
        %3755 = vmatpush1.bf16.msra.mxu0 0
        %3756 = vmatprep.subr.bf16.mxu0 0
        %3757 = vmatpush1.bf16.msra.mxu0 0
        %3758 = vmatprep.mubr.bf16.mxu0 0
        %3759 = vmatmul.mubr.bf16.gmra.mrb[0].mxu0 %v3721
        %v3760 = vpop.f32.mrb[0].mxu0
        %v3761 = vadd.f32 %v3673, %v3760
        %v3762 = vpop.f32.mrb[0].mxu0
        %v3763 = vadd.f32 %v3677, %v3762
        %v3764 = vpop.f32.mrb[0].mxu0
        %v3765 = vadd.f32 %v3673, %v3764
        %v3766 = vpop.f32.mrb[0].mxu0
        %v3767 = vadd.f32 %v3677, %v3766
        %3768 = vmatprep.mubr.bf16.mxu0 0
        %3769 = vmatmul.mubr.bf16.gmra.mrb[0].mxu0 %v3724
        %v3770 = vpop.f32.mrb[0].mxu0
        %v3771 = vadd.f32 %v3673, %v3770
        %v3772 = vpop.f32.mrb[0].mxu0
        %v3773 = vadd.f32 %v3677, %v3772
        %v3774 = vpop.f32.mrb[0].mxu0
        %v3775 = vpop.f32.mrb[0].mxu0
        %3776 = vdwg.mxu0
        %v3777 = vmax.f32 %v3761, 0.0
        %v3778 = vmax.f32 %v3763, 0.0
        %v3779 = vmax.f32 %v3765, 0.0
        %v3780 = vmax.f32 %v3767, 0.0
        %v3781 = vmax.f32 %v3771, 0.0
        %v3782 = vmax.f32 %v3773, 0.0
        %v3783 = vpack.c.bf16 %v3779, %v3777
        %v3784 = vpack.c.bf16 %v3780, %v3778
        %v3785 = vpack.c.bf16 %v3781, %v3781
        %v3786 = vpack.c.bf16 %v3782, %v3782
        %s3787 = scalar_lea.vmem %s12, 128
        %v3788 = vld [vmem:[%s3787] sm:$0xf]
        %v3789 = vld [vmem:[%s3787 + $0x4] sm:$0xf]
        %v3790 = vld [vmem:[%s3787 + $0x8] sm:$0xf]
        %v3791 = vld [vmem:[%s3787 + $0xc] sm:$0xf]
        %v3792 = vld [vmem:[%s3787 + $0x10] sm:$0xf]
        %v3793 = vld [vmem:[%s3787 + $0x14] sm:$0xf]
        %v3794 = vld [vmem:[%s3787 + $0x18] sm:$0xf]
        %v3795 = vld [vmem:[%s3787 + $0x1c] sm:$0xf]
        %v3796 = vld [vmem:[%s3787 + $0x20] sm:$0xf]
        %v3797 = vld [vmem:[%s3787 + $0x24] sm:$0xf]
        %v3798 = vld [vmem:[%s3787 + $0x28] sm:$0xf]
        %v3799 = vld [vmem:[%s3787 + $0x2c] sm:$0xf]
        %v3800 = vld [vmem:[%s3787 + $0x30] sm:$0xf]
        %v3801 = vld [vmem:[%s3787 + $0x34] sm:$0xf]
        %v3802 = vld [vmem:[%s3787 + $0x38] sm:$0xf]
        %v3803 = vld [vmem:[%s3787 + $0x3c] sm:$0xf]
        %v3804 = vld [vmem:[%s3787 + $0x40] sm:$0xf]
        %v3805 = vld [vmem:[%s3787 + $0x44] sm:$0xf]
        %v3806 = vld [vmem:[%s3787 + $0x48] sm:$0xf]
        %v3807 = vld [vmem:[%s3787 + $0x4c] sm:$0xf]
        %v3808 = vld [vmem:[%s3787 + $0x50] sm:$0xf]
        %v3809 = vld [vmem:[%s3787 + $0x54] sm:$0xf]
        %v3810 = vld [vmem:[%s3787 + $0x58] sm:$0xf]
        %v3811 = vld [vmem:[%s3787 + $0x5c] sm:$0xf]
        %v3812 = vld [vmem:[%s3787 + $0x60] sm:$0xf]
        %v3813 = vld [vmem:[%s3787 + $0x64] sm:$0xf]
        %v3814 = vld [vmem:[%s3787 + $0x68] sm:$0xf]
        %v3815 = vld [vmem:[%s3787 + $0x6c] sm:$0xf]
        %v3816 = vld [vmem:[%s3787 + $0x70] sm:$0xf]
        %v3817 = vld [vmem:[%s3787 + $0x74] sm:$0xf]
        %v3818 = vld [vmem:[%s3787 + $0x78] sm:$0xf]
        %v3819 = vld [vmem:[%s3787 + $0x7c] sm:$0xf]
        %v3852 = vunpack.c.l.b16 %v3788
        %v3853 = vunpack.c.l.b16 %v3789
        %v3854 = vunpack.c.l.b16 %v3790
        %v3855 = vunpack.c.l.b16 %v3791
        %v3856 = vunpack.c.l.b16 %v3792
        %v3857 = vunpack.c.l.b16 %v3793
        %v3858 = vunpack.c.l.b16 %v3794
        %v3859 = vunpack.c.l.b16 %v3795
        %v3860 = vunpack.c.l.b16 %v3796
        %v3861 = vunpack.c.l.b16 %v3797
        %v3862 = vunpack.c.l.b16 %v3798
        %v3863 = vunpack.c.l.b16 %v3799
        %v3864 = vunpack.c.l.b16 %v3800
        %v3865 = vunpack.c.l.b16 %v3801
        %v3866 = vunpack.c.l.b16 %v3802
        %v3867 = vunpack.c.l.b16 %v3803
        %v3868 = vunpack.c.l.b16 %v3804
        %v3869 = vunpack.c.l.b16 %v3805
        %v3870 = vunpack.c.l.b16 %v3806
        %v3871 = vunpack.c.l.b16 %v3807
        %v3872 = vunpack.c.l.b16 %v3808
        %v3873 = vunpack.c.l.b16 %v3809
        %v3874 = vunpack.c.l.b16 %v3810
        %v3875 = vunpack.c.l.b16 %v3811
        %v3876 = vunpack.c.l.b16 %v3812
        %v3877 = vunpack.c.l.b16 %v3813
        %v3878 = vunpack.c.l.b16 %v3814
        %v3879 = vunpack.c.l.b16 %v3815
        %v3880 = vunpack.c.l.b16 %v3816
        %v3881 = vunpack.c.l.b16 %v3817
        %v3882 = vunpack.c.l.b16 %v3818
        %v3883 = vunpack.c.l.b16 %v3819
        %v3884 = vpack.c.b16 %v3853, %v3852
        %v3885 = vpack.c.b16 %v3855, %v3854
        %v3886 = vpack.c.b16 %v3857, %v3856
        %v3887 = vpack.c.b16 %v3859, %v3858
        %v3888 = vpack.c.b16 %v3861, %v3860
        %v3889 = vpack.c.b16 %v3863, %v3862
        %v3890 = vpack.c.b16 %v3865, %v3864
        %v3891 = vpack.c.b16 %v3867, %v3866
        %v3892 = vpack.c.b16 %v3869, %v3868
        %v3893 = vpack.c.b16 %v3871, %v3870
        %v3894 = vpack.c.b16 %v3873, %v3872
        %v3895 = vpack.c.b16 %v3875, %v3874
        %v3896 = vpack.c.b16 %v3877, %v3876
        %v3897 = vpack.c.b16 %v3879, %v3878
        %v3898 = vpack.c.b16 %v3881, %v3880
        %v3899 = vpack.c.b16 %v3883, %v3882
        %3916 = vmatprep.subr.bf16.mxu0 0
        %3917 = vmatpush1.bf16.msra.mxu0 %v3884
        %3918 = vmatprep.subr.bf16.mxu0 0
        %3919 = vmatpush1.bf16.msra.mxu0 %v3885
        %3920 = vmatprep.subr.bf16.mxu0 0
        %3921 = vmatpush1.bf16.msra.mxu0 %v3886
        %3922 = vmatprep.subr.bf16.mxu0 0
        %3923 = vmatpush1.bf16.msra.mxu0 %v3887
        %3924 = vmatprep.subr.bf16.mxu0 0
        %3925 = vmatpush1.bf16.msra.mxu0 %v3888
        %3926 = vmatprep.subr.bf16.mxu0 0
        %3927 = vmatpush1.bf16.msra.mxu0 %v3889
        %3928 = vmatprep.subr.bf16.mxu0 0
        %3929 = vmatpush1.bf16.msra.mxu0 %v3890
        %3930 = vmatprep.subr.bf16.mxu0 0
        %3931 = vmatpush1.bf16.msra.mxu0 %v3891
        %3932 = vmatprep.subr.bf16.mxu0 0
        %3933 = vmatpush1.bf16.msra.mxu0 %v3892
        %3934 = vmatprep.subr.bf16.mxu0 0
        %3935 = vmatpush1.bf16.msra.mxu0 %v3893
        %3936 = vmatprep.subr.bf16.mxu0 0
        %3937 = vmatpush1.bf16.msra.mxu0 %v3894
        %3938 = vmatprep.subr.bf16.mxu0 0
        %3939 = vmatpush1.bf16.msra.mxu0 %v3895
        %3940 = vmatprep.subr.bf16.mxu0 0
        %3941 = vmatpush1.bf16.msra.mxu0 %v3896
        %3942 = vmatprep.subr.bf16.mxu0 0
        %3943 = vmatpush1.bf16.msra.mxu0 %v3897
        %3944 = vmatprep.subr.bf16.mxu0 0
        %3945 = vmatpush1.bf16.msra.mxu0 %v3898
        %3946 = vmatprep.subr.bf16.mxu0 0
        %3947 = vmatpush1.bf16.msra.mxu0 %v3899
        %3948 = vmatprep.mubr.bf16.mxu0 %v3784
        %3949 = vmatmul.mubr.bf16.gmra.mrb[0].mxu0 %v3783
        %v3950 = vpop.f32.mrb[0].mxu0
        %v3951 = vadd.f32 0.0, %v3950
        %v3952 = vpop.f32.mrb[0].mxu0
        %v3953 = vpop.f32.mrb[0].mxu0
        %v3954 = vadd.f32 0.0, %v3953
        %v3955 = vpop.f32.mrb[0].mxu0
        %3956 = vmatprep.mubr.bf16.mxu0 %v3786
        %3957 = vmatmul.mubr.bf16.gmra.mrb[0].mxu0 %v3785
        %v3958 = vpop.f32.mrb[0].mxu0
        %v3959 = vadd.f32 0.0, %v3958
        %v3960 = vpop.f32.mrb[0].mxu0
        %v3961 = vpop.f32.mrb[0].mxu0
        %v3962 = vpop.f32.mrb[0].mxu0
        %3963 = vdwg.mxu0
        %v3964 = vadd.f32 %v3598, %v3951
        %v3965 = vadd.f32 %v3599, %v3954
        %v3966 = vadd.f32 %v3600, %v3959
        %v3967 = vld [vmem:[%s13 + $0x1] sm:$0x1]
        %v3968 = vlaneseq
        %v3969 = vshrl.u32 %v3968, 7
        %v3970 = vsub.s32 0, %v3969
        %v3971 = vrot.slane %v3967, %v3970
        %v3972 = vadd.f32 %v3964, %v3971
        %v3973 = vadd.f32 %v3965, %v3971
        %v3974 = vadd.f32 %v3966, %v3971
        %v3975 = vpack.c.bf16 %v3973, %v3972
        %v3976 = vpack.c.bf16 %v3974, %v3974
        %v3977 = vld [vmem:[%s14] sm:$0xf]
        %v3978 = vld [vmem:[%s14 + $0x4] sm:$0xf]
        %v3979 = vld [vmem:[%s14 + $0x8] sm:$0xf]
        %v3980 = vld [vmem:[%s14 + $0xc] sm:$0xf]
        %v3981 = vld [vmem:[%s14 + $0x10] sm:$0xf]
        %v3982 = vld [vmem:[%s14 + $0x14] sm:$0xf]
        %v3983 = vld [vmem:[%s14 + $0x18] sm:$0xf]
        %v3984 = vld [vmem:[%s14 + $0x1c] sm:$0xf]
        %v3985 = vld [vmem:[%s15] sm:$0x1]
        %v3987 = vlaneseq
        %v3988 = vshrl.u32 %v3987, 7
        %v3989 = vsub.s32 0, %v3988
        %v3990 = vrot.slane %v3985, %v3989
        %v4000 = vunpack.c.l.b16 %v3977
        %v4001 = vunpack.c.l.b16 %v3978
        %v4002 = vunpack.c.l.b16 %v3979
        %v4003 = vunpack.c.l.b16 %v3980
        %v4004 = vunpack.c.l.b16 %v3981
        %v4005 = vunpack.c.l.b16 %v3982
        %v4006 = vunpack.c.l.b16 %v3983
        %v4007 = vunpack.c.l.b16 %v3984
        %v4008 = vpack.c.b16 %v4001, %v4000
        %v4009 = vpack.c.b16 %v4003, %v4002
        %v4010 = vpack.c.b16 %v4005, %v4004
        %v4011 = vpack.c.b16 %v4007, %v4006
        %v4017 = vsel %vm796, %v3975, 0
        %v4020 = vsel %vm796, %v3976, 0
        %4022 = vmatprep.subr.bf16.mxu0 0
        %4023 = vmatpush1.bf16.msra.mxu0 %v4008
        %4024 = vmatprep.subr.bf16.mxu0 0
        %4025 = vmatpush1.bf16.msra.mxu0 %v4009
        %4026 = vmatprep.subr.bf16.mxu0 0
        %4027 = vmatpush1.bf16.msra.mxu0 %v4010
        %4028 = vmatprep.subr.bf16.mxu0 0
        %4029 = vmatpush1.bf16.msra.mxu0 %v4011
        %4030 = vmatprep.subr.bf16.mxu0 0
        %4031 = vmatpush1.bf16.msra.mxu0 0
        %4032 = vmatprep.subr.bf16.mxu0 0
        %4033 = vmatpush1.bf16.msra.mxu0 0
        %4034 = vmatprep.subr.bf16.mxu0 0
        %4035 = vmatpush1.bf16.msra.mxu0 0
        %4036 = vmatprep.subr.bf16.mxu0 0
        %4037 = vmatpush1.bf16.msra.mxu0 0
        %4038 = vmatprep.subr.bf16.mxu0 0
        %4039 = vmatpush1.bf16.msra.mxu0 0
        %4040 = vmatprep.subr.bf16.mxu0 0
        %4041 = vmatpush1.bf16.msra.mxu0 0
        %4042 = vmatprep.subr.bf16.mxu0 0
        %4043 = vmatpush1.bf16.msra.mxu0 0
        %4044 = vmatprep.subr.bf16.mxu0 0
        %4045 = vmatpush1.bf16.msra.mxu0 0
        %4046 = vmatprep.subr.bf16.mxu0 0
        %4047 = vmatpush1.bf16.msra.mxu0 0
        %4048 = vmatprep.subr.bf16.mxu0 0
        %4049 = vmatpush1.bf16.msra.mxu0 0
        %4050 = vmatprep.subr.bf16.mxu0 0
        %4051 = vmatpush1.bf16.msra.mxu0 0
        %4052 = vmatprep.subr.bf16.mxu0 0
        %4053 = vmatpush1.bf16.msra.mxu0 0
        %4054 = vmatprep.mubr.bf16.mxu0 0
        %4055 = vmatmul.mubr.bf16.gmra.mrb[0].mxu0 %v4017
        %v4056 = vpop.f32.mrb[0].mxu0
        %v4057 = vadd.f32 %v3990, %v4056
        %v4058 = vpop.f32.mrb[0].mxu0
        %v4059 = vpop.f32.mrb[0].mxu0
        %v4060 = vadd.f32 %v3990, %v4059
        %v4061 = vpop.f32.mrb[0].mxu0
        %4062 = vmatprep.mubr.bf16.mxu0 0
        %4063 = vmatmul.mubr.bf16.gmra.mrb[0].mxu0 %v4020
        %v4064 = vpop.f32.mrb[0].mxu0
        %v4065 = vadd.f32 %v3990, %v4064
        %v4066 = vpop.f32.mrb[0].mxu0
        %v4067 = vpop.f32.mrb[0].mxu0
        %v4068 = vpop.f32.mrb[0].mxu0
        %4069 = vdwg.mxu0
        %4070 = vst [vmem:[%s544] sm:$0xff] %v4057
        %4071 = vst [vmem:[%s544 + $0x8] sm:$0xff] %v4060
        %4072 = vst [vmem:[%s544 + $0x10] sm:$0xff] %v4065
        %s4073 = sand.u32 %s381, 1
        %s4074 = scalar_lea.sflag [#allocation4], %s4073
        %s4075 = sand.u32 %s381, 1
        %s4076 = smul.addr %s4075, 24
        %s4077 = scalar_lea.vmem [#allocation7], %s4076
        // Predicated region
        $region93: #{tpu_custom_call.1} parent=83 // pred_check
          %p4078 = pneg %p391
        $region94: #{tpu_custom_call.1} parent=83 // pred_check_branch
          %4080 = sbr.rel (%p4078) target = $region96
        $region95: #{tpu_custom_call.1} parent=83 // pred_region
          %s4082 = ssub.s32 384, 384
          %4083 = vsyncadd %s4074, %s4082
          %s4084 = smul.addr %s32, 3
          %s4085 = smul.addr %s4084, 128
          %s4086 = scalar_lea.hbm %s16, %s4085
          %s4087 = sshll.u32 %s4077, 4
          %s4088 = int_to_ptr.vmem [resolvable:$true] %s4087
          %4093 = dma.vmem_to_hbm [thread:$0]  %s4088, 384, %s4086, %s4074, 128, 128, 8
        $region96: #{tpu_custom_call.1} parent=83 // pred_fallthru
          _
      $region84: #{tpu_custom_call.1} parent=5 // pred_fallthru
        _
      %p4094 = scmp.le.s32.totalorder 2, %s27
      // Predicated region
      $region97: #{tpu_custom_call.1} parent=5 // pred_check
        %p4095 = pneg %p4094
      $region98: #{tpu_custom_call.1} parent=5 // pred_check_branch
        %4097 = sbr.rel (%p4095) target = $region100
      $region99: #{tpu_custom_call.1} parent=5 // pred_region
        %s4098 = ssub.s32 %s27, 2
        // Predicated region
        $region101: #{tpu_custom_call.1} parent=99 // pred_check
          %p4099 = pneg %p397
        $region102: #{tpu_custom_call.1} parent=99 // pred_check_branch
          %4101 = sbr.rel (%p4099) target = $region104
        $region103: #{tpu_custom_call.1} parent=99 // pred_region
          %s4102 = sand.u32 %s382, 1
          %s4103 = scalar_lea.sflag [#allocation4], %s4102
          %s4104 = sand.u32 %s382, 1
          %s4105 = smul.addr %s4104, 24
          %s4106 = scalar_lea.vmem [#allocation7], %s4105
          %4107 = dma.done %s4103, 384
        $region104: #{tpu_custom_call.1} parent=99 // pred_fallthru
          _
      $region100: #{tpu_custom_call.1} parent=5 // pred_fallthru
        _
    $region6: #{tpu_custom_call.1} parent=1 // loop_footer
      %s31 = sadd.s32 1, %s27
    $region7: #{tpu_custom_call.1} parent=1 // loop_footer_branch
      %26 = sbr.rel target = $region3
    $region8: #{tpu_custom_call.1} parent=1 // loop_exit
      _
    %4108 = vsyncpa [#allocation3], 1
    %s4109 = scalar_lea.sflag [#allocation3], 1
    %4110 = vsyncpa %s4109, 1
    %4111 = vsyncpa [#allocation6], 1
    %4112 = vsyncpa [#allocation4], 1
    %s4113 = scalar_lea.sflag [#allocation4], 1
    %4114 = vsyncpa %s4113, 1

</llo_original>
